<compile_context>
chip_gen: v6e
topology: v6e:2x2x1
jax: 0.10.0
libtpu: 0.0.40
codegen_flags: <defaults>
</compile_context>

<pallas_src>
import functools

import jax
import jax.numpy as jnp
from jax.experimental import pallas as pl
from jax.experimental.pallas import tpu as pltpu

LANE = 128
SUBLANE = 8


# ----------------------------- helpers -----------------------------------

def _round_up(x, m):
    return ((x + m - 1) // m) * m


def _cdiv(a, b):
    return -(-a // b)


def _pad2(a, rows, cols, dtype=None):
    a = jnp.pad(a, ((0, rows - a.shape[0]), (0, cols - a.shape[1])))
    return a if dtype is None else a.astype(dtype)


def _vmem_cap_bytes():
    try:
        return int(pltpu.get_tpu_info().vmem_capacity_bytes)   # 128 MiB v5e/v6e, 64 MiB v7x
    except Exception:
        return 64 * 2**20                                      # conservative fallback (v7x)


def _vmem_limit(per_step_bytes):
    cap = int(0.75 * _vmem_cap_bytes())
    want = 3 * int(per_step_bytes) + (16 << 20)
    return min(cap, max(32 << 20, want))


def _node_tiling(n):
    """Node tile (multiple of 8) and padded node count; >=2 tiles when the graph is big
    enough so the 'parallel' node axis feeds both v7x TensorCores."""
    n8 = _round_up(max(n, 1), SUBLANE)
    if n8 < 64:
        return n8, n8
    num_tiles = max(2, _cdiv(n8, 512))
    tile_n = _round_up(_cdiv(n8, num_tiles), SUBLANE)
    return tile_n, num_tiles * tile_n


def _edge_tiling(e):
    """(message tile, scatter tile, padded edge count); message tile is capped so the
    stacked-matmul intermediate stays small, scatter tile is larger (deeper contraction)."""
    e128 = _round_up(max(e, 1), LANE)
    if e128 <= 1024:
        return e128, e128, e128
    num = _cdiv(e128, 2048)
    tile_sc = _round_up(_cdiv(e128, num), 512)       # multiple of 512 -> msg tile divides it
    return 512, tile_sc, num * tile_sc


# ----------------------------- Pallas kernels ------------------------------

def _msg_kernel_cin1(basis_ref, xs_ref, wb_ref, msg_ref):
    """Cin == 1 special case: msg = (basis @ W[:, 0, :]) * x_src  (1 MXU matmul + VPU scale)."""
    y = jnp.dot(basis_ref[...], wb_ref[...], preferred_element_type=jnp.float32)  # (TE, Co)
    msg_ref[...] = (y * xs_ref[...].astype(jnp.float32)).astype(msg_ref.dtype)


def _msg_kernel_stacked(basis_ref, xs_ref, ws_ref, msg_ref, *, num_bases, co_pad):
    """General case: one stacked MXU matmul, then a basis-weighted (vreg-aligned) reduce."""
    xs = xs_ref[...]                                                               # (TE, Ci) bf16
    y = jnp.dot(xs, ws_ref[...], preferred_element_type=jnp.float32)               # (TE, K*co_pad)
    basis = basis_ref[...].astype(jnp.float32)                                     # (TE, 128)
    acc = basis[:, 0:1] * y[:, :co_pad]
    for k in range(1, num_bases):                                                  # static unroll
        acc = acc + basis[:, k:k + 1] * y[:, k * co_pad:(k + 1) * co_pad]
    msg_ref[...] = acc[:, :msg_ref.shape[1]].astype(msg_ref.dtype)


def _scatter_finalize_kernel(dst_ref, msg_ref, invdeg_ref, x_ref, wr_ref, b_ref,
                             o_ref, acc_ref, *, tile_n, cin_is_one):
    """Scatter-mean (on-the-fly 0/1 mask matmul) + root linear + bias + ReLU."""
    e = pl.program_id(1)

    @pl.when(e == 0)
    def _():
        acc_ref[...] = jnp.zeros_like(acc_ref)

    dst = dst_ref[...]                                                      # (1, TE) int32
    rows = (pl.program_id(0) * tile_n
            + jax.lax.broadcasted_iota(jnp.int32, (tile_n, dst_ref.shape[1]), 0))
    a = (rows == dst).astype(jnp.bfloat16)                                  # 0/1 scatter tile
    acc_ref[...] += jnp.dot(a, msg_ref[...], preferred_element_type=jnp.float32)

    @pl.when(e == pl.num_programs(1) - 1)
    def _():
        if cin_is_one:
            root = x_ref[...].astype(jnp.float32) * wr_ref[...].astype(jnp.float32)
        else:
            root = jnp.dot(x_ref[...], wr_ref[...], preferred_element_type=jnp.float32)
        out = acc_ref[...] * invdeg_ref[...] + root + b_ref[...]
        o_ref[...] = jnp.maximum(out, 0.0).astype(o_ref.dtype)


def _head_kernel(batch_ref, x_ref, invc_ref, w1_ref, b1_ref, w2_ref, b2_ref,
                 o_ref, acc_ref, *, num_classes, num_graphs_p):
    """global_mean_pool (on-the-fly 0/1 mask matmul) -> relu(fc1) -> fc2 -> log_softmax."""
    t = pl.program_id(0)

    @pl.when(t == 0)
    def _():
        acc_ref[...] = jnp.zeros_like(acc_ref)

    gid = jax.lax.broadcasted_iota(jnp.int32, (num_graphs_p, batch_ref.shape[1]), 0)
    mask = (batch_ref[...] == gid).astype(jnp.bfloat16)                     # (B_p, TN)
    acc_ref[...] += jnp.dot(mask, x_ref[...], preferred_element_type=jnp.float32)

    @pl.when(t == pl.num_programs(0) - 1)
    def _():
        pooled = acc_ref[...] * invc_ref[...]                               # exact mean, f32
        h = jnp.dot(pooled.astype(jnp.bfloat16), w1_ref[...],
                    preferred_element_type=jnp.float32) + b1_ref[...]
        h = jnp.maximum(h, 0.0)
        logits = jnp.dot(h.astype(jnp.bfloat16), w2_ref[...],
                         preferred_element_type=jnp.float32) + b2_ref[...]
        col = jax.lax.broadcasted_iota(jnp.int32, logits.shape, 1)
        logits = jnp.where(col < num_classes, logits, -1e30)                # mask padded classes
        m = jnp.max(logits, axis=1, keepdims=True)
        lse = jnp.log(jnp.sum(jnp.exp(logits - m), axis=1, keepdims=True)) + m
        o_ref[...] = logits - lse


# ----------------------------- layer wrappers --------------------------------

def spline_conv_message(basis_pad, xs_pad, weight, *, tile_e):
    """Pass 1: per-edge spline message  msg[e,:] = sum_k basis[e,k] * (x_src[e,:] @ W[k])."""
    E_p = basis_pad.shape[0]
    K, cin, cout = weight.shape
    n_e = E_p // tile_e

    if cin == 1:
        wb = _pad2(weight[:, 0, :], LANE, cout, jnp.bfloat16)               # (128, Co)
        kern = _msg_kernel_cin1
        w_arg = wb
        in_specs = [
            pl.BlockSpec((tile_e, LANE), lambda e: (e, 0)),                 # basis (bf16)
            pl.BlockSpec((tile_e, 1), lambda e: (e, 0)),                    # x_src (f32, 1 chan)
            pl.BlockSpec((LANE, cout), lambda e: (0, 0)),                   # basis->out weights
        ]
        flops = 2 * E_p * LANE * cout + E_p * cout
        per_step = (tile_e * LANE * 2 + tile_e * 4 + LANE * cout * 2
                    + tile_e * cout * (4 + 2))
    else:
        co_pad = _round_up(cout, LANE)
        ws = jnp.transpose(jnp.pad(weight, ((0, 0), (0, 0), (0, co_pad - cout))),
                           (1, 0, 2)).reshape(cin, K * co_pad).astype(jnp.bfloat16)
        kern = functools.partial(_msg_kernel_stacked, num_bases=K, co_pad=co_pad)
        w_arg = ws
        in_specs = [
            pl.BlockSpec((tile_e, LANE), lambda e: (e, 0)),                 # basis (bf16)
            pl.BlockSpec((tile_e, cin), lambda e: (e, 0)),                  # x_src (bf16)
            pl.BlockSpec((cin, K * co_pad), lambda e: (0, 0)),              # stacked weights
        ]
        flops = 2 * E_p * cin * K * co_pad + 2 * E_p * K * co_pad
        per_step = (tile_e * LANE * 2 + tile_e * cin * 2 + cin * K * co_pad * 2
                    + tile_e * K * co_pad * 4 + tile_e * co_pad * 4 + tile_e * cout * 2)

    bytes_accessed = (basis_pad.size * 2 + xs_pad.size * xs_pad.dtype.itemsize
                      + w_arg.size * 2 + E_p * cout * 2)

    return pl.pallas_call(
        kern,
        out_shape=jax.ShapeDtypeStruct((E_p, cout), jnp.bfloat16),
        grid_spec=pltpu.PrefetchScalarGridSpec(
            num_scalar_prefetch=0,
            grid=(n_e,),
            in_specs=in_specs,
            out_specs=pl.BlockSpec((tile_e, cout), lambda e: (e, 0)),
        ),
        compiler_params=pltpu.CompilerParams(
            dimension_semantics=("parallel",),
            vmem_limit_bytes=_vmem_limit(per_step)),
        cost_estimate=pl.CostEstimate(flops=flops, transcendentals=0,
                                      bytes_accessed=bytes_accessed),
    )(basis_pad, xs_pad, w_arg)


def spline_conv_scatter(msg_pad, dst_row, invdeg_pad, x_pad, root_w, bias,
                        *, tile_n, tile_e):
    """Pass 2: scatter-mean + root weight + bias + ReLU (gridded over node x edge tiles)."""
    E_p, cout = msg_pad.shape
    N_p, cin = x_pad.shape
    n_i = N_p // tile_n
    n_e = E_p // tile_e

    wr = root_w.astype(jnp.bfloat16)                                        # (Cin, Cout)
    b = bias.reshape(1, -1).astype(jnp.float32)                             # (1, Cout)

    flops = 2 * N_p * E_p * cout + 2 * N_p * cin * cout + 3 * N_p * cout
    bytes_accessed = (n_i * (dst_row.size * 4 + msg_pad.size * 2)
                      + invdeg_pad.size * 4 + x_pad.size * x_pad.dtype.itemsize
                      + wr.size * 2 + b.size * 4 + N_p * cout * 2)
    per_step = (tile_e * 4 + tile_e * cout * 2 + tile_n * 4 + tile_n * cin * 4
                + cin * cout * 2 + cout * 4 + tile_n * cout * (2 + 4)
                + tile_n * tile_e * 6)                                      # in-kernel mask + iota

    return pl.pallas_call(
        functools.partial(_scatter_finalize_kernel, tile_n=tile_n, cin_is_one=(cin == 1)),
        out_shape=jax.ShapeDtypeStruct((N_p, cout), jnp.bfloat16),
        grid_spec=pltpu.PrefetchScalarGridSpec(
            num_scalar_prefetch=0,
            grid=(n_i, n_e),                     # node tiles parallel, edge tiles = reduction
            in_specs=[
                pl.BlockSpec((1, tile_e), lambda i, e: (0, e)),             # dst ids (int32)
                pl.BlockSpec((tile_e, cout), lambda i, e: (e, 0)),          # messages (bf16)
                pl.BlockSpec((tile_n, 1), lambda i, e: (i, 0)),             # 1/deg (f32)
                pl.BlockSpec((tile_n, cin), lambda i, e: (i, 0)),           # x for root term
                pl.BlockSpec((cin, cout), lambda i, e: (0, 0)),             # root weight
                pl.BlockSpec((1, cout), lambda i, e: (0, 0)),               # bias (f32)
            ],
            out_specs=pl.BlockSpec((tile_n, cout), lambda i, e: (i, 0)),
            scratch_shapes=[pltpu.VMEM((tile_n, cout), jnp.float32)],
        ),
        compiler_params=pltpu.CompilerParams(
            dimension_semantics=("parallel", "arbitrary"),
            vmem_limit_bytes=_vmem_limit(per_step)),
        cost_estimate=pl.CostEstimate(flops=flops, transcendentals=0,
                                      bytes_accessed=bytes_accessed),
    )(dst_row, msg_pad, invdeg_pad, x_pad, wr, b)


def head_layer(x_pad, batch_row, invcnt, fc1_w, fc1_b, fc2_w, fc2_b, *, num_graphs, tile_n):
    """global_mean_pool (gridded over node tiles) + relu(fc1) + fc2 + log_softmax."""
    N_p, C = x_pad.shape
    B_p = invcnt.shape[0]
    H, O = fc1_w.shape[1], fc2_w.shape[1]
    H_p, O_p = _round_up(H, LANE), _round_up(O, LANE)
    n_t = N_p // tile_n

    w1 = _pad2(fc1_w, C, H_p, jnp.bfloat16)
    b1 = _pad2(fc1_b[None, :], 1, H_p, jnp.float32)
    w2 = _pad2(fc2_w, H_p, O_p, jnp.bfloat16)
    b2 = _pad2(fc2_b[None, :], 1, O_p, jnp.float32)

    flops = 2 * (N_p * B_p * C + B_p * C * H_p + B_p * H_p * O_p)
    bytes_accessed = (batch_row.size * 4 + x_pad.size * 2 + invcnt.size * 4
                      + w1.size * 2 + b1.size * 4 + w2.size * 2 + b2.size * 4 + B_p * O_p * 4)
    per_step = (tile_n * 4 + tile_n * C * 2 + B_p * 4 + C * H_p * 2 + H_p * 4
                + H_p * O_p * 2 + O_p * 4 + B_p * O_p * 4 + B_p * C * 4 + tile_n * B_p * 2)

    out = pl.pallas_call(
        functools.partial(_head_kernel, num_classes=O, num_graphs_p=B_p),
        out_shape=jax.ShapeDtypeStruct((B_p, O_p), jnp.float32),
        grid_spec=pltpu.PrefetchScalarGridSpec(
            num_scalar_prefetch=0,
            grid=(n_t,),
            in_specs=[
                pl.BlockSpec((1, tile_n), lambda t: (0, t)),                # graph id per node
                pl.BlockSpec((tile_n, C), lambda t: (t, 0)),                # conv2 activations
                pl.BlockSpec((B_p, 1), lambda t: (0, 0)),                   # 1/|graph| (f32)
                pl.BlockSpec((C, H_p), lambda t: (0, 0)),
                pl.BlockSpec((1, H_p), lambda t: (0, 0)),
                pl.BlockSpec((H_p, O_p), lambda t: (0, 0)),
                pl.BlockSpec((1, O_p), lambda t: (0, 0)),
            ],
            out_specs=pl.BlockSpec((B_p, O_p), lambda t: (0, 0)),
            scratch_shapes=[pltpu.VMEM((B_p, C), jnp.float32)],
        ),
        compiler_params=pltpu.CompilerParams(
            dimension_semantics=("arbitrary",),
            vmem_limit_bytes=_vmem_limit(per_step)),
        cost_estimate=pl.CostEstimate(flops=flops, transcendentals=2 * B_p * O_p,
                                      bytes_accessed=bytes_accessed),
    )(batch_row, x_pad, invcnt, w1, b1, w2, b2)
    return out[:num_graphs, :O]


# ----------------------------- JAX glue ------------------------------------

def spline_basis_dense(edge_attr, kernel_size, degree=1):
    """Dense open B-spline basis (degree 1), matching torch_spline_conv semantics.

    edge_attr: (E, dim) pseudo-coordinates in [0, 1]. Returns (E, kernel_size**dim) f32.
    """
    E, dim = edge_attr.shape
    u = jnp.clip(edge_attr.astype(jnp.float32), 0.0, 1.0)
    v = u * (kernel_size - degree)
    lo = jnp.floor(v)
    frac = v - lo
    lo = lo.astype(jnp.int32)
    K_total = kernel_size ** dim
    dense = jnp.zeros((E, K_total), jnp.float32)
    for s in range((degree + 1) ** dim):
        b = jnp.ones((E,), jnp.float32)
        wi = jnp.zeros((E,), jnp.int32)
        off = 1
        for d in range(dim):
            k_mod = (s // ((degree + 1) ** d)) % (degree + 1)
            b = b * (frac[:, d] if k_mod == 1 else (1.0 - frac[:, d]))
            idx_d = jnp.minimum(lo[:, d] + k_mod, kernel_size - 1)   # open-spline clamp
            wi = wi + idx_d * off
            off *= kernel_size
        dense = dense + b[:, None] * jax.nn.one_hot(wi, K_total, dtype=jnp.float32)
    return dense


# ----------------------------- model ---------------------------------------

def init_params(key, in_channels=1, hidden_channels=32, out_channels=10,
                num_spline_bases=5, dim=2):
    K = num_spline_bases ** dim
    ks = jax.random.split(key, 8)

    def w(k, shape, fan_in):
        return jax.random.normal(k, shape, jnp.float32) / jnp.sqrt(float(fan_in))

    # NOTE: Linear weights stored as (in, out) (transposed vs. PyTorch); synthetic init.
    return {
        "conv1_w": w(ks[0], (K, in_channels, hidden_channels), in_channels * K),
        "conv1_root": w(ks[1], (in_channels, hidden_channels), in_channels),
        "conv1_b": jnp.zeros((hidden_channels,), jnp.float32),
        "conv2_w": w(ks[2], (K, hidden_channels, 2 * hidden_channels), hidden_channels * K),
        "conv2_root": w(ks[3], (hidden_channels, 2 * hidden_channels), hidden_channels),
        "conv2_b": jnp.zeros((2 * hidden_channels,), jnp.float32),
        "fc1_w": w(ks[4], (2 * hidden_channels, 128), 2 * hidden_channels),
        "fc1_b": jnp.zeros((128,), jnp.float32),
        "fc2_w": w(ks[5], (128, out_channels), 128),
        "fc2_b": jnp.zeros((out_channels,), jnp.float32),
    }


@functools.partial(jax.jit, static_argnames=("num_graphs", "num_spline_bases"))
def spline_cnn_forward(params, x, edge_index, edge_attr, batch, num_graphs,
                       num_spline_bases=5):
    N, cin0 = x.shape
    E = edge_index.shape[1]
    K = num_spline_bases ** edge_attr.shape[1]
    assert K <= LANE, "spline basis count must fit one lane tile"

    tile_n, N_p = _node_tiling(N)
    tile_e_msg, tile_e_sc, E_p = _edge_tiling(E)

    src = edge_index[0].astype(jnp.int32)
    dst = edge_index[1].astype(jnp.int32)

    # ---- graph-structure glue, built ONCE; all O(E) / O(N) (no dense N x E matrices) ----
    basis = spline_basis_dense(edge_attr, num_spline_bases)                 # (E, K) f32
    basis_pad = _pad2(basis, E_p, LANE, jnp.bfloat16)                       # bf16 halves DMA

    src_pad = jnp.pad(src, (0, E_p - E))                                    # padded edges -> node 0
    dst_row = jnp.pad(dst, (0, E_p - E), constant_values=-1)[None, :]       # (1, E_p), -1 never hits
    deg = jnp.zeros((N_p,), jnp.float32).at[dst].add(1.0)
    invdeg = (1.0 / jnp.maximum(deg, 1.0)).reshape(N_p, 1)                  # exact mean, f32

    B_p = _round_up(num_graphs, SUBLANE)
    cnt = jnp.zeros((B_p,), jnp.float32).at[batch].add(1.0)
    invcnt = (1.0 / jnp.maximum(cnt, 1.0)).reshape(B_p, 1)

    # ---- conv1 (Cin==1 keeps f32 scalar features; otherwise bf16 for the MXU path) ----
    if cin0 == 1:
        x0 = jnp.pad(x.astype(jnp.float32), ((0, N_p - N), (0, 0)))
    else:
        x0 = jnp.pad(x, ((0, N_p - N), (0, 0))).astype(jnp.bfloat16)
    xs0 = x0[src_pad]
    msg1 = spline_conv_message(basis_pad, xs0, params["conv1_w"], tile_e=tile_e_msg)
    h1 = spline_conv_scatter(msg1, dst_row, invdeg, x0,
                             params["conv1_root"], params["conv1_b"],
                             tile_n=tile_n, tile_e=tile_e_sc)

    # ---- conv2 (consumes bf16 conv1 output at its real channel width) ----
    xs1 = h1[src_pad]
    msg2 = spline_conv_message(basis_pad, xs1, params["conv2_w"], tile_e=tile_e_msg)
    h2 = spline_conv_scatter(msg2, dst_row, invdeg, h1,
                             params["conv2_root"], params["conv2_b"],
                             tile_n=tile_n, tile_e=tile_e_sc)

    # ---- pool + MLP head (node axis re-padded to a lane-friendly tile for the batch row) ----
    nh128 = _round_up(N_p, LANE)
    tile_nh = nh128 if nh128 <= 1024 else 1024
    N_ph = _round_up(N_p, tile_nh)
    x_head = jnp.pad(h2, ((0, N_ph - N_p), (0, 0)))
    batch_row = jnp.pad(batch.astype(jnp.int32), (0, N_ph - N), constant_values=-1)[None, :]
    return head_layer(x_head, batch_row, invcnt,
                      params["fc1_w"], params["fc1_b"], params["fc2_w"], params["fc2_b"],
                      num_graphs=num_graphs, tile_n=tile_nh)


# ----------------------------- demo -----------------------------------------

if __name__ == "__main__":
    key = jax.random.PRNGKey(0)
    k_x, k_s0, k_d0, k_s1, k_d1, k_e, k_p = jax.random.split(key, 7)

    N, num_graphs = 20, 2          # 2 graphs of 10 nodes each
    E_per_graph = 24
    in_channels = 1

    x = jax.random.normal(k_x, (N, in_channels), jnp.float32)
    batch = jnp.concatenate([jnp.zeros((10,), jnp.int32), jnp.ones((10,), jnp.int32)])

    src0 = jax.random.randint(k_s0, (E_per_graph,), 0, 10, dtype=jnp.int32)
    dst0 = jax.random.randint(k_d0, (E_per_graph,), 0, 10, dtype=jnp.int32)
    src1 = jax.random.randint(k_s1, (E_per_graph,), 0, 10, dtype=jnp.int32) + 10
    dst1 = jax.random.randint(k_d1, (E_per_graph,), 0, 10, dtype=jnp.int32) + 10
    edge_index = jnp.stack([jnp.concatenate([src0, src1]),
                            jnp.concatenate([dst0, dst1])])                 # (2, 48)
    edge_attr = jax.random.uniform(k_e, (2 * E_per_graph, 2), jnp.float32)  # pseudo-coords [0,1]^2

    params = init_params(k_p)

    out = spline_cnn_forward(params, x, edge_index, edge_attr, batch, num_graphs=num_graphs)
    out = jax.block_until_ready(out)

    assert out.shape == (num_graphs, 10)
    assert bool(jnp.all(jnp.isfinite(out)))
    # rows of log_softmax must sum to ~1 in prob space
    assert bool(jnp.allclose(jnp.exp(out).sum(axis=1), 1.0, atol=1e-4))
    print("KERNEL_OK")
</pallas_src>

<mosaic_0001>
module attributes {stable_mosaic.version = 11 : i64} {
  func.func private @main(%arg0: i32) attributes {dimension_semantics = [#tpu.dimension_semantics<core_parallel>], iteration_bounds = array<i64: 2>, tpu.core_type = #tpu.core_type<sc_scalar_subcore>, window_params = []} {
    return
  }
}

module attributes {stable_mosaic.version = 11 : i64} {
  func.func private @main(%arg0: i32) attributes {dimension_semantics = [#tpu.dimension_semantics<core_parallel>], iteration_bounds = array<i64: 2>, tpu.core_type = #tpu.core_type<sc_scalar_subcore>, window_params = []} {
    return
  }
}

module attributes {stable_mosaic.version = 11 : i64} {
  func.func @_msg_kernel_cin1(%arg0: i32, %arg1: memref<128x128xbf16, #tpu.memory_space<vmem>>, %arg2: memref<128x1xf32, #tpu.memory_space<vmem>>, %arg3: memref<128x32xbf16, #tpu.memory_space<vmem>>, %arg4: memref<128x32xbf16, #tpu.memory_space<vmem>>) attributes {dimension_semantics = [#tpu.dimension_semantics<parallel>], iteration_bounds = array<i64: 1>, scalar_prefetch = 0 : i64, scratch_operands = 0 : i64, tpu.core_type = #tpu.core_type<tc>, window_params = [{transform_indices = @transform_0, window_bounds = array<i64: 128, 128>}, {transform_indices = @transform_1, window_bounds = array<i64: 128, 1>}, {pipeline_mode = #tpu.pipeline_mode<synchronous>, transform_indices = @transform_2, window_bounds = array<i64: 128, 32>}, {transform_indices = @transform_3, window_bounds = array<i64: 128, 32>}]} {
    %c0 = arith.constant 0 : index
    %c0_0 = arith.constant 0 : index
    %0 = vector.load %arg1[%c0, %c0_0] : memref<128x128xbf16, #tpu.memory_space<vmem>>, vector<128x128xbf16>
    %c0_1 = arith.constant 0 : index
    %c0_2 = arith.constant 0 : index
    %1 = vector.load %arg3[%c0_1, %c0_2] : memref<128x32xbf16, #tpu.memory_space<vmem>>, vector<128x32xbf16>
    %cst = arith.constant dense<0.000000e+00> : vector<128x32xf32>
    %2 = tpu.matmul %0, %1, %cst {dimension_numbers = #tpu.dot_dimension_numbers<[1], [0], [0], [1], [0, 0, 1, 1], [], []>} : vector<128x128xbf16>, vector<128x32xbf16>, vector<128x32xf32> -> vector<128x32xf32>
    %c0_3 = arith.constant 0 : index
    %c0_4 = arith.constant 0 : index
    %3 = vector.load %arg2[%c0_3, %c0_4] : memref<128x1xf32, #tpu.memory_space<vmem>>, vector<128x1xf32>
    %4 = vector.broadcast %3 : vector<128x1xf32> to vector<128x32xf32>
    %5 = arith.mulf %2, %4 : vector<128x32xf32>
    %6 = arith.truncf %5 : vector<128x32xf32> to vector<128x32xbf16>
    %c0_5 = arith.constant 0 : index
    %c0_6 = arith.constant 0 : index
    %7 = vector.load %arg4[%c0_5, %c0_6] : memref<128x32xbf16, #tpu.memory_space<vmem>>, vector<128x32xbf16>
    tpu.vector_store %arg4[%c0_5, %c0_6], %6 {strides = array<i32>} : memref<128x32xbf16, #tpu.memory_space<vmem>>, vector<128x32xbf16>,
    return
  }
  func.func @transform_0(%arg0: i32) -> (i32, i32) {
    %c0_i32 = arith.constant 0 : i32
    %c0_i32_0 = arith.constant 0 : i32
    return %arg0, %c0_i32 : i32, i32
  }
  func.func @transform_1(%arg0: i32) -> (i32, i32) {
    %c0_i32 = arith.constant 0 : i32
    %c0_i32_0 = arith.constant 0 : i32
    return %arg0, %c0_i32 : i32, i32
  }
  func.func @transform_2(%arg0: i32) -> (i32, i32) {
    %c0_i32 = arith.constant 0 : i32
    %c0_i32_0 = arith.constant 0 : i32
    %c0_i32_1 = arith.constant 0 : i32
    return %c0_i32, %c0_i32_0 : i32, i32
  }
  func.func @transform_3(%arg0: i32) -> (i32, i32) {
    %c0_i32 = arith.constant 0 : i32
    %c0_i32_0 = arith.constant 0 : i32
    return %arg0, %c0_i32 : i32, i32
  }
}

module attributes {stable_mosaic.version = 11 : i64} {
  func.func @_scatter_finalize_kernel(%arg0: i32, %arg1: i32, %arg2: memref<1x128xi32, #tpu.memory_space<vmem>>, %arg3: memref<128x32xbf16, #tpu.memory_space<vmem>>, %arg4: memref<24x1xf32, #tpu.memory_space<vmem>>, %arg5: memref<24x1xf32, #tpu.memory_space<vmem>>, %arg6: memref<1x32xbf16, #tpu.memory_space<vmem>>, %arg7: memref<1x32xf32, #tpu.memory_space<vmem>>, %arg8: memref<24x32xbf16, #tpu.memory_space<vmem>>, %arg9: memref<24x32xf32, #tpu.memory_space<vmem>>) attributes {dimension_semantics = [#tpu.dimension_semantics<parallel>, #tpu.dimension_semantics<arbitrary>], iteration_bounds = array<i64: 1, 1>, scalar_prefetch = 0 : i64, scratch_operands = 1 : i64, tpu.core_type = #tpu.core_type<tc>, window_params = [{transform_indices = @transform_0, window_bounds = array<i64: 1, 128>}, {transform_indices = @transform_1, window_bounds = array<i64: 128, 32>}, {transform_indices = @transform_2, window_bounds = array<i64: 24, 1>}, {transform_indices = @transform_3, window_bounds = array<i64: 24, 1>}, {pipeline_mode = #tpu.pipeline_mode<synchronous>, transform_indices = @transform_4, window_bounds = array<i64: 1, 32>}, {pipeline_mode = #tpu.pipeline_mode<synchronous>, transform_indices = @transform_5, window_bounds = array<i64: 1, 32>}, {transform_indices = @transform_6, window_bounds = array<i64: 24, 32>}]} {
    %c0_i32 = arith.constant 0 : i32
    %0 = arith.cmpi eq, %arg1, %c0_i32 : i32
    %1 = arith.extui %0 : i1 to i32
    %c0_i32_0 = arith.constant 0 : i32
    %2 = arith.cmpi ne, %1, %c0_i32_0 : i32
    scf.if %2 {
      %cst_10 = arith.constant 0.000000e+00 : f32
      %21 = vector.broadcast %cst_10 : f32 to vector<24x32xf32>
      %c0_11 = arith.constant 0 : index
      %c0_12 = arith.constant 0 : index
      %22 = vector.load %arg9[%c0_11, %c0_12] : memref<24x32xf32, #tpu.memory_space<vmem>>, vector<24x32xf32>
      tpu.vector_store %arg9[%c0_11, %c0_12], %21 {strides = array<i32>} : memref<24x32xf32, #tpu.memory_space<vmem>>, vector<24x32xf32>,
    } else {
    }
    %c0 = arith.constant 0 : index
    %c0_1 = arith.constant 0 : index
    %3 = vector.load %arg2[%c0, %c0_1] : memref<1x128xi32, #tpu.memory_space<vmem>>, vector<1x128xi32>
    %c24_i32 = arith.constant 24 : i32
    %4 = arith.muli %arg0, %c24_i32 : i32
    %5 = tpu.iota {dimensions = array<i32: 0>} : vector<24x128xi32>
    %6 = vector.broadcast %4 : i32 to vector<24x128xi32>
    %7 = arith.addi %6, %5 : vector<24x128xi32>
    %8 = vector.broadcast %3 : vector<1x128xi32> to vector<24x128xi32>
    %9 = arith.cmpi eq, %7, %8 : vector<24x128xi32>
    %10 = arith.extui %9 : vector<24x128xi1> to vector<24x128xi32>
    %11 = arith.sitofp %10 : vector<24x128xi32> to vector<24x128xf32>
    %12 = arith.truncf %11 : vector<24x128xf32> to vector<24x128xbf16>
    %c0_2 = arith.constant 0 : index
    %c0_3 = arith.constant 0 : index
    %13 = vector.load %arg9[%c0_2, %c0_3] : memref<24x32xf32, #tpu.memory_space<vmem>>, vector<24x32xf32>
    %c0_4 = arith.constant 0 : index
    %c0_5 = arith.constant 0 : index
    %14 = vector.load %arg3[%c0_4, %c0_5] : memref<128x32xbf16, #tpu.memory_space<vmem>>, vector<128x32xbf16>
    %cst = arith.constant dense<0.000000e+00> : vector<24x32xf32>
    %15 = tpu.matmul %12, %14, %cst {dimension_numbers = #tpu.dot_dimension_numbers<[1], [0], [0], [1], [0, 0, 1, 1], [], []>} : vector<24x128xbf16>, vector<128x32xbf16>, vector<24x32xf32> -> vector<24x32xf32>
    %16 = arith.addf %13, %15 : vector<24x32xf32>
    %c0_6 = arith.constant 0 : index
    %c0_7 = arith.constant 0 : index
    %17 = vector.load %arg9[%c0_6, %c0_7] : memref<24x32xf32, #tpu.memory_space<vmem>>, vector<24x32xf32>
    tpu.vector_store %arg9[%c0_6, %c0_7], %16 {strides = array<i32>} : memref<24x32xf32, #tpu.memory_space<vmem>>, vector<24x32xf32>,
    %c0_i32_8 = arith.constant 0 : i32
    %18 = arith.cmpi eq, %arg1, %c0_i32_8 : i32
    %19 = arith.extui %18 : i1 to i32
    %c0_i32_9 = arith.constant 0 : i32
    %20 = arith.cmpi ne, %19, %c0_i32_9 : i32
    scf.if %20 {
      %c0_10 = arith.constant 0 : index
      %c0_11 = arith.constant 0 : index
      %21 = vector.load %arg5[%c0_10, %c0_11] : memref<24x1xf32, #tpu.memory_space<vmem>>, vector<24x1xf32>
      %c0_12 = arith.constant 0 : index
      %c0_13 = arith.constant 0 : index
      %22 = vector.load %arg6[%c0_12, %c0_13] : memref<1x32xbf16, #tpu.memory_space<vmem>>, vector<1x32xbf16>
      %23 = arith.extf %22 : vector<1x32xbf16> to vector<1x32xf32>
      %24 = vector.broadcast %21 : vector<24x1xf32> to vector<24x32xf32>
      %25 = vector.broadcast %23 : vector<1x32xf32> to vector<24x32xf32>
      %26 = arith.mulf %24, %25 : vector<24x32xf32>
      %c0_14 = arith.constant 0 : index
      %c0_15 = arith.constant 0 : index
      %27 = vector.load %arg9[%c0_14, %c0_15] : memref<24x32xf32, #tpu.memory_space<vmem>>, vector<24x32xf32>
      %c0_16 = arith.constant 0 : index
      %c0_17 = arith.constant 0 : index
      %28 = vector.load %arg4[%c0_16, %c0_17] : memref<24x1xf32, #tpu.memory_space<vmem>>, vector<24x1xf32>
      %29 = vector.broadcast %28 : vector<24x1xf32> to vector<24x32xf32>
      %30 = arith.mulf %27, %29 : vector<24x32xf32>
      %31 = arith.addf %30, %26 : vector<24x32xf32>
      %c0_18 = arith.constant 0 : index
      %c0_19 = arith.constant 0 : index
      %32 = vector.load %arg7[%c0_18, %c0_19] : memref<1x32xf32, #tpu.memory_space<vmem>>, vector<1x32xf32>
      %33 = vector.broadcast %32 : vector<1x32xf32> to vector<24x32xf32>
      %34 = arith.addf %31, %33 : vector<24x32xf32>
      %cst_20 = arith.constant 0.000000e+00 : f32
      %35 = vector.broadcast %cst_20 : f32 to vector<24x32xf32>
      %36 = arith.maximumf %34, %35 : vector<24x32xf32>
      %37 = arith.truncf %36 : vector<24x32xf32> to vector<24x32xbf16>
      %c0_21 = arith.constant 0 : index
      %c0_22 = arith.constant 0 : index
      %38 = vector.load %arg8[%c0_21, %c0_22] : memref<24x32xbf16, #tpu.memory_space<vmem>>, vector<24x32xbf16>
      tpu.vector_store %arg8[%c0_21, %c0_22], %37 {strides = array<i32>} : memref<24x32xbf16, #tpu.memory_space<vmem>>, vector<24x32xbf16>,
    } else {
    }
    return
  }
  func.func @transform_0(%arg0: i32, %arg1: i32) -> (i32, i32) {
    %c0_i32 = arith.constant 0 : i32
    %c0_i32_0 = arith.constant 0 : i32
    return %c0_i32, %arg1 : i32, i32
  }
  func.func @transform_1(%arg0: i32, %arg1: i32) -> (i32, i32) {
    %c0_i32 = arith.constant 0 : i32
    %c0_i32_0 = arith.constant 0 : i32
    return %arg1, %c0_i32 : i32, i32
  }
  func.func @transform_2(%arg0: i32, %arg1: i32) -> (i32, i32) {
    %c0_i32 = arith.constant 0 : i32
    %c0_i32_0 = arith.constant 0 : i32
    return %arg0, %c0_i32 : i32, i32
  }
  func.func @transform_3(%arg0: i32, %arg1: i32) -> (i32, i32) {
    %c0_i32 = arith.constant 0 : i32
    %c0_i32_0 = arith.constant 0 : i32
    return %arg0, %c0_i32 : i32, i32
  }
  func.func @transform_4(%arg0: i32, %arg1: i32) -> (i32, i32) {
    %c0_i32 = arith.constant 0 : i32
    %c0_i32_0 = arith.constant 0 : i32
    %c0_i32_1 = arith.constant 0 : i32
    return %c0_i32, %c0_i32_0 : i32, i32
  }
  func.func @transform_5(%arg0: i32, %arg1: i32) -> (i32, i32) {
    %c0_i32 = arith.constant 0 : i32
    %c0_i32_0 = arith.constant 0 : i32
    %c0_i32_1 = arith.constant 0 : i32
    return %c0_i32, %c0_i32_0 : i32, i32
  }
  func.func @transform_6(%arg0: i32, %arg1: i32) -> (i32, i32) {
    %c0_i32 = arith.constant 0 : i32
    %c0_i32_0 = arith.constant 0 : i32
    return %arg0, %c0_i32 : i32, i32
  }
}

module attributes {stable_mosaic.version = 11 : i64} {
  func.func @_msg_kernel_stacked(%arg0: i32, %arg1: memref<128x128xbf16, #tpu.memory_space<vmem>>, %arg2: memref<128x32xbf16, #tpu.memory_space<vmem>>, %arg3: memref<32x3200xbf16, #tpu.memory_space<vmem>>, %arg4: memref<128x64xbf16, #tpu.memory_space<vmem>>) attributes {dimension_semantics = [#tpu.dimension_semantics<parallel>], iteration_bounds = array<i64: 1>, scalar_prefetch = 0 : i64, scratch_operands = 0 : i64, tpu.core_type = #tpu.core_type<tc>, window_params = [{transform_indices = @transform_0, window_bounds = array<i64: 128, 128>}, {transform_indices = @transform_1, window_bounds = array<i64: 128, 32>}, {pipeline_mode = #tpu.pipeline_mode<synchronous>, transform_indices = @transform_2, window_bounds = array<i64: 32, 3200>}, {transform_indices = @transform_3, window_bounds = array<i64: 128, 64>}]} {
    %c0 = arith.constant 0 : index
    %c0_0 = arith.constant 0 : index
    %0 = vector.load %arg2[%c0, %c0_0] : memref<128x32xbf16, #tpu.memory_space<vmem>>, vector<128x32xbf16>
    %c0_1 = arith.constant 0 : index
    %c0_2 = arith.constant 0 : index
    %1 = vector.load %arg3[%c0_1, %c0_2] : memref<32x3200xbf16, #tpu.memory_space<vmem>>, vector<32x3200xbf16>
    %cst = arith.constant dense<0.000000e+00> : vector<128x3200xf32>
    %2 = tpu.matmul %0, %1, %cst {dimension_numbers = #tpu.dot_dimension_numbers<[1], [0], [0], [1], [0, 0, 1, 1], [], []>} : vector<128x32xbf16>, vector<32x3200xbf16>, vector<128x3200xf32> -> vector<128x3200xf32>
    %c0_3 = arith.constant 0 : index
    %c0_4 = arith.constant 0 : index
    %3 = vector.load %arg1[%c0_3, %c0_4] : memref<128x128xbf16, #tpu.memory_space<vmem>>, vector<128x128xbf16>
    %4 = arith.extf %3 : vector<128x128xbf16> to vector<128x128xf32>
    %5 = vector.extract_strided_slice %4 {offsets = [0, 0], sizes = [128, 1], strides = [1, 1]} : vector<128x128xf32> to vector<128x1xf32>
    %6 = vector.extract_strided_slice %2 {offsets = [0, 0], sizes = [128, 128], strides = [1, 1]} : vector<128x3200xf32> to vector<128x128xf32>
    %7 = vector.broadcast %5 : vector<128x1xf32> to vector<128x128xf32>
    %8 = arith.mulf %7, %6 : vector<128x128xf32>
    %9 = vector.extract_strided_slice %4 {offsets = [0, 1], sizes = [128, 1], strides = [1, 1]} : vector<128x128xf32> to vector<128x1xf32>
    %10 = vector.extract_strided_slice %2 {offsets = [0, 128], sizes = [128, 128], strides = [1, 1]} : vector<128x3200xf32> to vector<128x128xf32>
    %11 = vector.broadcast %9 : vector<128x1xf32> to vector<128x128xf32>
    %12 = arith.mulf %11, %10 : vector<128x128xf32>
    %13 = arith.addf %8, %12 : vector<128x128xf32>
    %14 = vector.extract_strided_slice %4 {offsets = [0, 2], sizes = [128, 1], strides = [1, 1]} : vector<128x128xf32> to vector<128x1xf32>
    %15 = vector.extract_strided_slice %2 {offsets = [0, 256], sizes = [128, 128], strides = [1, 1]} : vector<128x3200xf32> to vector<128x128xf32>
    %16 = vector.broadcast %14 : vector<128x1xf32> to vector<128x128xf32>
    %17 = arith.mulf %16, %15 : vector<128x128xf32>
    %18 = arith.addf %13, %17 : vector<128x128xf32>
    %19 = vector.extract_strided_slice %4 {offsets = [0, 3], sizes = [128, 1], strides = [1, 1]} : vector<128x128xf32> to vector<128x1xf32>
    %20 = vector.extract_strided_slice %2 {offsets = [0, 384], sizes = [128, 128], strides = [1, 1]} : vector<128x3200xf32> to vector<128x128xf32>
    %21 = vector.broadcast %19 : vector<128x1xf32> to vector<128x128xf32>
    %22 = arith.mulf %21, %20 : vector<128x128xf32>
    %23 = arith.addf %18, %22 : vector<128x128xf32>
    %24 = vector.extract_strided_slice %4 {offsets = [0, 4], sizes = [128, 1], strides = [1, 1]} : vector<128x128xf32> to vector<128x1xf32>
    %25 = vector.extract_strided_slice %2 {offsets = [0, 512], sizes = [128, 128], strides = [1, 1]} : vector<128x3200xf32> to vector<128x128xf32>
    %26 = vector.broadcast %24 : vector<128x1xf32> to vector<128x128xf32>
    %27 = arith.mulf %26, %25 : vector<128x128xf32>
    %28 = arith.addf %23, %27 : vector<128x128xf32>
    %29 = vector.extract_strided_slice %4 {offsets = [0, 5], sizes = [128, 1], strides = [1, 1]} : vector<128x128xf32> to vector<128x1xf32>
    %30 = vector.extract_strided_slice %2 {offsets = [0, 640], sizes = [128, 128], strides = [1, 1]} : vector<128x3200xf32> to vector<128x128xf32>
    %31 = vector.broadcast %29 : vector<128x1xf32> to vector<128x128xf32>
    %32 = arith.mulf %31, %30 : vector<128x128xf32>
    %33 = arith.addf %28, %32 : vector<128x128xf32>
    %34 = vector.extract_strided_slice %4 {offsets = [0, 6], sizes = [128, 1], strides = [1, 1]} : vector<128x128xf32> to vector<128x1xf32>
    %35 = vector.extract_strided_slice %2 {offsets = [0, 768], sizes = [128, 128], strides = [1, 1]} : vector<128x3200xf32> to vector<128x128xf32>
    %36 = vector.broadcast %34 : vector<128x1xf32> to vector<128x128xf32>
    %37 = arith.mulf %36, %35 : vector<128x128xf32>
    %38 = arith.addf %33, %37 : vector<128x128xf32>
    %39 = vector.extract_strided_slice %4 {offsets = [0, 7], sizes = [128, 1], strides = [1, 1]} : vector<128x128xf32> to vector<128x1xf32>
    %40 = vector.extract_strided_slice %2 {offsets = [0, 896], sizes = [128, 128], strides = [1, 1]} : vector<128x3200xf32> to vector<128x128xf32>
    %41 = vector.broadcast %39 : vector<128x1xf32> to vector<128x128xf32>
    %42 = arith.mulf %41, %40 : vector<128x128xf32>
    %43 = arith.addf %38, %42 : vector<128x128xf32>
    %44 = vector.extract_strided_slice %4 {offsets = [0, 8], sizes = [128, 1], strides = [1, 1]} : vector<128x128xf32> to vector<128x1xf32>
    %45 = vector.extract_strided_slice %2 {offsets = [0, 1024], sizes = [128, 128], strides = [1, 1]} : vector<128x3200xf32> to vector<128x128xf32>
    %46 = vector.broadcast %44 : vector<128x1xf32> to vector<128x128xf32>
    %47 = arith.mulf %46, %45 : vector<128x128xf32>
    %48 = arith.addf %43, %47 : vector<128x128xf32>
    %49 = vector.extract_strided_slice %4 {offsets = [0, 9], sizes = [128, 1], strides = [1, 1]} : vector<128x128xf32> to vector<128x1xf32>
    %50 = vector.extract_strided_slice %2 {offsets = [0, 1152], sizes = [128, 128], strides = [1, 1]} : vector<128x3200xf32> to vector<128x128xf32>
    %51 = vector.broadcast %49 : vector<128x1xf32> to vector<128x128xf32>
    %52 = arith.mulf %51, %50 : vector<128x128xf32>
    %53 = arith.addf %48, %52 : vector<128x128xf32>
    %54 = vector.extract_strided_slice %4 {offsets = [0, 10], sizes = [128, 1], strides = [1, 1]} : vector<128x128xf32> to vector<128x1xf32>
    %55 = vector.extract_strided_slice %2 {offsets = [0, 1280], sizes = [128, 128], strides = [1, 1]} : vector<128x3200xf32> to vector<128x128xf32>
    %56 = vector.broadcast %54 : vector<128x1xf32> to vector<128x128xf32>
    %57 = arith.mulf %56, %55 : vector<128x128xf32>
    %58 = arith.addf %53, %57 : vector<128x128xf32>
    %59 = vector.extract_strided_slice %4 {offsets = [0, 11], sizes = [128, 1], strides = [1, 1]} : vector<128x128xf32> to vector<128x1xf32>
    %60 = vector.extract_strided_slice %2 {offsets = [0, 1408], sizes = [128, 128], strides = [1, 1]} : vector<128x3200xf32> to vector<128x128xf32>
    %61 = vector.broadcast %59 : vector<128x1xf32> to vector<128x128xf32>
    %62 = arith.mulf %61, %60 : vector<128x128xf32>
    %63 = arith.addf %58, %62 : vector<128x128xf32>
    %64 = vector.extract_strided_slice %4 {offsets = [0, 12], sizes = [128, 1], strides = [1, 1]} : vector<128x128xf32> to vector<128x1xf32>
    %65 = vector.extract_strided_slice %2 {offsets = [0, 1536], sizes = [128, 128], strides = [1, 1]} : vector<128x3200xf32> to vector<128x128xf32>
    %66 = vector.broadcast %64 : vector<128x1xf32> to vector<128x128xf32>
    %67 = arith.mulf %66, %65 : vector<128x128xf32>
    %68 = arith.addf %63, %67 : vector<128x128xf32>
    %69 = vector.extract_strided_slice %4 {offsets = [0, 13], sizes = [128, 1], strides = [1, 1]} : vector<128x128xf32> to vector<128x1xf32>
    %70 = vector.extract_strided_slice %2 {offsets = [0, 1664], sizes = [128, 128], strides = [1, 1]} : vector<128x3200xf32> to vector<128x128xf32>
    %71 = vector.broadcast %69 : vector<128x1xf32> to vector<128x128xf32>
    %72 = arith.mulf %71, %70 : vector<128x128xf32>
    %73 = arith.addf %68, %72 : vector<128x128xf32>
    %74 = vector.extract_strided_slice %4 {offsets = [0, 14], sizes = [128, 1], strides = [1, 1]} : vector<128x128xf32> to vector<128x1xf32>
    %75 = vector.extract_strided_slice %2 {offsets = [0, 1792], sizes = [128, 128], strides = [1, 1]} : vector<128x3200xf32> to vector<128x128xf32>
    %76 = vector.broadcast %74 : vector<128x1xf32> to vector<128x128xf32>
    %77 = arith.mulf %76, %75 : vector<128x128xf32>
    %78 = arith.addf %73, %77 : vector<128x128xf32>
    %79 = vector.extract_strided_slice %4 {offsets = [0, 15], sizes = [128, 1], strides = [1, 1]} : vector<128x128xf32> to vector<128x1xf32>
    %80 = vector.extract_strided_slice %2 {offsets = [0, 1920], sizes = [128, 128], strides = [1, 1]} : vector<128x3200xf32> to vector<128x128xf32>
    %81 = vector.broadcast %79 : vector<128x1xf32> to vector<128x128xf32>
    %82 = arith.mulf %81, %80 : vector<128x128xf32>
    %83 = arith.addf %78, %82 : vector<128x128xf32>
    %84 = vector.extract_strided_slice %4 {offsets = [0, 16], sizes = [128, 1], strides = [1, 1]} : vector<128x128xf32> to vector<128x1xf32>
    %85 = vector.extract_strided_slice %2 {offsets = [0, 2048], sizes = [128, 128], strides = [1, 1]} : vector<128x3200xf32> to vector<128x128xf32>
    %86 = vector.broadcast %84 : vector<128x1xf32> to vector<128x128xf32>
    %87 = arith.mulf %86, %85 : vector<128x128xf32>
    %88 = arith.addf %83, %87 : vector<128x128xf32>
    %89 = vector.extract_strided_slice %4 {offsets = [0, 17], sizes = [128, 1], strides = [1, 1]} : vector<128x128xf32> to vector<128x1xf32>
    %90 = vector.extract_strided_slice %2 {offsets = [0, 2176], sizes = [128, 128], strides = [1, 1]} : vector<128x3200xf32> to vector<128x128xf32>
    %91 = vector.broadcast %89 : vector<128x1xf32> to vector<128x128xf32>
    %92 = arith.mulf %91, %90 : vector<128x128xf32>
    %93 = arith.addf %88, %92 : vector<128x128xf32>
    %94 = vector.extract_strided_slice %4 {offsets = [0, 18], sizes = [128, 1], strides = [1, 1]} : vector<128x128xf32> to vector<128x1xf32>
    %95 = vector.extract_strided_slice %2 {offsets = [0, 2304], sizes = [128, 128], strides = [1, 1]} : vector<128x3200xf32> to vector<128x128xf32>
    %96 = vector.broadcast %94 : vector<128x1xf32> to vector<128x128xf32>
    %97 = arith.mulf %96, %95 : vector<128x128xf32>
    %98 = arith.addf %93, %97 : vector<128x128xf32>
    %99 = vector.extract_strided_slice %4 {offsets = [0, 19], sizes = [128, 1], strides = [1, 1]} : vector<128x128xf32> to vector<128x1xf32>
    %100 = vector.extract_strided_slice %2 {offsets = [0, 2432], sizes = [128, 128], strides = [1, 1]} : vector<128x3200xf32> to vector<128x128xf32>
    %101 = vector.broadcast %99 : vector<128x1xf32> to vector<128x128xf32>
    %102 = arith.mulf %101, %100 : vector<128x128xf32>
    %103 = arith.addf %98, %102 : vector<128x128xf32>
    %104 = vector.extract_strided_slice %4 {offsets = [0, 20], sizes = [128, 1], strides = [1, 1]} : vector<128x128xf32> to vector<128x1xf32>
    %105 = vector.extract_strided_slice %2 {offsets = [0, 2560], sizes = [128, 128], strides = [1, 1]} : vector<128x3200xf32> to vector<128x128xf32>
    %106 = vector.broadcast %104 : vector<128x1xf32> to vector<128x128xf32>
    %107 = arith.mulf %106, %105 : vector<128x128xf32>
    %108 = arith.addf %103, %107 : vector<128x128xf32>
    %109 = vector.extract_strided_slice %4 {offsets = [0, 21], sizes = [128, 1], strides = [1, 1]} : vector<128x128xf32> to vector<128x1xf32>
    %110 = vector.extract_strided_slice %2 {offsets = [0, 2688], sizes = [128, 128], strides = [1, 1]} : vector<128x3200xf32> to vector<128x128xf32>
    %111 = vector.broadcast %109 : vector<128x1xf32> to vector<128x128xf32>
    %112 = arith.mulf %111, %110 : vector<128x128xf32>
    %113 = arith.addf %108, %112 : vector<128x128xf32>
    %114 = vector.extract_strided_slice %4 {offsets = [0, 22], sizes = [128, 1], strides = [1, 1]} : vector<128x128xf32> to vector<128x1xf32>
    %115 = vector.extract_strided_slice %2 {offsets = [0, 2816], sizes = [128, 128], strides = [1, 1]} : vector<128x3200xf32> to vector<128x128xf32>
    %116 = vector.broadcast %114 : vector<128x1xf32> to vector<128x128xf32>
    %117 = arith.mulf %116, %115 : vector<128x128xf32>
    %118 = arith.addf %113, %117 : vector<128x128xf32>
    %119 = vector.extract_strided_slice %4 {offsets = [0, 23], sizes = [128, 1], strides = [1, 1]} : vector<128x128xf32> to vector<128x1xf32>
    %120 = vector.extract_strided_slice %2 {offsets = [0, 2944], sizes = [128, 128], strides = [1, 1]} : vector<128x3200xf32> to vector<128x128xf32>
    %121 = vector.broadcast %119 : vector<128x1xf32> to vector<128x128xf32>
    %122 = arith.mulf %121, %120 : vector<128x128xf32>
    %123 = arith.addf %118, %122 : vector<128x128xf32>
    %124 = vector.extract_strided_slice %4 {offsets = [0, 24], sizes = [128, 1], strides = [1, 1]} : vector<128x128xf32> to vector<128x1xf32>
    %125 = vector.extract_strided_slice %2 {offsets = [0, 3072], sizes = [128, 128], strides = [1, 1]} : vector<128x3200xf32> to vector<128x128xf32>
    %126 = vector.broadcast %124 : vector<128x1xf32> to vector<128x128xf32>
    %127 = arith.mulf %126, %125 : vector<128x128xf32>
    %128 = arith.addf %123, %127 : vector<128x128xf32>
    %129 = vector.extract_strided_slice %128 {offsets = [0, 0], sizes = [128, 64], strides = [1, 1]} : vector<128x128xf32> to vector<128x64xf32>
    %130 = arith.truncf %129 : vector<128x64xf32> to vector<128x64xbf16>
    %c0_5 = arith.constant 0 : index
    %c0_6 = arith.constant 0 : index
    %131 = vector.load %arg4[%c0_5, %c0_6] : memref<128x64xbf16, #tpu.memory_space<vmem>>, vector<128x64xbf16>
    tpu.vector_store %arg4[%c0_5, %c0_6], %130 {strides = array<i32>} : memref<128x64xbf16, #tpu.memory_space<vmem>>, vector<128x64xbf16>,
    return
  }
  func.func @transform_0(%arg0: i32) -> (i32, i32) {
    %c0_i32 = arith.constant 0 : i32
    %c0_i32_0 = arith.constant 0 : i32
    return %arg0, %c0_i32 : i32, i32
  }
  func.func @transform_1(%arg0: i32) -> (i32, i32) {
    %c0_i32 = arith.constant 0 : i32
    %c0_i32_0 = arith.constant 0 : i32
    return %arg0, %c0_i32 : i32, i32
  }
  func.func @transform_2(%arg0: i32) -> (i32, i32) {
    %c0_i32 = arith.constant 0 : i32
    %c0_i32_0 = arith.constant 0 : i32
    %c0_i32_1 = arith.constant 0 : i32
    return %c0_i32, %c0_i32_0 : i32, i32
  }
  func.func @transform_3(%arg0: i32) -> (i32, i32) {
    %c0_i32 = arith.constant 0 : i32
    %c0_i32_0 = arith.constant 0 : i32
    return %arg0, %c0_i32 : i32, i32
  }
}

module attributes {stable_mosaic.version = 11 : i64} {
  func.func @_scatter_finalize_kernel(%arg0: i32, %arg1: i32, %arg2: memref<1x128xi32, #tpu.memory_space<vmem>>, %arg3: memref<128x64xbf16, #tpu.memory_space<vmem>>, %arg4: memref<24x1xf32, #tpu.memory_space<vmem>>, %arg5: memref<24x32xbf16, #tpu.memory_space<vmem>>, %arg6: memref<32x64xbf16, #tpu.memory_space<vmem>>, %arg7: memref<1x64xf32, #tpu.memory_space<vmem>>, %arg8: memref<24x64xbf16, #tpu.memory_space<vmem>>, %arg9: memref<24x64xf32, #tpu.memory_space<vmem>>) attributes {dimension_semantics = [#tpu.dimension_semantics<parallel>, #tpu.dimension_semantics<arbitrary>], iteration_bounds = array<i64: 1, 1>, scalar_prefetch = 0 : i64, scratch_operands = 1 : i64, tpu.core_type = #tpu.core_type<tc>, window_params = [{transform_indices = @transform_0, window_bounds = array<i64: 1, 128>}, {transform_indices = @transform_1, window_bounds = array<i64: 128, 64>}, {transform_indices = @transform_2, window_bounds = array<i64: 24, 1>}, {transform_indices = @transform_3, window_bounds = array<i64: 24, 32>}, {pipeline_mode = #tpu.pipeline_mode<synchronous>, transform_indices = @transform_4, window_bounds = array<i64: 32, 64>}, {pipeline_mode = #tpu.pipeline_mode<synchronous>, transform_indices = @transform_5, window_bounds = array<i64: 1, 64>}, {transform_indices = @transform_6, window_bounds = array<i64: 24, 64>}]} {
    %c0_i32 = arith.constant 0 : i32
    %0 = arith.cmpi eq, %arg1, %c0_i32 : i32
    %1 = arith.extui %0 : i1 to i32
    %c0_i32_0 = arith.constant 0 : i32
    %2 = arith.cmpi ne, %1, %c0_i32_0 : i32
    scf.if %2 {
      %cst_10 = arith.constant 0.000000e+00 : f32
      %21 = vector.broadcast %cst_10 : f32 to vector<24x64xf32>
      %c0_11 = arith.constant 0 : index
      %c0_12 = arith.constant 0 : index
      %22 = vector.load %arg9[%c0_11, %c0_12] : memref<24x64xf32, #tpu.memory_space<vmem>>, vector<24x64xf32>
      tpu.vector_store %arg9[%c0_11, %c0_12], %21 {strides = array<i32>} : memref<24x64xf32, #tpu.memory_space<vmem>>, vector<24x64xf32>,
    } else {
    }
    %c0 = arith.constant 0 : index
    %c0_1 = arith.constant 0 : index
    %3 = vector.load %arg2[%c0, %c0_1] : memref<1x128xi32, #tpu.memory_space<vmem>>, vector<1x128xi32>
    %c24_i32 = arith.constant 24 : i32
    %4 = arith.muli %arg0, %c24_i32 : i32
    %5 = tpu.iota {dimensions = array<i32: 0>} : vector<24x128xi32>
    %6 = vector.broadcast %4 : i32 to vector<24x128xi32>
    %7 = arith.addi %6, %5 : vector<24x128xi32>
    %8 = vector.broadcast %3 : vector<1x128xi32> to vector<24x128xi32>
    %9 = arith.cmpi eq, %7, %8 : vector<24x128xi32>
    %10 = arith.extui %9 : vector<24x128xi1> to vector<24x128xi32>
    %11 = arith.sitofp %10 : vector<24x128xi32> to vector<24x128xf32>
    %12 = arith.truncf %11 : vector<24x128xf32> to vector<24x128xbf16>
    %c0_2 = arith.constant 0 : index
    %c0_3 = arith.constant 0 : index
    %13 = vector.load %arg9[%c0_2, %c0_3] : memref<24x64xf32, #tpu.memory_space<vmem>>, vector<24x64xf32>
    %c0_4 = arith.constant 0 : index
    %c0_5 = arith.constant 0 : index
    %14 = vector.load %arg3[%c0_4, %c0_5] : memref<128x64xbf16, #tpu.memory_space<vmem>>, vector<128x64xbf16>
    %cst = arith.constant dense<0.000000e+00> : vector<24x64xf32>
    %15 = tpu.matmul %12, %14, %cst {dimension_numbers = #tpu.dot_dimension_numbers<[1], [0], [0], [1], [0, 0, 1, 1], [], []>} : vector<24x128xbf16>, vector<128x64xbf16>, vector<24x64xf32> -> vector<24x64xf32>
    %16 = arith.addf %13, %15 : vector<24x64xf32>
    %c0_6 = arith.constant 0 : index
    %c0_7 = arith.constant 0 : index
    %17 = vector.load %arg9[%c0_6, %c0_7] : memref<24x64xf32, #tpu.memory_space<vmem>>, vector<24x64xf32>
    tpu.vector_store %arg9[%c0_6, %c0_7], %16 {strides = array<i32>} : memref<24x64xf32, #tpu.memory_space<vmem>>, vector<24x64xf32>,
    %c0_i32_8 = arith.constant 0 : i32
    %18 = arith.cmpi eq, %arg1, %c0_i32_8 : i32
    %19 = arith.extui %18 : i1 to i32
    %c0_i32_9 = arith.constant 0 : i32
    %20 = arith.cmpi ne, %19, %c0_i32_9 : i32
    scf.if %20 {
      %c0_10 = arith.constant 0 : index
      %c0_11 = arith.constant 0 : index
      %21 = vector.load %arg5[%c0_10, %c0_11] : memref<24x32xbf16, #tpu.memory_space<vmem>>, vector<24x32xbf16>
      %c0_12 = arith.constant 0 : index
      %c0_13 = arith.constant 0 : index
      %22 = vector.load %arg6[%c0_12, %c0_13] : memref<32x64xbf16, #tpu.memory_space<vmem>>, vector<32x64xbf16>
      %cst_14 = arith.constant dense<0.000000e+00> : vector<24x64xf32>
      %23 = tpu.matmul %21, %22, %cst_14 {dimension_numbers = #tpu.dot_dimension_numbers<[1], [0], [0], [1], [0, 0, 1, 1], [], []>} : vector<24x32xbf16>, vector<32x64xbf16>, vector<24x64xf32> -> vector<24x64xf32>
      %c0_15 = arith.constant 0 : index
      %c0_16 = arith.constant 0 : index
      %24 = vector.load %arg9[%c0_15, %c0_16] : memref<24x64xf32, #tpu.memory_space<vmem>>, vector<24x64xf32>
      %c0_17 = arith.constant 0 : index
      %c0_18 = arith.constant 0 : index
      %25 = vector.load %arg4[%c0_17, %c0_18] : memref<24x1xf32, #tpu.memory_space<vmem>>, vector<24x1xf32>
      %26 = vector.broadcast %25 : vector<24x1xf32> to vector<24x64xf32>
      %27 = arith.mulf %24, %26 : vector<24x64xf32>
      %28 = arith.addf %27, %23 : vector<24x64xf32>
      %c0_19 = arith.constant 0 : index
      %c0_20 = arith.constant 0 : index
      %29 = vector.load %arg7[%c0_19, %c0_20] : memref<1x64xf32, #tpu.memory_space<vmem>>, vector<1x64xf32>
      %30 = vector.broadcast %29 : vector<1x64xf32> to vector<24x64xf32>
      %31 = arith.addf %28, %30 : vector<24x64xf32>
      %cst_21 = arith.constant 0.000000e+00 : f32
      %32 = vector.broadcast %cst_21 : f32 to vector<24x64xf32>
      %33 = arith.maximumf %31, %32 : vector<24x64xf32>
      %34 = arith.truncf %33 : vector<24x64xf32> to vector<24x64xbf16>
      %c0_22 = arith.constant 0 : index
      %c0_23 = arith.constant 0 : index
      %35 = vector.load %arg8[%c0_22, %c0_23] : memref<24x64xbf16, #tpu.memory_space<vmem>>, vector<24x64xbf16>
      tpu.vector_store %arg8[%c0_22, %c0_23], %34 {strides = array<i32>} : memref<24x64xbf16, #tpu.memory_space<vmem>>, vector<24x64xbf16>,
    } else {
    }
    return
  }
  func.func @transform_0(%arg0: i32, %arg1: i32) -> (i32, i32) {
    %c0_i32 = arith.constant 0 : i32
    %c0_i32_0 = arith.constant 0 : i32
    return %c0_i32, %arg1 : i32, i32
  }
  func.func @transform_1(%arg0: i32, %arg1: i32) -> (i32, i32) {
    %c0_i32 = arith.constant 0 : i32
    %c0_i32_0 = arith.constant 0 : i32
    return %arg1, %c0_i32 : i32, i32
  }
  func.func @transform_2(%arg0: i32, %arg1: i32) -> (i32, i32) {
    %c0_i32 = arith.constant 0 : i32
    %c0_i32_0 = arith.constant 0 : i32
    return %arg0, %c0_i32 : i32, i32
  }
  func.func @transform_3(%arg0: i32, %arg1: i32) -> (i32, i32) {
    %c0_i32 = arith.constant 0 : i32
    %c0_i32_0 = arith.constant 0 : i32
    return %arg0, %c0_i32 : i32, i32
  }
  func.func @transform_4(%arg0: i32, %arg1: i32) -> (i32, i32) {
    %c0_i32 = arith.constant 0 : i32
    %c0_i32_0 = arith.constant 0 : i32
    %c0_i32_1 = arith.constant 0 : i32
    return %c0_i32, %c0_i32_0 : i32, i32
  }
  func.func @transform_5(%arg0: i32, %arg1: i32) -> (i32, i32) {
    %c0_i32 = arith.constant 0 : i32
    %c0_i32_0 = arith.constant 0 : i32
    %c0_i32_1 = arith.constant 0 : i32
    return %c0_i32, %c0_i32_0 : i32, i32
  }
  func.func @transform_6(%arg0: i32, %arg1: i32) -> (i32, i32) {
    %c0_i32 = arith.constant 0 : i32
    %c0_i32_0 = arith.constant 0 : i32
    return %arg0, %c0_i32 : i32, i32
  }
}

module attributes {stable_mosaic.version = 11 : i64} {
  func.func @_head_kernel(%arg0: i32, %arg1: memref<1x128xi32, #tpu.memory_space<vmem>>, %arg2: memref<128x64xbf16, #tpu.memory_space<vmem>>, %arg3: memref<8x1xf32, #tpu.memory_space<vmem>>, %arg4: memref<64x128xbf16, #tpu.memory_space<vmem>>, %arg5: memref<1x128xf32, #tpu.memory_space<vmem>>, %arg6: memref<128x128xbf16, #tpu.memory_space<vmem>>, %arg7: memref<1x128xf32, #tpu.memory_space<vmem>>, %arg8: memref<8x128xf32, #tpu.memory_space<vmem>>, %arg9: memref<8x64xf32, #tpu.memory_space<vmem>>) attributes {dimension_semantics = [#tpu.dimension_semantics<arbitrary>], iteration_bounds = array<i64: 1>, scalar_prefetch = 0 : i64, scratch_operands = 1 : i64, tpu.core_type = #tpu.core_type<tc>, window_params = [{transform_indices = @transform_0, window_bounds = array<i64: 1, 128>}, {transform_indices = @transform_1, window_bounds = array<i64: 128, 64>}, {pipeline_mode = #tpu.pipeline_mode<synchronous>, transform_indices = @transform_2, window_bounds = array<i64: 8, 1>}, {pipeline_mode = #tpu.pipeline_mode<synchronous>, transform_indices = @transform_3, window_bounds = array<i64: 64, 128>}, {pipeline_mode = #tpu.pipeline_mode<synchronous>, transform_indices = @transform_4, window_bounds = array<i64: 1, 128>}, {pipeline_mode = #tpu.pipeline_mode<synchronous>, transform_indices = @transform_5, window_bounds = array<i64: 128, 128>}, {pipeline_mode = #tpu.pipeline_mode<synchronous>, transform_indices = @transform_6, window_bounds = array<i64: 1, 128>}, {pipeline_mode = #tpu.pipeline_mode<synchronous>, transform_indices = @transform_7, window_bounds = array<i64: 8, 128>}]} {
    %c0_i32 = arith.constant 0 : i32
    %0 = arith.cmpi eq, %arg0, %c0_i32 : i32
    %1 = arith.extui %0 : i1 to i32
    %c0_i32_0 = arith.constant 0 : i32
    %2 = arith.cmpi ne, %1, %c0_i32_0 : i32
    scf.if %2 {
      %cst_10 = arith.constant 0.000000e+00 : f32
      %18 = vector.broadcast %cst_10 : f32 to vector<8x64xf32>
      %c0_11 = arith.constant 0 : index
      %c0_12 = arith.constant 0 : index
      %19 = vector.load %arg9[%c0_11, %c0_12] : memref<8x64xf32, #tpu.memory_space<vmem>>, vector<8x64xf32>
      tpu.vector_store %arg9[%c0_11, %c0_12], %18 {strides = array<i32>} : memref<8x64xf32, #tpu.memory_space<vmem>>, vector<8x64xf32>,
    } else {
    }
    %3 = tpu.iota {dimensions = array<i32: 0>} : vector<8x128xi32>
    %c0 = arith.constant 0 : index
    %c0_1 = arith.constant 0 : index
    %4 = vector.load %arg1[%c0, %c0_1] : memref<1x128xi32, #tpu.memory_space<vmem>>, vector<1x128xi32>
    %5 = vector.broadcast %4 : vector<1x128xi32> to vector<8x128xi32>
    %6 = arith.cmpi eq, %5, %3 : vector<8x128xi32>
    %7 = arith.extui %6 : vector<8x128xi1> to vector<8x128xi32>
    %8 = arith.sitofp %7 : vector<8x128xi32> to vector<8x128xf32>
    %9 = arith.truncf %8 : vector<8x128xf32> to vector<8x128xbf16>
    %c0_2 = arith.constant 0 : index
    %c0_3 = arith.constant 0 : index
    %10 = vector.load %arg9[%c0_2, %c0_3] : memref<8x64xf32, #tpu.memory_space<vmem>>, vector<8x64xf32>
    %c0_4 = arith.constant 0 : index
    %c0_5 = arith.constant 0 : index
    %11 = vector.load %arg2[%c0_4, %c0_5] : memref<128x64xbf16, #tpu.memory_space<vmem>>, vector<128x64xbf16>
    %cst = arith.constant dense<0.000000e+00> : vector<8x64xf32>
    %12 = tpu.matmul %9, %11, %cst {dimension_numbers = #tpu.dot_dimension_numbers<[1], [0], [0], [1], [0, 0, 1, 1], [], []>} : vector<8x128xbf16>, vector<128x64xbf16>, vector<8x64xf32> -> vector<8x64xf32>
    %13 = arith.addf %10, %12 : vector<8x64xf32>
    %c0_6 = arith.constant 0 : index
    %c0_7 = arith.constant 0 : index
    %14 = vector.load %arg9[%c0_6, %c0_7] : memref<8x64xf32, #tpu.memory_space<vmem>>, vector<8x64xf32>
    tpu.vector_store %arg9[%c0_6, %c0_7], %13 {strides = array<i32>} : memref<8x64xf32, #tpu.memory_space<vmem>>, vector<8x64xf32>,
    %c0_i32_8 = arith.constant 0 : i32
    %15 = arith.cmpi eq, %arg0, %c0_i32_8 : i32
    %16 = arith.extui %15 : i1 to i32
    %c0_i32_9 = arith.constant 0 : i32
    %17 = arith.cmpi ne, %16, %c0_i32_9 : i32
    scf.if %17 {
      %c0_10 = arith.constant 0 : index
      %c0_11 = arith.constant 0 : index
      %18 = vector.load %arg9[%c0_10, %c0_11] : memref<8x64xf32, #tpu.memory_space<vmem>>, vector<8x64xf32>
      %c0_12 = arith.constant 0 : index
      %c0_13 = arith.constant 0 : index
      %19 = vector.load %arg3[%c0_12, %c0_13] : memref<8x1xf32, #tpu.memory_space<vmem>>, vector<8x1xf32>
      %20 = vector.broadcast %19 : vector<8x1xf32> to vector<8x64xf32>
      %21 = arith.mulf %18, %20 : vector<8x64xf32>
      %22 = arith.truncf %21 : vector<8x64xf32> to vector<8x64xbf16>
      %c0_14 = arith.constant 0 : index
      %c0_15 = arith.constant 0 : index
      %23 = vector.load %arg4[%c0_14, %c0_15] : memref<64x128xbf16, #tpu.memory_space<vmem>>, vector<64x128xbf16>
      %cst_16 = arith.constant dense<0.000000e+00> : vector<8x128xf32>
      %24 = tpu.matmul %22, %23, %cst_16 {dimension_numbers = #tpu.dot_dimension_numbers<[1], [0], [0], [1], [0, 0, 1, 1], [], []>} : vector<8x64xbf16>, vector<64x128xbf16>, vector<8x128xf32> -> vector<8x128xf32>
      %c0_17 = arith.constant 0 : index
      %c0_18 = arith.constant 0 : index
      %25 = vector.load %arg5[%c0_17, %c0_18] : memref<1x128xf32, #tpu.memory_space<vmem>>, vector<1x128xf32>
      %26 = vector.broadcast %25 : vector<1x128xf32> to vector<8x128xf32>
      %27 = arith.addf %24, %26 : vector<8x128xf32>
      %cst_19 = arith.constant 0.000000e+00 : f32
      %28 = vector.broadcast %cst_19 : f32 to vector<8x128xf32>
      %29 = arith.maximumf %27, %28 : vector<8x128xf32>
      %30 = arith.truncf %29 : vector<8x128xf32> to vector<8x128xbf16>
      %c0_20 = arith.constant 0 : index
      %c0_21 = arith.constant 0 : index
      %31 = vector.load %arg6[%c0_20, %c0_21] : memref<128x128xbf16, #tpu.memory_space<vmem>>, vector<128x128xbf16>
      %cst_22 = arith.constant dense<0.000000e+00> : vector<8x128xf32>
      %32 = tpu.matmul %30, %31, %cst_22 {dimension_numbers = #tpu.dot_dimension_numbers<[1], [0], [0], [1], [0, 0, 1, 1], [], []>} : vector<8x128xbf16>, vector<128x128xbf16>, vector<8x128xf32> -> vector<8x128xf32>
      %c0_23 = arith.constant 0 : index
      %c0_24 = arith.constant 0 : index
      %33 = vector.load %arg7[%c0_23, %c0_24] : memref<1x128xf32, #tpu.memory_space<vmem>>, vector<1x128xf32>
      %34 = vector.broadcast %33 : vector<1x128xf32> to vector<8x128xf32>
      %35 = arith.addf %32, %34 : vector<8x128xf32>
      %36 = tpu.iota {dimensions = array<i32: 1>} : vector<8x128xi32>
      %c10_i32 = arith.constant 10 : i32
      %37 = vector.broadcast %c10_i32 : i32 to vector<8x128xi32>
      %38 = arith.cmpi slt, %36, %37 : vector<8x128xi32>
      %cst_25 = arith.constant -1.000000e+30 : f32
      %39 = vector.broadcast %cst_25 : f32 to vector<8x128xf32>
      %40 = arith.select %38, %35, %39 : vector<8x128xi1>, vector<8x128xf32>
      %cst_26 = arith.constant dense<0xFF800000> : vector<8xf32>
      %41 = vector.multi_reduction <maximumf>, %40, %cst_26 [1] : vector<8x128xf32> to vector<8xf32>
      %42 = vector.shape_cast %41 : vector<8xf32> to vector<8x1xf32>
      %43 = vector.broadcast %42 : vector<8x1xf32> to vector<8x128xf32>
      %44 = arith.subf %40, %43 : vector<8x128xf32>
      %45 = math.exp %44 : vector<8x128xf32>
      %cst_27 = arith.constant dense<0.000000e+00> : vector<8xf32>
      %46 = vector.multi_reduction <add>, %45, %cst_27 [1] : vector<8x128xf32> to vector<8xf32>
      %47 = vector.shape_cast %46 : vector<8xf32> to vector<8x1xf32>
      %48 = math.log %47 : vector<8x1xf32>
      %49 = arith.addf %48, %42 : vector<8x1xf32>
      %50 = vector.broadcast %49 : vector<8x1xf32> to vector<8x128xf32>
      %51 = arith.subf %40, %50 : vector<8x128xf32>
      %c0_28 = arith.constant 0 : index
      %c0_29 = arith.constant 0 : index
      %52 = vector.load %arg8[%c0_28, %c0_29] : memref<8x128xf32, #tpu.memory_space<vmem>>, vector<8x128xf32>
      tpu.vector_store %arg8[%c0_28, %c0_29], %51 {strides = array<i32>} : memref<8x128xf32, #tpu.memory_space<vmem>>, vector<8x128xf32>,
    } else {
    }
    return
  }
  func.func @transform_0(%arg0: i32) -> (i32, i32) {
    %c0_i32 = arith.constant 0 : i32
    %c0_i32_0 = arith.constant 0 : i32
    return %c0_i32, %arg0 : i32, i32
  }
  func.func @transform_1(%arg0: i32) -> (i32, i32) {
    %c0_i32 = arith.constant 0 : i32
    %c0_i32_0 = arith.constant 0 : i32
    return %arg0, %c0_i32 : i32, i32
  }
  func.func @transform_2(%arg0: i32) -> (i32, i32) {
    %c0_i32 = arith.constant 0 : i32
    %c0_i32_0 = arith.constant 0 : i32
    %c0_i32_1 = arith.constant 0 : i32
    return %c0_i32, %c0_i32_0 : i32, i32
  }
  func.func @transform_3(%arg0: i32) -> (i32, i32) {
    %c0_i32 = arith.constant 0 : i32
    %c0_i32_0 = arith.constant 0 : i32
    %c0_i32_1 = arith.constant 0 : i32
    return %c0_i32, %c0_i32_0 : i32, i32
  }
  func.func @transform_4(%arg0: i32) -> (i32, i32) {
    %c0_i32 = arith.constant 0 : i32
    %c0_i32_0 = arith.constant 0 : i32
    %c0_i32_1 = arith.constant 0 : i32
    return %c0_i32, %c0_i32_0 : i32, i32
  }
  func.func @transform_5(%arg0: i32) -> (i32, i32) {
    %c0_i32 = arith.constant 0 : i32
    %c0_i32_0 = arith.constant 0 : i32
    %c0_i32_1 = arith.constant 0 : i32
    return %c0_i32, %c0_i32_0 : i32, i32
  }
  func.func @transform_6(%arg0: i32) -> (i32, i32) {
    %c0_i32 = arith.constant 0 : i32
    %c0_i32_0 = arith.constant 0 : i32
    %c0_i32_1 = arith.constant 0 : i32
    return %c0_i32, %c0_i32_0 : i32, i32
  }
  func.func @transform_7(%arg0: i32) -> (i32, i32) {
    %c0_i32 = arith.constant 0 : i32
    %c0_i32_0 = arith.constant 0 : i32
    %c0_i32_1 = arith.constant 0 : i32
    return %c0_i32, %c0_i32_0 : i32, i32
  }
}

</mosaic_0001>

<llo_original>
// kernel: spline_cnn_forward.6
$region0: #{spline_cnn_forward.6}
  #allocation0 [shape = 'u32[]', space=smem, size = 0x4, offset = 0x4, fixed_abs, tag = 'smem constant byte address 0x4 - core index']
  #allocation1 [shape = 'u32[144,128]{1,0:T(1,128)}', space=vmem, size = 0x12000, scoped, tag = 'internal scratch']
  #allocation2 [shape = 'f32[24,32]{1,0:T(8,128)}', space=vmem, size = 0x3000, scoped, tag = 'scratch operand']
  %s0 = inlined_call_operand.vmem [shape: s32[1,128], index: 0, kind: input, shape index: {}]
  %s1 = inlined_call_operand.vmem [shape: bf16[128,32], index: 1, kind: input, shape index: {}]
  %s2 = inlined_call_operand.vmem [shape: f32[24,1], index: 2, kind: input, shape index: {}]
  %s3 = inlined_call_operand.vmem [shape: f32[24,1], index: 3, kind: input, shape index: {}]
  %s4 = inlined_call_operand.vmem [shape: bf16[1,32], index: 4, kind: input, shape index: {}]
  %s5 = inlined_call_operand.vmem [shape: f32[1,32], index: 5, kind: input, shape index: {}]
  %s6 = inlined_call_operand.vmem [shape: bf16[24,32], index: 6, kind: output, shape index: {}]
  %s7 = sld [smem:[#allocation0]]
  $region42: #{spline_cnn_forward.6} parent=0
    _
  %s9 = ssub.s32 1, %s7
  %s10 = scalar_select 0, %s9, %s7
  // Predicated region
  $region2: #{spline_cnn_forward.6} parent=0 // pred_check
    _
  $region3: #{spline_cnn_forward.6} parent=0 // pred_check_branch
    %12 = sbr.rel (0) target = $region5
  $region4: #{spline_cnn_forward.6} parent=0 // pred_region
    _
  $region5: #{spline_cnn_forward.6} parent=0 // pred_fallthru
    _
  // Predicated region
  $region6: #{spline_cnn_forward.6} parent=0 // pred_check
    _
  $region7: #{spline_cnn_forward.6} parent=0 // pred_check_branch
    %14 = sbr.rel (0) target = $region9
  $region8: #{spline_cnn_forward.6} parent=0 // pred_region
    _
  $region9: #{spline_cnn_forward.6} parent=0 // pred_fallthru
    _
  // Predicated region
  $region10: #{spline_cnn_forward.6} parent=0 // pred_check
    _
  $region11: #{spline_cnn_forward.6} parent=0 // pred_check_branch
    %16 = sbr.rel (0) target = $region13
  $region12: #{spline_cnn_forward.6} parent=0 // pred_region
    _
  $region13: #{spline_cnn_forward.6} parent=0 // pred_fallthru
    _
  // Predicated region
  $region14: #{spline_cnn_forward.6} parent=0 // pred_check
    _
  $region15: #{spline_cnn_forward.6} parent=0 // pred_check_branch
    %18 = sbr.rel (0) target = $region17
  $region16: #{spline_cnn_forward.6} parent=0 // pred_region
    _
  $region17: #{spline_cnn_forward.6} parent=0 // pred_fallthru
    _
  // Predicated region
  $region18: #{spline_cnn_forward.6} parent=0 // pred_check
    _
  $region19: #{spline_cnn_forward.6} parent=0 // pred_check_branch
    %20 = sbr.rel (0) target = $region21
  $region20: #{spline_cnn_forward.6} parent=0 // pred_region
    _
  $region21: #{spline_cnn_forward.6} parent=0 // pred_fallthru
    _
  // Predicated region
  $region22: #{spline_cnn_forward.6} parent=0 // pred_check
    _
  $region23: #{spline_cnn_forward.6} parent=0 // pred_check_branch
    %22 = sbr.rel (0) target = $region25
  $region24: #{spline_cnn_forward.6} parent=0 // pred_region
    _
  $region25: #{spline_cnn_forward.6} parent=0 // pred_fallthru
    _
  %p24 = scmp.eq.s32.totalorder 0, 0
  // Predicated region
  $region26: #{spline_cnn_forward.6} parent=0 // pred_check
    %p25 = pneg %p24
  $region27: #{spline_cnn_forward.6} parent=0 // pred_check_branch
    %27 = sbr.rel (%p25) target = $region29
  $region28: #{spline_cnn_forward.6} parent=0 // pred_region
    %vm28 = vcmask 261120
    %29 = vst.msk [vmem:[#allocation2] sm:$0xff] %vm28, 0.0
    %30 = vst.msk [vmem:[#allocation2 + $0x8] sm:$0xff] %vm28, 0.0
    %31 = vst.msk [vmem:[#allocation2 + $0x10] sm:$0xff] %vm28, 0.0
  $region29: #{spline_cnn_forward.6} parent=0 // pred_fallthru
    _
  %v32 = vld [vmem:[%s0] sm:$0x1]
  %s33 = smul.u32 0, 24
  %v34 = vlaneseq
  %v35 = vshrl.u32 %v34, 7
  %v36 = vadd.s32 %v35, 8
  %v37 = vadd.s32 %v35, 16
  %v38 = vstv %s33
  %v39 = vadd.s32 %v38, %v35
  %v40 = vadd.s32 %v38, %v36
  %v41 = vadd.s32 %v38, %v37
  %v42 = vlaneseq
  %v43 = vshrl.u32 %v42, 7
  %v44 = vsub.s32 0, %v43
  %v45 = vrot.slane %v32, %v44
  %vm46 = vcmp.eq.s32.totalorder %v39, %v45
  %vm47 = vcmp.eq.s32.totalorder %v40, %v45
  %vm48 = vcmp.eq.s32.totalorder %v41, %v45
  %v49 = vsel %vm46, 1, 0
  %v50 = vsel %vm47, 1, 0
  %v51 = vsel %vm48, 1, 0
  %v52 = vcvt.s32.f32 %v49
  %v53 = vcvt.s32.f32 %v50
  %v54 = vcvt.s32.f32 %v51
  %v55 = vpack.c.bf16 %v53, %v52
  %v56 = vpack.c.bf16 %v54, %v54
  %v57 = vld [vmem:[#allocation2] sm:$0xff]
  %v58 = vld [vmem:[#allocation2 + $0x8] sm:$0xff]
  %v59 = vld [vmem:[#allocation2 + $0x10] sm:$0xff]
  %v60 = vld [vmem:[%s1] sm:$0xf]
  %v61 = vld [vmem:[%s1 + $0x4] sm:$0xf]
  %v62 = vld [vmem:[%s1 + $0x8] sm:$0xf]
  %v63 = vld [vmem:[%s1 + $0xc] sm:$0xf]
  %v64 = vld [vmem:[%s1 + $0x10] sm:$0xf]
  %v65 = vld [vmem:[%s1 + $0x14] sm:$0xf]
  %v66 = vld [vmem:[%s1 + $0x18] sm:$0xf]
  %v67 = vld [vmem:[%s1 + $0x1c] sm:$0xf]
  %v68 = vld [vmem:[%s1 + $0x20] sm:$0xf]
  %v69 = vld [vmem:[%s1 + $0x24] sm:$0xf]
  %v70 = vld [vmem:[%s1 + $0x28] sm:$0xf]
  %v71 = vld [vmem:[%s1 + $0x2c] sm:$0xf]
  %v72 = vld [vmem:[%s1 + $0x30] sm:$0xf]
  %v73 = vld [vmem:[%s1 + $0x34] sm:$0xf]
  %v74 = vld [vmem:[%s1 + $0x38] sm:$0xf]
  %v75 = vld [vmem:[%s1 + $0x3c] sm:$0xf]
  %v92 = vunpack.c.l.b16 %v60
  %v93 = vunpack.c.l.b16 %v61
  %v94 = vunpack.c.l.b16 %v62
  %v95 = vunpack.c.l.b16 %v63
  %v96 = vunpack.c.l.b16 %v64
  %v97 = vunpack.c.l.b16 %v65
  %v98 = vunpack.c.l.b16 %v66
  %v99 = vunpack.c.l.b16 %v67
  %v100 = vunpack.c.l.b16 %v68
  %v101 = vunpack.c.l.b16 %v69
  %v102 = vunpack.c.l.b16 %v70
  %v103 = vunpack.c.l.b16 %v71
  %v104 = vunpack.c.l.b16 %v72
  %v105 = vunpack.c.l.b16 %v73
  %v106 = vunpack.c.l.b16 %v74
  %v107 = vunpack.c.l.b16 %v75
  %v108 = vpack.c.b16 %v93, %v92
  %v109 = vpack.c.b16 %v95, %v94
  %v110 = vpack.c.b16 %v97, %v96
  %v111 = vpack.c.b16 %v99, %v98
  %v112 = vpack.c.b16 %v101, %v100
  %v113 = vpack.c.b16 %v103, %v102
  %v114 = vpack.c.b16 %v105, %v104
  %v115 = vpack.c.b16 %v107, %v106
  %124 = vmatprep.subr.bf16.mxu0 0
  %125 = vmatpush1.bf16.msra.mxu0 %v115
  %126 = vmatprep.subr.bf16.mxu0 0
  %127 = vmatpush1.bf16.msra.mxu0 %v114
  %128 = vmatprep.subr.bf16.mxu0 0
  %129 = vmatpush1.bf16.msra.mxu0 %v113
  %130 = vmatprep.subr.bf16.mxu0 0
  %131 = vmatpush1.bf16.msra.mxu0 %v112
  %132 = vmatprep.subr.bf16.mxu0 0
  %133 = vmatpush1.bf16.msra.mxu0 %v111
  %134 = vmatprep.subr.bf16.mxu0 0
  %135 = vmatpush1.bf16.msra.mxu0 %v110
  %136 = vmatprep.subr.bf16.mxu0 0
  %137 = vmatpush1.bf16.msra.mxu0 %v109
  %138 = vmatprep.subr.bf16.mxu0 0
  %139 = vmatpush1.bf16.msra.mxu0 %v108
  %140 = vmatprep.subr.bf16.mxu0 0
  %141 = vmatpush2.bf16.msra.mxu0 0
  %142 = vmatprep.subr.bf16.mxu0 0
  %143 = vmatpush2.bf16.msra.mxu0 0
  %144 = vmatprep.subr.bf16.mxu0 0
  %145 = vmatpush2.bf16.msra.mxu0 0
  %146 = vmatprep.subr.bf16.mxu0 0
  %147 = vmatpush2.bf16.msra.mxu0 0
  %148 = vmatprep.subr.bf16.mxu0 0
  %149 = vmatpush2.bf16.msra.mxu0 0
  %150 = vmatprep.subr.bf16.mxu0 0
  %151 = vmatpush2.bf16.msra.mxu0 0
  %152 = vmatprep.subr.bf16.mxu0 0
  %153 = vmatpush2.bf16.msra.mxu0 0
  %154 = vmatprep.subr.bf16.mxu0 0
  %155 = vmatpush2.bf16.msra.mxu0 0
  %156 = vmatprep.mubr.bf16.mxu0 0
  %157 = vmatmul.mubr.bf16.gmra.mxu0 %v55
  %v158 = vpop.f32.mrf.mxu0
  %v159 = vadd.f32 0.0, %v158
  %v160 = vpop.f32.mrf.mxu0
  %v161 = vpop.f32.mrf.mxu0
  %v162 = vadd.f32 0.0, %v161
  %v163 = vpop.f32.mrf.mxu0
  %164 = vmatprep.mubr.bf16.mxu0 0
  %165 = vmatmul.mubr.bf16.gmra.mxu0 %v56
  %v166 = vpop.f32.mrf.mxu0
  %v167 = vadd.f32 0.0, %v166
  %v168 = vpop.f32.mrf.mxu0
  %v169 = vpop.f32.mrf.mxu0
  %v170 = vpop.f32.mrf.mxu0
  %171 = vdwg.mxu0
  %v172 = vadd.f32 %v57, %v159
  %v173 = vadd.f32 %v58, %v162
  %v174 = vadd.f32 %v59, %v167
  %vm175 = vcmask 261120
  %176 = vst.msk [vmem:[#allocation2] sm:$0xff] %vm175, %v172
  %177 = vst.msk [vmem:[#allocation2 + $0x8] sm:$0xff] %vm175, %v173
  %178 = vst.msk [vmem:[#allocation2 + $0x10] sm:$0xff] %vm175, %v174
  // Predicated region
  $region30: #{spline_cnn_forward.6} parent=0 // pred_check
    %p179 = pneg %p24
  $region31: #{spline_cnn_forward.6} parent=0 // pred_check_branch
    %181 = sbr.rel (%p179) target = $region33
  $region32: #{spline_cnn_forward.6} parent=0 // pred_region
    %v182 = vld [vmem:[%s3] sm:$0xff]
    %v183 = vld [vmem:[%s3 + $0x8] sm:$0xff]
    %v184 = vld [vmem:[%s3 + $0x10] sm:$0xff]
    %v185 = vld [vmem:[%s4] sm:$0x1]
    %v186 = vunpack.c.l.bf16 %v185
    %188 = vset.pattern.permute.xlu0 0
    %189 = vperm.xlu0 %188, %v182
    %v190 = vpop.permute.xlu0 %189
    %193 = vset.pattern.permute.xlu0 0
    %194 = vperm.xlu0 %193, %v183
    %v195 = vpop.permute.xlu0 %194
    %198 = vset.pattern.permute.xlu0 0
    %199 = vperm.xlu0 %198, %v184
    %v200 = vpop.permute.xlu0 %199
    %v202 = vlaneseq
    %v203 = vshrl.u32 %v202, 7
    %v204 = vsub.s32 0, %v203
    %v205 = vrot.slane %v186, %v204
    %v206 = vmul.f32 %v190, %v205
    %v207 = vmul.f32 %v195, %v205
    %v208 = vmul.f32 %v200, %v205
    %v209 = vld [vmem:[#allocation2] sm:$0xff]
    %v210 = vld [vmem:[#allocation2 + $0x8] sm:$0xff]
    %v211 = vld [vmem:[#allocation2 + $0x10] sm:$0xff]
    %v212 = vld [vmem:[%s2] sm:$0xff]
    %v213 = vld [vmem:[%s2 + $0x8] sm:$0xff]
    %v214 = vld [vmem:[%s2 + $0x10] sm:$0xff]
    %216 = vset.pattern.permute.xlu0 0
    %217 = vperm.xlu0 %216, %v212
    %v218 = vpop.permute.xlu0 %217
    %221 = vset.pattern.permute.xlu0 0
    %222 = vperm.xlu0 %221, %v213
    %v223 = vpop.permute.xlu0 %222
    %226 = vset.pattern.permute.xlu0 0
    %227 = vperm.xlu0 %226, %v214
    %v228 = vpop.permute.xlu0 %227
    %v230 = vmul.f32 %v209, %v218
    %v231 = vmul.f32 %v210, %v223
    %v232 = vmul.f32 %v211, %v228
    %v233 = vadd.f32 %v230, %v206
    %v234 = vadd.f32 %v231, %v207
    %v235 = vadd.f32 %v232, %v208
    %v236 = vld [vmem:[%s5] sm:$0x1]
    %v238 = vlaneseq
    %v239 = vshrl.u32 %v238, 7
    %v240 = vsub.s32 0, %v239
    %v241 = vrot.slane %v236, %v240
    %v243 = vadd.f32 %v233, %v241
    %v244 = vadd.f32 %v234, %v241
    %v245 = vadd.f32 %v235, %v241
    %v246 = vmax.f32 %v243, 0.0
    %v247 = vmax.f32 %v244, 0.0
    %v248 = vmax.f32 %v245, 0.0
    %v249 = vpack.c.bf16 %v247, %v246
    %v250 = vpack.c.bf16 %v248, %v248
    %v253 = vunpack.c.l.b16 %v249
    %v254 = vunpack.c.h.b16 %v249
    %v255 = vunpack.c.l.b16 %v250
    %v256 = vpack.c.b16 %v253, %v253
    %v257 = vpack.c.b16 %v254, %v254
    %v258 = vpack.c.b16 %v255, %v255
    %vm262 = vcmask 257024
    %263 = vst.msk [vmem:[%s6] sm:$0xf] %vm262, %v256
    %264 = vst.msk [vmem:[%s6 + $0x4] sm:$0xf] %vm262, %v257
    %265 = vst.msk [vmem:[%s6 + $0x8] sm:$0xf] %vm262, %v258
  $region33: #{spline_cnn_forward.6} parent=0 // pred_fallthru
    _
  // Predicated region
  $region34: #{spline_cnn_forward.6} parent=0 // pred_check
    _
  $region35: #{spline_cnn_forward.6} parent=0 // pred_check_branch
    %267 = sbr.rel (0) target = $region37
  $region36: #{spline_cnn_forward.6} parent=0 // pred_region
    _
  $region37: #{spline_cnn_forward.6} parent=0 // pred_fallthru
    _
  // Predicated region
  $region38: #{spline_cnn_forward.6} parent=0 // pred_check
    _
  $region39: #{spline_cnn_forward.6} parent=0 // pred_check_branch
    %269 = sbr.rel (0) target = $region41
  $region40: #{spline_cnn_forward.6} parent=0 // pred_region
    _
  $region41: #{spline_cnn_forward.6} parent=0 // pred_fallthru
    _

// kernel: spline_cnn_forward.5
$region0: #{spline_cnn_forward.5}
  #allocation0 [shape = 'u32[]', space=smem, size = 0x4, offset = 0x4, fixed_abs, tag = 'smem constant byte address 0x4 - core index']
  #allocation1 [shape = 'u32[144,128]{1,0:T(1,128)}', space=vmem, size = 0x12000, scoped, tag = 'internal scratch']
  %s0 = inlined_call_operand.vmem [shape: bf16[128,128], index: 0, kind: input, shape index: {}]
  %s1 = inlined_call_operand.vmem [shape: f32[128,1], index: 1, kind: input, shape index: {}]
  %s2 = inlined_call_operand.vmem [shape: bf16[128,32], index: 2, kind: input, shape index: {}]
  %s3 = inlined_call_operand.vmem [shape: bf16[128,32], index: 3, kind: output, shape index: {}]
  %s4 = sld [smem:[#allocation0]]
  $region22: #{spline_cnn_forward.5} parent=0
    _
  %s6 = ssub.s32 1, %s4
  %s7 = scalar_select 0, %s6, %s4
  // Predicated region
  $region2: #{spline_cnn_forward.5} parent=0 // pred_check
    _
  $region3: #{spline_cnn_forward.5} parent=0 // pred_check_branch
    %9 = sbr.rel (0) target = $region5
  $region4: #{spline_cnn_forward.5} parent=0 // pred_region
    _
  $region5: #{spline_cnn_forward.5} parent=0 // pred_fallthru
    _
  // Predicated region
  $region6: #{spline_cnn_forward.5} parent=0 // pred_check
    _
  $region7: #{spline_cnn_forward.5} parent=0 // pred_check_branch
    %11 = sbr.rel (0) target = $region9
  $region8: #{spline_cnn_forward.5} parent=0 // pred_region
    _
  $region9: #{spline_cnn_forward.5} parent=0 // pred_fallthru
    _
  // Predicated region
  $region10: #{spline_cnn_forward.5} parent=0 // pred_check
    _
  $region11: #{spline_cnn_forward.5} parent=0 // pred_check_branch
    %13 = sbr.rel (0) target = $region13
  $region12: #{spline_cnn_forward.5} parent=0 // pred_region
    _
  $region13: #{spline_cnn_forward.5} parent=0 // pred_fallthru
    _
  %v15 = vld [vmem:[%s0] sm:$0xf]
  %v16 = vld [vmem:[%s0 + $0x4] sm:$0xf]
  %v17 = vld [vmem:[%s0 + $0x8] sm:$0xf]
  %v18 = vld [vmem:[%s0 + $0xc] sm:$0xf]
  %v19 = vld [vmem:[%s0 + $0x10] sm:$0xf]
  %v20 = vld [vmem:[%s0 + $0x14] sm:$0xf]
  %v21 = vld [vmem:[%s0 + $0x18] sm:$0xf]
  %v22 = vld [vmem:[%s0 + $0x1c] sm:$0xf]
  %v23 = vld [vmem:[%s0 + $0x20] sm:$0xf]
  %v24 = vld [vmem:[%s0 + $0x24] sm:$0xf]
  %v25 = vld [vmem:[%s0 + $0x28] sm:$0xf]
  %v26 = vld [vmem:[%s0 + $0x2c] sm:$0xf]
  %v27 = vld [vmem:[%s0 + $0x30] sm:$0xf]
  %v28 = vld [vmem:[%s0 + $0x34] sm:$0xf]
  %v29 = vld [vmem:[%s0 + $0x38] sm:$0xf]
  %v30 = vld [vmem:[%s0 + $0x3c] sm:$0xf]
  %v31 = vld [vmem:[%s2] sm:$0xf]
  %v32 = vld [vmem:[%s2 + $0x4] sm:$0xf]
  %v33 = vld [vmem:[%s2 + $0x8] sm:$0xf]
  %v34 = vld [vmem:[%s2 + $0xc] sm:$0xf]
  %v35 = vld [vmem:[%s2 + $0x10] sm:$0xf]
  %v36 = vld [vmem:[%s2 + $0x14] sm:$0xf]
  %v37 = vld [vmem:[%s2 + $0x18] sm:$0xf]
  %v38 = vld [vmem:[%s2 + $0x1c] sm:$0xf]
  %v39 = vld [vmem:[%s2 + $0x20] sm:$0xf]
  %v40 = vld [vmem:[%s2 + $0x24] sm:$0xf]
  %v41 = vld [vmem:[%s2 + $0x28] sm:$0xf]
  %v42 = vld [vmem:[%s2 + $0x2c] sm:$0xf]
  %v43 = vld [vmem:[%s2 + $0x30] sm:$0xf]
  %v44 = vld [vmem:[%s2 + $0x34] sm:$0xf]
  %v45 = vld [vmem:[%s2 + $0x38] sm:$0xf]
  %v46 = vld [vmem:[%s2 + $0x3c] sm:$0xf]
  %v63 = vunpack.c.l.b16 %v15
  %v64 = vunpack.c.l.b16 %v16
  %v65 = vunpack.c.l.b16 %v17
  %v66 = vunpack.c.l.b16 %v18
  %v67 = vunpack.c.l.b16 %v19
  %v68 = vunpack.c.l.b16 %v20
  %v69 = vunpack.c.l.b16 %v21
  %v70 = vunpack.c.l.b16 %v22
  %v71 = vunpack.c.l.b16 %v23
  %v72 = vunpack.c.l.b16 %v24
  %v73 = vunpack.c.l.b16 %v25
  %v74 = vunpack.c.l.b16 %v26
  %v75 = vunpack.c.l.b16 %v27
  %v76 = vunpack.c.l.b16 %v28
  %v77 = vunpack.c.l.b16 %v29
  %v78 = vunpack.c.l.b16 %v30
  %v79 = vpack.c.b16 %v64, %v63
  %v80 = vpack.c.b16 %v66, %v65
  %v81 = vpack.c.b16 %v68, %v67
  %v82 = vpack.c.b16 %v70, %v69
  %v83 = vpack.c.b16 %v72, %v71
  %v84 = vpack.c.b16 %v74, %v73
  %v85 = vpack.c.b16 %v76, %v75
  %v86 = vpack.c.b16 %v78, %v77
  %v111 = vunpack.c.l.b16 %v31
  %v112 = vunpack.c.l.b16 %v32
  %v113 = vunpack.c.l.b16 %v33
  %v114 = vunpack.c.l.b16 %v34
  %v115 = vunpack.c.l.b16 %v35
  %v116 = vunpack.c.l.b16 %v36
  %v117 = vunpack.c.l.b16 %v37
  %v118 = vunpack.c.l.b16 %v38
  %v119 = vunpack.c.l.b16 %v39
  %v120 = vunpack.c.l.b16 %v40
  %v121 = vunpack.c.l.b16 %v41
  %v122 = vunpack.c.l.b16 %v42
  %v123 = vunpack.c.l.b16 %v43
  %v124 = vunpack.c.l.b16 %v44
  %v125 = vunpack.c.l.b16 %v45
  %v126 = vunpack.c.l.b16 %v46
  %v127 = vpack.c.b16 %v112, %v111
  %v128 = vpack.c.b16 %v114, %v113
  %v129 = vpack.c.b16 %v116, %v115
  %v130 = vpack.c.b16 %v118, %v117
  %v131 = vpack.c.b16 %v120, %v119
  %v132 = vpack.c.b16 %v122, %v121
  %v133 = vpack.c.b16 %v124, %v123
  %v134 = vpack.c.b16 %v126, %v125
  %143 = vmatprep.subr.bf16.mxu0 0
  %144 = vmatpush1.bf16.msra.mxu0 %v134
  %145 = vmatprep.subr.bf16.mxu0 0
  %146 = vmatpush1.bf16.msra.mxu0 %v133
  %147 = vmatprep.subr.bf16.mxu0 0
  %148 = vmatpush1.bf16.msra.mxu0 %v132
  %149 = vmatprep.subr.bf16.mxu0 0
  %150 = vmatpush1.bf16.msra.mxu0 %v131
  %151 = vmatprep.subr.bf16.mxu0 0
  %152 = vmatpush1.bf16.msra.mxu0 %v130
  %153 = vmatprep.subr.bf16.mxu0 0
  %154 = vmatpush1.bf16.msra.mxu0 %v129
  %155 = vmatprep.subr.bf16.mxu0 0
  %156 = vmatpush1.bf16.msra.mxu0 %v128
  %157 = vmatprep.subr.bf16.mxu0 0
  %158 = vmatpush1.bf16.msra.mxu0 %v127
  %159 = vmatprep.subr.bf16.mxu0 0
  %160 = vmatpush2.bf16.msra.mxu0 0
  %161 = vmatprep.subr.bf16.mxu0 0
  %162 = vmatpush2.bf16.msra.mxu0 0
  %163 = vmatprep.subr.bf16.mxu0 0
  %164 = vmatpush2.bf16.msra.mxu0 0
  %165 = vmatprep.subr.bf16.mxu0 0
  %166 = vmatpush2.bf16.msra.mxu0 0
  %167 = vmatprep.subr.bf16.mxu0 0
  %168 = vmatpush2.bf16.msra.mxu0 0
  %169 = vmatprep.subr.bf16.mxu0 0
  %170 = vmatpush2.bf16.msra.mxu0 0
  %171 = vmatprep.subr.bf16.mxu0 0
  %172 = vmatpush2.bf16.msra.mxu0 0
  %173 = vmatprep.subr.bf16.mxu0 0
  %174 = vmatpush2.bf16.msra.mxu0 0
  %175 = vmatprep.mubr.bf16.mxu0 0
  %176 = vmatmul.mubr.bf16.gmra.mxu0 %v79
  %v177 = vpop.f32.mrf.mxu0
  %v178 = vadd.f32 0.0, %v177
  %v179 = vpop.f32.mrf.mxu0
  %v180 = vpop.f32.mrf.mxu0
  %v181 = vadd.f32 0.0, %v180
  %v182 = vpop.f32.mrf.mxu0
  %183 = vmatprep.mubr.bf16.mxu0 0
  %184 = vmatmul.mubr.bf16.gmra.mxu0 %v80
  %v185 = vpop.f32.mrf.mxu0
  %v186 = vadd.f32 0.0, %v185
  %v187 = vpop.f32.mrf.mxu0
  %v188 = vpop.f32.mrf.mxu0
  %v189 = vadd.f32 0.0, %v188
  %v190 = vpop.f32.mrf.mxu0
  %191 = vmatprep.mubr.bf16.mxu0 0
  %192 = vmatmul.mubr.bf16.gmra.mxu0 %v81
  %v193 = vpop.f32.mrf.mxu0
  %v194 = vadd.f32 0.0, %v193
  %v195 = vpop.f32.mrf.mxu0
  %v196 = vpop.f32.mrf.mxu0
  %v197 = vadd.f32 0.0, %v196
  %v198 = vpop.f32.mrf.mxu0
  %199 = vmatprep.mubr.bf16.mxu0 0
  %200 = vmatmul.mubr.bf16.gmra.mxu0 %v82
  %v201 = vpop.f32.mrf.mxu0
  %v202 = vadd.f32 0.0, %v201
  %v203 = vpop.f32.mrf.mxu0
  %v204 = vpop.f32.mrf.mxu0
  %v205 = vadd.f32 0.0, %v204
  %v206 = vpop.f32.mrf.mxu0
  %207 = vmatprep.mubr.bf16.mxu0 0
  %208 = vmatmul.mubr.bf16.gmra.mxu0 %v83
  %v209 = vpop.f32.mrf.mxu0
  %v210 = vadd.f32 0.0, %v209
  %v211 = vpop.f32.mrf.mxu0
  %v212 = vpop.f32.mrf.mxu0
  %v213 = vadd.f32 0.0, %v212
  %v214 = vpop.f32.mrf.mxu0
  %215 = vmatprep.mubr.bf16.mxu0 0
  %216 = vmatmul.mubr.bf16.gmra.mxu0 %v84
  %v217 = vpop.f32.mrf.mxu0
  %v218 = vadd.f32 0.0, %v217
  %v219 = vpop.f32.mrf.mxu0
  %v220 = vpop.f32.mrf.mxu0
  %v221 = vadd.f32 0.0, %v220
  %v222 = vpop.f32.mrf.mxu0
  %223 = vmatprep.mubr.bf16.mxu0 0
  %224 = vmatmul.mubr.bf16.gmra.mxu0 %v85
  %v225 = vpop.f32.mrf.mxu0
  %v226 = vadd.f32 0.0, %v225
  %v227 = vpop.f32.mrf.mxu0
  %v228 = vpop.f32.mrf.mxu0
  %v229 = vadd.f32 0.0, %v228
  %v230 = vpop.f32.mrf.mxu0
  %231 = vmatprep.mubr.bf16.mxu0 0
  %232 = vmatmul.mubr.bf16.gmra.mxu0 %v86
  %v233 = vpop.f32.mrf.mxu0
  %v234 = vadd.f32 0.0, %v233
  %v235 = vpop.f32.mrf.mxu0
  %v236 = vpop.f32.mrf.mxu0
  %v237 = vadd.f32 0.0, %v236
  %v238 = vpop.f32.mrf.mxu0
  %239 = vdwg.mxu0
  %v240 = vld [vmem:[%s1] sm:$0xff]
  %v241 = vld [vmem:[%s1 + $0x8] sm:$0xff]
  %v242 = vld [vmem:[%s1 + $0x10] sm:$0xff]
  %v243 = vld [vmem:[%s1 + $0x18] sm:$0xff]
  %v244 = vld [vmem:[%s1 + $0x20] sm:$0xff]
  %v245 = vld [vmem:[%s1 + $0x28] sm:$0xff]
  %v246 = vld [vmem:[%s1 + $0x30] sm:$0xff]
  %v247 = vld [vmem:[%s1 + $0x38] sm:$0xff]
  %v248 = vld [vmem:[%s1 + $0x40] sm:$0xff]
  %v249 = vld [vmem:[%s1 + $0x48] sm:$0xff]
  %v250 = vld [vmem:[%s1 + $0x50] sm:$0xff]
  %v251 = vld [vmem:[%s1 + $0x58] sm:$0xff]
  %v252 = vld [vmem:[%s1 + $0x60] sm:$0xff]
  %v253 = vld [vmem:[%s1 + $0x68] sm:$0xff]
  %v254 = vld [vmem:[%s1 + $0x70] sm:$0xff]
  %v255 = vld [vmem:[%s1 + $0x78] sm:$0xff]
  %257 = vset.pattern.permute.xlu0 0
  %258 = vperm.xlu0 %257, %v240
  %v259 = vpop.permute.xlu0 %258
  %262 = vset.pattern.permute.xlu0 0
  %263 = vperm.xlu0 %262, %v241
  %v264 = vpop.permute.xlu0 %263
  %267 = vset.pattern.permute.xlu0 0
  %268 = vperm.xlu0 %267, %v242
  %v269 = vpop.permute.xlu0 %268
  %272 = vset.pattern.permute.xlu0 0
  %273 = vperm.xlu0 %272, %v243
  %v274 = vpop.permute.xlu0 %273
  %277 = vset.pattern.permute.xlu0 0
  %278 = vperm.xlu0 %277, %v244
  %v279 = vpop.permute.xlu0 %278
  %282 = vset.pattern.permute.xlu0 0
  %283 = vperm.xlu0 %282, %v245
  %v284 = vpop.permute.xlu0 %283
  %287 = vset.pattern.permute.xlu0 0
  %288 = vperm.xlu0 %287, %v246
  %v289 = vpop.permute.xlu0 %288
  %292 = vset.pattern.permute.xlu0 0
  %293 = vperm.xlu0 %292, %v247
  %v294 = vpop.permute.xlu0 %293
  %297 = vset.pattern.permute.xlu0 0
  %298 = vperm.xlu0 %297, %v248
  %v299 = vpop.permute.xlu0 %298
  %302 = vset.pattern.permute.xlu0 0
  %303 = vperm.xlu0 %302, %v249
  %v304 = vpop.permute.xlu0 %303
  %307 = vset.pattern.permute.xlu0 0
  %308 = vperm.xlu0 %307, %v250
  %v309 = vpop.permute.xlu0 %308
  %312 = vset.pattern.permute.xlu0 0
  %313 = vperm.xlu0 %312, %v251
  %v314 = vpop.permute.xlu0 %313
  %317 = vset.pattern.permute.xlu0 0
  %318 = vperm.xlu0 %317, %v252
  %v319 = vpop.permute.xlu0 %318
  %322 = vset.pattern.permute.xlu0 0
  %323 = vperm.xlu0 %322, %v253
  %v324 = vpop.permute.xlu0 %323
  %327 = vset.pattern.permute.xlu0 0
  %328 = vperm.xlu0 %327, %v254
  %v329 = vpop.permute.xlu0 %328
  %332 = vset.pattern.permute.xlu0 0
  %333 = vperm.xlu0 %332, %v255
  %v334 = vpop.permute.xlu0 %333
  %v336 = vmul.f32 %v178, %v259
  %v337 = vmul.f32 %v181, %v264
  %v338 = vmul.f32 %v186, %v269
  %v339 = vmul.f32 %v189, %v274
  %v340 = vmul.f32 %v194, %v279
  %v341 = vmul.f32 %v197, %v284
  %v342 = vmul.f32 %v202, %v289
  %v343 = vmul.f32 %v205, %v294
  %v344 = vmul.f32 %v210, %v299
  %v345 = vmul.f32 %v213, %v304
  %v346 = vmul.f32 %v218, %v309
  %v347 = vmul.f32 %v221, %v314
  %v348 = vmul.f32 %v226, %v319
  %v349 = vmul.f32 %v229, %v324
  %v350 = vmul.f32 %v234, %v329
  %v351 = vmul.f32 %v237, %v334
  %v352 = vpack.c.bf16 %v337, %v336
  %v353 = vpack.c.bf16 %v339, %v338
  %v354 = vpack.c.bf16 %v341, %v340
  %v355 = vpack.c.bf16 %v343, %v342
  %v356 = vpack.c.bf16 %v345, %v344
  %v357 = vpack.c.bf16 %v347, %v346
  %v358 = vpack.c.bf16 %v349, %v348
  %v359 = vpack.c.bf16 %v351, %v350
  %v368 = vunpack.c.l.b16 %v352
  %v369 = vunpack.c.h.b16 %v352
  %v370 = vunpack.c.l.b16 %v353
  %v371 = vunpack.c.h.b16 %v353
  %v372 = vunpack.c.l.b16 %v354
  %v373 = vunpack.c.h.b16 %v354
  %v374 = vunpack.c.l.b16 %v355
  %v375 = vunpack.c.h.b16 %v355
  %v376 = vunpack.c.l.b16 %v356
  %v377 = vunpack.c.h.b16 %v356
  %v378 = vunpack.c.l.b16 %v357
  %v379 = vunpack.c.h.b16 %v357
  %v380 = vunpack.c.l.b16 %v358
  %v381 = vunpack.c.h.b16 %v358
  %v382 = vunpack.c.l.b16 %v359
  %v383 = vunpack.c.h.b16 %v359
  %v384 = vpack.c.b16 %v368, %v368
  %v385 = vpack.c.b16 %v369, %v369
  %v386 = vpack.c.b16 %v370, %v370
  %v387 = vpack.c.b16 %v371, %v371
  %v388 = vpack.c.b16 %v372, %v372
  %v389 = vpack.c.b16 %v373, %v373
  %v390 = vpack.c.b16 %v374, %v374
  %v391 = vpack.c.b16 %v375, %v375
  %v392 = vpack.c.b16 %v376, %v376
  %v393 = vpack.c.b16 %v377, %v377
  %v394 = vpack.c.b16 %v378, %v378
  %v395 = vpack.c.b16 %v379, %v379
  %v396 = vpack.c.b16 %v380, %v380
  %v397 = vpack.c.b16 %v381, %v381
  %v398 = vpack.c.b16 %v382, %v382
  %v399 = vpack.c.b16 %v383, %v383
  %vm416 = vcmask 257024
  %417 = vst.msk [vmem:[%s3] sm:$0xf] %vm416, %v384
  %418 = vst.msk [vmem:[%s3 + $0x4] sm:$0xf] %vm416, %v385
  %419 = vst.msk [vmem:[%s3 + $0x8] sm:$0xf] %vm416, %v386
  %420 = vst.msk [vmem:[%s3 + $0xc] sm:$0xf] %vm416, %v387
  %421 = vst.msk [vmem:[%s3 + $0x10] sm:$0xf] %vm416, %v388
  %422 = vst.msk [vmem:[%s3 + $0x14] sm:$0xf] %vm416, %v389
  %423 = vst.msk [vmem:[%s3 + $0x18] sm:$0xf] %vm416, %v390
  %424 = vst.msk [vmem:[%s3 + $0x1c] sm:$0xf] %vm416, %v391
  %425 = vst.msk [vmem:[%s3 + $0x20] sm:$0xf] %vm416, %v392
  %426 = vst.msk [vmem:[%s3 + $0x24] sm:$0xf] %vm416, %v393
  %427 = vst.msk [vmem:[%s3 + $0x28] sm:$0xf] %vm416, %v394
  %428 = vst.msk [vmem:[%s3 + $0x2c] sm:$0xf] %vm416, %v395
  %429 = vst.msk [vmem:[%s3 + $0x30] sm:$0xf] %vm416, %v396
  %430 = vst.msk [vmem:[%s3 + $0x34] sm:$0xf] %vm416, %v397
  %431 = vst.msk [vmem:[%s3 + $0x38] sm:$0xf] %vm416, %v398
  %432 = vst.msk [vmem:[%s3 + $0x3c] sm:$0xf] %vm416, %v399
  // Predicated region
  $region14: #{spline_cnn_forward.5} parent=0 // pred_check
    _
  $region15: #{spline_cnn_forward.5} parent=0 // pred_check_branch
    %434 = sbr.rel (0) target = $region17
  $region16: #{spline_cnn_forward.5} parent=0 // pred_region
    _
  $region17: #{spline_cnn_forward.5} parent=0 // pred_fallthru
    _
  // Predicated region
  $region18: #{spline_cnn_forward.5} parent=0 // pred_check
    _
  $region19: #{spline_cnn_forward.5} parent=0 // pred_check_branch
    %436 = sbr.rel (0) target = $region21
  $region20: #{spline_cnn_forward.5} parent=0 // pred_region
    _
  $region21: #{spline_cnn_forward.5} parent=0 // pred_fallthru
    _

// kernel: spline_cnn_forward.8
$region0: #{spline_cnn_forward.8}
  #allocation0 [shape = 'u32[]', space=smem, size = 0x4, offset = 0x4, fixed_abs, tag = 'smem constant byte address 0x4 - core index']
  #allocation1 [shape = 'u32[144,128]{1,0:T(1,128)}', space=vmem, size = 0x12000, scoped, tag = 'internal scratch']
  #allocation2 [shape = 'f32[24,64]{1,0:T(8,128)}', space=vmem, size = 0x3000, scoped, tag = 'scratch operand']
  %s0 = inlined_call_operand.vmem [shape: s32[1,128], index: 0, kind: input, shape index: {}]
  %s1 = inlined_call_operand.vmem [shape: bf16[128,64], index: 1, kind: input, shape index: {}]
  %s2 = inlined_call_operand.vmem [shape: f32[24,1], index: 2, kind: input, shape index: {}]
  %s3 = inlined_call_operand.vmem [shape: bf16[24,32], index: 3, kind: input, shape index: {}]
  %s4 = inlined_call_operand.vmem [shape: bf16[32,64], index: 4, kind: input, shape index: {}]
  %s5 = inlined_call_operand.vmem [shape: f32[1,64], index: 5, kind: input, shape index: {}]
  %s6 = inlined_call_operand.vmem [shape: bf16[24,64], index: 6, kind: output, shape index: {}]
  %s7 = sld [smem:[#allocation0]]
  $region42: #{spline_cnn_forward.8} parent=0
    _
  %s9 = ssub.s32 1, %s7
  %s10 = scalar_select 0, %s9, %s7
  // Predicated region
  $region2: #{spline_cnn_forward.8} parent=0 // pred_check
    _
  $region3: #{spline_cnn_forward.8} parent=0 // pred_check_branch
    %12 = sbr.rel (0) target = $region5
  $region4: #{spline_cnn_forward.8} parent=0 // pred_region
    _
  $region5: #{spline_cnn_forward.8} parent=0 // pred_fallthru
    _
  // Predicated region
  $region6: #{spline_cnn_forward.8} parent=0 // pred_check
    _
  $region7: #{spline_cnn_forward.8} parent=0 // pred_check_branch
    %14 = sbr.rel (0) target = $region9
  $region8: #{spline_cnn_forward.8} parent=0 // pred_region
    _
  $region9: #{spline_cnn_forward.8} parent=0 // pred_fallthru
    _
  // Predicated region
  $region10: #{spline_cnn_forward.8} parent=0 // pred_check
    _
  $region11: #{spline_cnn_forward.8} parent=0 // pred_check_branch
    %16 = sbr.rel (0) target = $region13
  $region12: #{spline_cnn_forward.8} parent=0 // pred_region
    _
  $region13: #{spline_cnn_forward.8} parent=0 // pred_fallthru
    _
  // Predicated region
  $region14: #{spline_cnn_forward.8} parent=0 // pred_check
    _
  $region15: #{spline_cnn_forward.8} parent=0 // pred_check_branch
    %18 = sbr.rel (0) target = $region17
  $region16: #{spline_cnn_forward.8} parent=0 // pred_region
    _
  $region17: #{spline_cnn_forward.8} parent=0 // pred_fallthru
    _
  // Predicated region
  $region18: #{spline_cnn_forward.8} parent=0 // pred_check
    _
  $region19: #{spline_cnn_forward.8} parent=0 // pred_check_branch
    %20 = sbr.rel (0) target = $region21
  $region20: #{spline_cnn_forward.8} parent=0 // pred_region
    _
  $region21: #{spline_cnn_forward.8} parent=0 // pred_fallthru
    _
  // Predicated region
  $region22: #{spline_cnn_forward.8} parent=0 // pred_check
    _
  $region23: #{spline_cnn_forward.8} parent=0 // pred_check_branch
    %22 = sbr.rel (0) target = $region25
  $region24: #{spline_cnn_forward.8} parent=0 // pred_region
    _
  $region25: #{spline_cnn_forward.8} parent=0 // pred_fallthru
    _
  %p24 = scmp.eq.s32.totalorder 0, 0
  // Predicated region
  $region26: #{spline_cnn_forward.8} parent=0 // pred_check
    %p25 = pneg %p24
  $region27: #{spline_cnn_forward.8} parent=0 // pred_check_branch
    %27 = sbr.rel (%p25) target = $region29
  $region28: #{spline_cnn_forward.8} parent=0 // pred_region
    %vm28 = vcmask 523264
    %29 = vst.msk [vmem:[#allocation2] sm:$0xff] %vm28, 0.0
    %30 = vst.msk [vmem:[#allocation2 + $0x8] sm:$0xff] %vm28, 0.0
    %31 = vst.msk [vmem:[#allocation2 + $0x10] sm:$0xff] %vm28, 0.0
  $region29: #{spline_cnn_forward.8} parent=0 // pred_fallthru
    _
  %v32 = vld [vmem:[%s0] sm:$0x1]
  %s33 = smul.u32 0, 24
  %v34 = vlaneseq
  %v35 = vshrl.u32 %v34, 7
  %v36 = vadd.s32 %v35, 8
  %v37 = vadd.s32 %v35, 16
  %v38 = vstv %s33
  %v39 = vadd.s32 %v38, %v35
  %v40 = vadd.s32 %v38, %v36
  %v41 = vadd.s32 %v38, %v37
  %v42 = vlaneseq
  %v43 = vshrl.u32 %v42, 7
  %v44 = vsub.s32 0, %v43
  %v45 = vrot.slane %v32, %v44
  %vm46 = vcmp.eq.s32.totalorder %v39, %v45
  %vm47 = vcmp.eq.s32.totalorder %v40, %v45
  %vm48 = vcmp.eq.s32.totalorder %v41, %v45
  %v49 = vsel %vm46, 1, 0
  %v50 = vsel %vm47, 1, 0
  %v51 = vsel %vm48, 1, 0
  %v52 = vcvt.s32.f32 %v49
  %v53 = vcvt.s32.f32 %v50
  %v54 = vcvt.s32.f32 %v51
  %v55 = vpack.c.bf16 %v53, %v52
  %v56 = vpack.c.bf16 %v54, %v54
  %v57 = vld [vmem:[#allocation2] sm:$0xff]
  %v58 = vld [vmem:[#allocation2 + $0x8] sm:$0xff]
  %v59 = vld [vmem:[#allocation2 + $0x10] sm:$0xff]
  %v60 = vld [vmem:[%s1] sm:$0xf]
  %v61 = vld [vmem:[%s1 + $0x4] sm:$0xf]
  %v62 = vld [vmem:[%s1 + $0x8] sm:$0xf]
  %v63 = vld [vmem:[%s1 + $0xc] sm:$0xf]
  %v64 = vld [vmem:[%s1 + $0x10] sm:$0xf]
  %v65 = vld [vmem:[%s1 + $0x14] sm:$0xf]
  %v66 = vld [vmem:[%s1 + $0x18] sm:$0xf]
  %v67 = vld [vmem:[%s1 + $0x1c] sm:$0xf]
  %v68 = vld [vmem:[%s1 + $0x20] sm:$0xf]
  %v69 = vld [vmem:[%s1 + $0x24] sm:$0xf]
  %v70 = vld [vmem:[%s1 + $0x28] sm:$0xf]
  %v71 = vld [vmem:[%s1 + $0x2c] sm:$0xf]
  %v72 = vld [vmem:[%s1 + $0x30] sm:$0xf]
  %v73 = vld [vmem:[%s1 + $0x34] sm:$0xf]
  %v74 = vld [vmem:[%s1 + $0x38] sm:$0xf]
  %v75 = vld [vmem:[%s1 + $0x3c] sm:$0xf]
  %v92 = vunpack.c.l.b16 %v60
  %v93 = vunpack.c.l.b16 %v61
  %v94 = vunpack.c.l.b16 %v62
  %v95 = vunpack.c.l.b16 %v63
  %v96 = vunpack.c.l.b16 %v64
  %v97 = vunpack.c.l.b16 %v65
  %v98 = vunpack.c.l.b16 %v66
  %v99 = vunpack.c.l.b16 %v67
  %v100 = vunpack.c.l.b16 %v68
  %v101 = vunpack.c.l.b16 %v69
  %v102 = vunpack.c.l.b16 %v70
  %v103 = vunpack.c.l.b16 %v71
  %v104 = vunpack.c.l.b16 %v72
  %v105 = vunpack.c.l.b16 %v73
  %v106 = vunpack.c.l.b16 %v74
  %v107 = vunpack.c.l.b16 %v75
  %v108 = vpack.c.b16 %v93, %v92
  %v109 = vpack.c.b16 %v95, %v94
  %v110 = vpack.c.b16 %v97, %v96
  %v111 = vpack.c.b16 %v99, %v98
  %v112 = vpack.c.b16 %v101, %v100
  %v113 = vpack.c.b16 %v103, %v102
  %v114 = vpack.c.b16 %v105, %v104
  %v115 = vpack.c.b16 %v107, %v106
  %124 = vmatprep.subr.bf16.mxu0 0
  %125 = vmatpush1.bf16.msra.mxu0 %v115
  %126 = vmatprep.subr.bf16.mxu0 0
  %127 = vmatpush1.bf16.msra.mxu0 %v114
  %128 = vmatprep.subr.bf16.mxu0 0
  %129 = vmatpush1.bf16.msra.mxu0 %v113
  %130 = vmatprep.subr.bf16.mxu0 0
  %131 = vmatpush1.bf16.msra.mxu0 %v112
  %132 = vmatprep.subr.bf16.mxu0 0
  %133 = vmatpush1.bf16.msra.mxu0 %v111
  %134 = vmatprep.subr.bf16.mxu0 0
  %135 = vmatpush1.bf16.msra.mxu0 %v110
  %136 = vmatprep.subr.bf16.mxu0 0
  %137 = vmatpush1.bf16.msra.mxu0 %v109
  %138 = vmatprep.subr.bf16.mxu0 0
  %139 = vmatpush1.bf16.msra.mxu0 %v108
  %140 = vmatprep.subr.bf16.mxu0 0
  %141 = vmatpush2.bf16.msra.mxu0 0
  %142 = vmatprep.subr.bf16.mxu0 0
  %143 = vmatpush2.bf16.msra.mxu0 0
  %144 = vmatprep.subr.bf16.mxu0 0
  %145 = vmatpush2.bf16.msra.mxu0 0
  %146 = vmatprep.subr.bf16.mxu0 0
  %147 = vmatpush2.bf16.msra.mxu0 0
  %148 = vmatprep.subr.bf16.mxu0 0
  %149 = vmatpush2.bf16.msra.mxu0 0
  %150 = vmatprep.subr.bf16.mxu0 0
  %151 = vmatpush2.bf16.msra.mxu0 0
  %152 = vmatprep.subr.bf16.mxu0 0
  %153 = vmatpush2.bf16.msra.mxu0 0
  %154 = vmatprep.subr.bf16.mxu0 0
  %155 = vmatpush2.bf16.msra.mxu0 0
  %156 = vmatprep.mubr.bf16.mxu0 0
  %157 = vmatmul.mubr.bf16.gmra.mxu0 %v55
  %v158 = vpop.f32.mrf.mxu0
  %v159 = vadd.f32 0.0, %v158
  %v160 = vpop.f32.mrf.mxu0
  %v161 = vpop.f32.mrf.mxu0
  %v162 = vadd.f32 0.0, %v161
  %v163 = vpop.f32.mrf.mxu0
  %164 = vmatprep.mubr.bf16.mxu0 0
  %165 = vmatmul.mubr.bf16.gmra.mxu0 %v56
  %v166 = vpop.f32.mrf.mxu0
  %v167 = vadd.f32 0.0, %v166
  %v168 = vpop.f32.mrf.mxu0
  %v169 = vpop.f32.mrf.mxu0
  %v170 = vpop.f32.mrf.mxu0
  %171 = vdwg.mxu0
  %v172 = vadd.f32 %v57, %v159
  %v173 = vadd.f32 %v58, %v162
  %v174 = vadd.f32 %v59, %v167
  %vm175 = vcmask 523264
  %176 = vst.msk [vmem:[#allocation2] sm:$0xff] %vm175, %v172
  %177 = vst.msk [vmem:[#allocation2 + $0x8] sm:$0xff] %vm175, %v173
  %178 = vst.msk [vmem:[#allocation2 + $0x10] sm:$0xff] %vm175, %v174
  // Predicated region
  $region30: #{spline_cnn_forward.8} parent=0 // pred_check
    %p179 = pneg %p24
  $region31: #{spline_cnn_forward.8} parent=0 // pred_check_branch
    %181 = sbr.rel (%p179) target = $region33
  $region32: #{spline_cnn_forward.8} parent=0 // pred_region
    %v182 = vld [vmem:[%s3] sm:$0xf]
    %v183 = vld [vmem:[%s3 + $0x4] sm:$0xf]
    %v184 = vld [vmem:[%s3 + $0x8] sm:$0xf]
    %v185 = vld [vmem:[%s4] sm:$0xf]
    %v186 = vld [vmem:[%s4 + $0x4] sm:$0xf]
    %v187 = vld [vmem:[%s4 + $0x8] sm:$0xf]
    %v188 = vld [vmem:[%s4 + $0xc] sm:$0xf]
    %v192 = vunpack.c.l.b16 %v182
    %v193 = vunpack.c.l.b16 %v183
    %v194 = vunpack.c.l.b16 %v184
    %v195 = vpack.c.b16 %v193, %v192
    %v196 = vpack.c.b16 %v194, %v194
    %v201 = vunpack.c.l.b16 %v185
    %v202 = vunpack.c.l.b16 %v186
    %v203 = vunpack.c.l.b16 %v187
    %v204 = vunpack.c.l.b16 %v188
    %v205 = vpack.c.b16 %v202, %v201
    %v206 = vpack.c.b16 %v204, %v203
    %vm209 = vcmask 261120
    %v211 = vsel %vm209, %v195, 0
    %v214 = vsel %vm209, %v196, 0
    %216 = vmatprep.subr.bf16.mxu0 0
    %217 = vmatpush1.bf16.msra.mxu0 0
    %218 = vmatprep.subr.bf16.mxu0 0
    %219 = vmatpush1.bf16.msra.mxu0 0
    %220 = vmatprep.subr.bf16.mxu0 0
    %221 = vmatpush1.bf16.msra.mxu0 0
    %222 = vmatprep.subr.bf16.mxu0 0
    %223 = vmatpush1.bf16.msra.mxu0 0
    %224 = vmatprep.subr.bf16.mxu0 0
    %225 = vmatpush1.bf16.msra.mxu0 0
    %226 = vmatprep.subr.bf16.mxu0 0
    %227 = vmatpush1.bf16.msra.mxu0 0
    %228 = vmatprep.subr.bf16.mxu0 0
    %229 = vmatpush1.bf16.msra.mxu0 %v206
    %230 = vmatprep.subr.bf16.mxu0 0
    %231 = vmatpush1.bf16.msra.mxu0 %v205
    %232 = vmatprep.subr.bf16.mxu0 0
    %233 = vmatpush2.bf16.msra.mxu0 0
    %234 = vmatprep.subr.bf16.mxu0 0
    %235 = vmatpush2.bf16.msra.mxu0 0
    %236 = vmatprep.subr.bf16.mxu0 0
    %237 = vmatpush2.bf16.msra.mxu0 0
    %238 = vmatprep.subr.bf16.mxu0 0
    %239 = vmatpush2.bf16.msra.mxu0 0
    %240 = vmatprep.subr.bf16.mxu0 0
    %241 = vmatpush2.bf16.msra.mxu0 0
    %242 = vmatprep.subr.bf16.mxu0 0
    %243 = vmatpush2.bf16.msra.mxu0 0
    %244 = vmatprep.subr.bf16.mxu0 0
    %245 = vmatpush2.bf16.msra.mxu0 0
    %246 = vmatprep.subr.bf16.mxu0 0
    %247 = vmatpush2.bf16.msra.mxu0 0
    %248 = vmatprep.mubr.bf16.mxu0 0
    %249 = vmatmul.mubr.bf16.gmra.mxu0 %v211
    %v250 = vpop.f32.mrf.mxu0
    %v251 = vadd.f32 0.0, %v250
    %v252 = vpop.f32.mrf.mxu0
    %v253 = vpop.f32.mrf.mxu0
    %v254 = vadd.f32 0.0, %v253
    %v255 = vpop.f32.mrf.mxu0
    %256 = vmatprep.mubr.bf16.mxu0 0
    %257 = vmatmul.mubr.bf16.gmra.mxu0 %v214
    %v258 = vpop.f32.mrf.mxu0
    %v259 = vadd.f32 0.0, %v258
    %v260 = vpop.f32.mrf.mxu0
    %v261 = vpop.f32.mrf.mxu0
    %v262 = vpop.f32.mrf.mxu0
    %263 = vdwg.mxu0
    %v264 = vld [vmem:[#allocation2] sm:$0xff]
    %v265 = vld [vmem:[#allocation2 + $0x8] sm:$0xff]
    %v266 = vld [vmem:[#allocation2 + $0x10] sm:$0xff]
    %v267 = vld [vmem:[%s2] sm:$0xff]
    %v268 = vld [vmem:[%s2 + $0x8] sm:$0xff]
    %v269 = vld [vmem:[%s2 + $0x10] sm:$0xff]
    %271 = vset.pattern.permute.xlu0 0
    %272 = vperm.xlu0 %271, %v267
    %v273 = vpop.permute.xlu0 %272
    %276 = vset.pattern.permute.xlu0 0
    %277 = vperm.xlu0 %276, %v268
    %v278 = vpop.permute.xlu0 %277
    %281 = vset.pattern.permute.xlu0 0
    %282 = vperm.xlu0 %281, %v269
    %v283 = vpop.permute.xlu0 %282
    %v285 = vmul.f32 %v264, %v273
    %v286 = vmul.f32 %v265, %v278
    %v287 = vmul.f32 %v266, %v283
    %v288 = vadd.f32 %v285, %v251
    %v289 = vadd.f32 %v286, %v254
    %v290 = vadd.f32 %v287, %v259
    %v291 = vld [vmem:[%s5] sm:$0x1]
    %v293 = vlaneseq
    %v294 = vshrl.u32 %v293, 7
    %v295 = vsub.s32 0, %v294
    %v296 = vrot.slane %v291, %v295
    %v298 = vadd.f32 %v288, %v296
    %v299 = vadd.f32 %v289, %v296
    %v300 = vadd.f32 %v290, %v296
    %v301 = vmax.f32 %v298, 0.0
    %v302 = vmax.f32 %v299, 0.0
    %v303 = vmax.f32 %v300, 0.0
    %v304 = vpack.c.bf16 %v302, %v301
    %v305 = vpack.c.bf16 %v303, %v303
    %v308 = vunpack.c.l.b16 %v304
    %v309 = vunpack.c.h.b16 %v304
    %v310 = vunpack.c.l.b16 %v305
    %v311 = vpack.c.b16 %v308, %v308
    %v312 = vpack.c.b16 %v309, %v309
    %v313 = vpack.c.b16 %v310, %v310
    %vm317 = vcmask 519168
    %318 = vst.msk [vmem:[%s6] sm:$0xf] %vm317, %v311
    %319 = vst.msk [vmem:[%s6 + $0x4] sm:$0xf] %vm317, %v312
    %320 = vst.msk [vmem:[%s6 + $0x8] sm:$0xf] %vm317, %v313
  $region33: #{spline_cnn_forward.8} parent=0 // pred_fallthru
    _
  // Predicated region
  $region34: #{spline_cnn_forward.8} parent=0 // pred_check
    _
  $region35: #{spline_cnn_forward.8} parent=0 // pred_check_branch
    %322 = sbr.rel (0) target = $region37
  $region36: #{spline_cnn_forward.8} parent=0 // pred_region
    _
  $region37: #{spline_cnn_forward.8} parent=0 // pred_fallthru
    _
  // Predicated region
  $region38: #{spline_cnn_forward.8} parent=0 // pred_check
    _
  $region39: #{spline_cnn_forward.8} parent=0 // pred_check_branch
    %324 = sbr.rel (0) target = $region41
  $region40: #{spline_cnn_forward.8} parent=0 // pred_region
    _
  $region41: #{spline_cnn_forward.8} parent=0 // pred_fallthru
    _

// kernel: spline_cnn_forward.9
$region0: #{spline_cnn_forward.9}
  #allocation0 [shape = 'u32[]', space=smem, size = 0x4, offset = 0x4, fixed_abs, tag = 'smem constant byte address 0x4 - core index']
  #allocation1 [shape = 'u32[144,128]{1,0:T(1,128)}', space=vmem, size = 0x12000, scoped, tag = 'internal scratch']
  #allocation2 [shape = 'f32[8,64]{1,0:T(8,128)}', space=vmem, size = 0x1000, scoped, tag = 'scratch operand']
  %s0 = inlined_call_operand.vmem [shape: s32[1,128], index: 0, kind: input, shape index: {}]
  %s1 = inlined_call_operand.vmem [shape: bf16[128,64], index: 1, kind: input, shape index: {}]
  %s2 = inlined_call_operand.vmem [shape: f32[8,1], index: 2, kind: input, shape index: {}]
  %s3 = inlined_call_operand.vmem [shape: bf16[64,128], index: 3, kind: input, shape index: {}]
  %s4 = inlined_call_operand.vmem [shape: f32[1,128], index: 4, kind: input, shape index: {}]
  %s5 = inlined_call_operand.vmem [shape: bf16[128,128], index: 5, kind: input, shape index: {}]
  %s6 = inlined_call_operand.vmem [shape: f32[1,128], index: 6, kind: input, shape index: {}]
  %s7 = inlined_call_operand.vmem [shape: f32[8,128], index: 7, kind: output, shape index: {}]
  %s8 = sld [smem:[#allocation0]]
  $region46: #{spline_cnn_forward.9} parent=0
    _
  %s10 = ssub.s32 1, %s8
  %s11 = scalar_select 0, %s10, %s8
  // Predicated region
  $region2: #{spline_cnn_forward.9} parent=0 // pred_check
    _
  $region3: #{spline_cnn_forward.9} parent=0 // pred_check_branch
    %13 = sbr.rel (0) target = $region5
  $region4: #{spline_cnn_forward.9} parent=0 // pred_region
    _
  $region5: #{spline_cnn_forward.9} parent=0 // pred_fallthru
    _
  // Predicated region
  $region6: #{spline_cnn_forward.9} parent=0 // pred_check
    _
  $region7: #{spline_cnn_forward.9} parent=0 // pred_check_branch
    %15 = sbr.rel (0) target = $region9
  $region8: #{spline_cnn_forward.9} parent=0 // pred_region
    _
  $region9: #{spline_cnn_forward.9} parent=0 // pred_fallthru
    _
  // Predicated region
  $region10: #{spline_cnn_forward.9} parent=0 // pred_check
    _
  $region11: #{spline_cnn_forward.9} parent=0 // pred_check_branch
    %17 = sbr.rel (0) target = $region13
  $region12: #{spline_cnn_forward.9} parent=0 // pred_region
    _
  $region13: #{spline_cnn_forward.9} parent=0 // pred_fallthru
    _
  // Predicated region
  $region14: #{spline_cnn_forward.9} parent=0 // pred_check
    _
  $region15: #{spline_cnn_forward.9} parent=0 // pred_check_branch
    %19 = sbr.rel (0) target = $region17
  $region16: #{spline_cnn_forward.9} parent=0 // pred_region
    _
  $region17: #{spline_cnn_forward.9} parent=0 // pred_fallthru
    _
  // Predicated region
  $region18: #{spline_cnn_forward.9} parent=0 // pred_check
    _
  $region19: #{spline_cnn_forward.9} parent=0 // pred_check_branch
    %21 = sbr.rel (0) target = $region21
  $region20: #{spline_cnn_forward.9} parent=0 // pred_region
    _
  $region21: #{spline_cnn_forward.9} parent=0 // pred_fallthru
    _
  // Predicated region
  $region22: #{spline_cnn_forward.9} parent=0 // pred_check
    _
  $region23: #{spline_cnn_forward.9} parent=0 // pred_check_branch
    %23 = sbr.rel (0) target = $region25
  $region24: #{spline_cnn_forward.9} parent=0 // pred_region
    _
  $region25: #{spline_cnn_forward.9} parent=0 // pred_fallthru
    _
  // Predicated region
  $region26: #{spline_cnn_forward.9} parent=0 // pred_check
    _
  $region27: #{spline_cnn_forward.9} parent=0 // pred_check_branch
    %25 = sbr.rel (0) target = $region29
  $region28: #{spline_cnn_forward.9} parent=0 // pred_region
    _
  $region29: #{spline_cnn_forward.9} parent=0 // pred_fallthru
    _
  %p27 = scmp.eq.s32.totalorder 0, 0
  // Predicated region
  $region30: #{spline_cnn_forward.9} parent=0 // pred_check
    %p28 = pneg %p27
  $region31: #{spline_cnn_forward.9} parent=0 // pred_check_branch
    %30 = sbr.rel (%p28) target = $region33
  $region32: #{spline_cnn_forward.9} parent=0 // pred_region
    %vm31 = vcmask 523264
    %32 = vst.msk [vmem:[#allocation2] sm:$0xff] %vm31, 0.0
  $region33: #{spline_cnn_forward.9} parent=0 // pred_fallthru
    _
  %v33 = vlaneseq
  %v34 = vshrl.u32 %v33, 7
  %v35 = vld [vmem:[%s0] sm:$0x1]
  %v36 = vlaneseq
  %v37 = vshrl.u32 %v36, 7
  %v38 = vsub.s32 0, %v37
  %v39 = vrot.slane %v35, %v38
  %vm40 = vcmp.eq.s32.totalorder %v39, %v34
  %v41 = vsel %vm40, 1, 0
  %v42 = vcvt.s32.f32 %v41
  %v43 = vpack.c.bf16 %v42, %v42
  %v44 = vld [vmem:[#allocation2] sm:$0xff]
  %v45 = vld [vmem:[%s1] sm:$0xf]
  %v46 = vld [vmem:[%s1 + $0x4] sm:$0xf]
  %v47 = vld [vmem:[%s1 + $0x8] sm:$0xf]
  %v48 = vld [vmem:[%s1 + $0xc] sm:$0xf]
  %v49 = vld [vmem:[%s1 + $0x10] sm:$0xf]
  %v50 = vld [vmem:[%s1 + $0x14] sm:$0xf]
  %v51 = vld [vmem:[%s1 + $0x18] sm:$0xf]
  %v52 = vld [vmem:[%s1 + $0x1c] sm:$0xf]
  %v53 = vld [vmem:[%s1 + $0x20] sm:$0xf]
  %v54 = vld [vmem:[%s1 + $0x24] sm:$0xf]
  %v55 = vld [vmem:[%s1 + $0x28] sm:$0xf]
  %v56 = vld [vmem:[%s1 + $0x2c] sm:$0xf]
  %v57 = vld [vmem:[%s1 + $0x30] sm:$0xf]
  %v58 = vld [vmem:[%s1 + $0x34] sm:$0xf]
  %v59 = vld [vmem:[%s1 + $0x38] sm:$0xf]
  %v60 = vld [vmem:[%s1 + $0x3c] sm:$0xf]
  %v77 = vunpack.c.l.b16 %v45
  %v78 = vunpack.c.l.b16 %v46
  %v79 = vunpack.c.l.b16 %v47
  %v80 = vunpack.c.l.b16 %v48
  %v81 = vunpack.c.l.b16 %v49
  %v82 = vunpack.c.l.b16 %v50
  %v83 = vunpack.c.l.b16 %v51
  %v84 = vunpack.c.l.b16 %v52
  %v85 = vunpack.c.l.b16 %v53
  %v86 = vunpack.c.l.b16 %v54
  %v87 = vunpack.c.l.b16 %v55
  %v88 = vunpack.c.l.b16 %v56
  %v89 = vunpack.c.l.b16 %v57
  %v90 = vunpack.c.l.b16 %v58
  %v91 = vunpack.c.l.b16 %v59
  %v92 = vunpack.c.l.b16 %v60
  %v93 = vpack.c.b16 %v78, %v77
  %v94 = vpack.c.b16 %v80, %v79
  %v95 = vpack.c.b16 %v82, %v81
  %v96 = vpack.c.b16 %v84, %v83
  %v97 = vpack.c.b16 %v86, %v85
  %v98 = vpack.c.b16 %v88, %v87
  %v99 = vpack.c.b16 %v90, %v89
  %v100 = vpack.c.b16 %v92, %v91
  %109 = vmatprep.subr.bf16.mxu0 0
  %110 = vmatpush1.bf16.msra.mxu0 %v100
  %111 = vmatprep.subr.bf16.mxu0 0
  %112 = vmatpush1.bf16.msra.mxu0 %v99
  %113 = vmatprep.subr.bf16.mxu0 0
  %114 = vmatpush1.bf16.msra.mxu0 %v98
  %115 = vmatprep.subr.bf16.mxu0 0
  %116 = vmatpush1.bf16.msra.mxu0 %v97
  %117 = vmatprep.subr.bf16.mxu0 0
  %118 = vmatpush1.bf16.msra.mxu0 %v96
  %119 = vmatprep.subr.bf16.mxu0 0
  %120 = vmatpush1.bf16.msra.mxu0 %v95
  %121 = vmatprep.subr.bf16.mxu0 0
  %122 = vmatpush1.bf16.msra.mxu0 %v94
  %123 = vmatprep.subr.bf16.mxu0 0
  %124 = vmatpush1.bf16.msra.mxu0 %v93
  %125 = vmatprep.subr.bf16.mxu0 0
  %126 = vmatpush2.bf16.msra.mxu0 0
  %127 = vmatprep.subr.bf16.mxu0 0
  %128 = vmatpush2.bf16.msra.mxu0 0
  %129 = vmatprep.subr.bf16.mxu0 0
  %130 = vmatpush2.bf16.msra.mxu0 0
  %131 = vmatprep.subr.bf16.mxu0 0
  %132 = vmatpush2.bf16.msra.mxu0 0
  %133 = vmatprep.subr.bf16.mxu0 0
  %134 = vmatpush2.bf16.msra.mxu0 0
  %135 = vmatprep.subr.bf16.mxu0 0
  %136 = vmatpush2.bf16.msra.mxu0 0
  %137 = vmatprep.subr.bf16.mxu0 0
  %138 = vmatpush2.bf16.msra.mxu0 0
  %139 = vmatprep.subr.bf16.mxu0 0
  %140 = vmatpush2.bf16.msra.mxu0 0
  %141 = vmatprep.mubr.bf16.mxu0 0
  %142 = vmatmul.mubr.bf16.gmra.mxu0 %v43
  %v143 = vpop.f32.mrf.mxu0
  %v144 = vadd.f32 0.0, %v143
  %v145 = vpop.f32.mrf.mxu0
  %v146 = vpop.f32.mrf.mxu0
  %v147 = vpop.f32.mrf.mxu0
  %148 = vdwg.mxu0
  %v149 = vadd.f32 %v44, %v144
  %vm150 = vcmask 523264
  %151 = vst.msk [vmem:[#allocation2] sm:$0xff] %vm150, %v149
  // Predicated region
  $region34: #{spline_cnn_forward.9} parent=0 // pred_check
    %p152 = pneg %p27
  $region35: #{spline_cnn_forward.9} parent=0 // pred_check_branch
    %154 = sbr.rel (%p152) target = $region37
  $region36: #{spline_cnn_forward.9} parent=0 // pred_region
    %v155 = vld [vmem:[#allocation2] sm:$0xff]
    %v156 = vld [vmem:[%s2] sm:$0xff]
    %158 = vset.pattern.permute.xlu0 0
    %159 = vperm.xlu0 %158, %v156
    %v160 = vpop.permute.xlu0 %159
    %v162 = vmul.f32 %v155, %v160
    %v163 = vpack.c.bf16 %v162, %v162
    %v164 = vld [vmem:[%s3] sm:$0xf]
    %v165 = vld [vmem:[%s3 + $0x4] sm:$0xf]
    %v166 = vld [vmem:[%s3 + $0x8] sm:$0xf]
    %v167 = vld [vmem:[%s3 + $0xc] sm:$0xf]
    %v168 = vld [vmem:[%s3 + $0x10] sm:$0xf]
    %v169 = vld [vmem:[%s3 + $0x14] sm:$0xf]
    %v170 = vld [vmem:[%s3 + $0x18] sm:$0xf]
    %v171 = vld [vmem:[%s3 + $0x1c] sm:$0xf]
    %v172 = vld [vmem:[%s4] sm:$0x1]
    %v174 = vlaneseq
    %v175 = vshrl.u32 %v174, 7
    %v176 = vsub.s32 0, %v175
    %v177 = vrot.slane %v172, %v176
    %v187 = vunpack.c.l.b16 %v164
    %v188 = vunpack.c.l.b16 %v165
    %v189 = vunpack.c.l.b16 %v166
    %v190 = vunpack.c.l.b16 %v167
    %v191 = vunpack.c.l.b16 %v168
    %v192 = vunpack.c.l.b16 %v169
    %v193 = vunpack.c.l.b16 %v170
    %v194 = vunpack.c.l.b16 %v171
    %v195 = vpack.c.b16 %v188, %v187
    %v196 = vpack.c.b16 %v190, %v189
    %v197 = vpack.c.b16 %v192, %v191
    %v198 = vpack.c.b16 %v194, %v193
    %v204 = vsel %vm150, %v163, 0
    %206 = vmatprep.subr.bf16.mxu0 0
    %207 = vmatpush1.bf16.msra.mxu0 0
    %208 = vmatprep.subr.bf16.mxu0 0
    %209 = vmatpush1.bf16.msra.mxu0 0
    %210 = vmatprep.subr.bf16.mxu0 0
    %211 = vmatpush1.bf16.msra.mxu0 0
    %212 = vmatprep.subr.bf16.mxu0 0
    %213 = vmatpush1.bf16.msra.mxu0 0
    %214 = vmatprep.subr.bf16.mxu0 0
    %215 = vmatpush1.bf16.msra.mxu0 %v198
    %216 = vmatprep.subr.bf16.mxu0 0
    %217 = vmatpush1.bf16.msra.mxu0 %v197
    %218 = vmatprep.subr.bf16.mxu0 0
    %219 = vmatpush1.bf16.msra.mxu0 %v196
    %220 = vmatprep.subr.bf16.mxu0 0
    %221 = vmatpush1.bf16.msra.mxu0 %v195
    %222 = vmatprep.subr.bf16.mxu0 0
    %223 = vmatpush2.bf16.msra.mxu0 0
    %224 = vmatprep.subr.bf16.mxu0 0
    %225 = vmatpush2.bf16.msra.mxu0 0
    %226 = vmatprep.subr.bf16.mxu0 0
    %227 = vmatpush2.bf16.msra.mxu0 0
    %228 = vmatprep.subr.bf16.mxu0 0
    %229 = vmatpush2.bf16.msra.mxu0 0
    %230 = vmatprep.subr.bf16.mxu0 0
    %231 = vmatpush2.bf16.msra.mxu0 0
    %232 = vmatprep.subr.bf16.mxu0 0
    %233 = vmatpush2.bf16.msra.mxu0 0
    %234 = vmatprep.subr.bf16.mxu0 0
    %235 = vmatpush2.bf16.msra.mxu0 0
    %236 = vmatprep.subr.bf16.mxu0 0
    %237 = vmatpush2.bf16.msra.mxu0 0
    %238 = vmatprep.mubr.bf16.mxu0 0
    %239 = vmatmul.mubr.bf16.gmra.mxu0 %v204
    %v240 = vpop.f32.mrf.mxu0
    %v241 = vadd.f32 %v177, %v240
    %v242 = vpop.f32.mrf.mxu0
    %v243 = vpop.f32.mrf.mxu0
    %v244 = vpop.f32.mrf.mxu0
    %245 = vdwg.mxu0
    %v246 = vmax.f32 %v241, 0.0
    %v247 = vpack.c.bf16 %v246, %v246
    %v248 = vld [vmem:[%s5] sm:$0xf]
    %v249 = vld [vmem:[%s5 + $0x4] sm:$0xf]
    %v250 = vld [vmem:[%s5 + $0x8] sm:$0xf]
    %v251 = vld [vmem:[%s5 + $0xc] sm:$0xf]
    %v252 = vld [vmem:[%s5 + $0x10] sm:$0xf]
    %v253 = vld [vmem:[%s5 + $0x14] sm:$0xf]
    %v254 = vld [vmem:[%s5 + $0x18] sm:$0xf]
    %v255 = vld [vmem:[%s5 + $0x1c] sm:$0xf]
    %v256 = vld [vmem:[%s5 + $0x20] sm:$0xf]
    %v257 = vld [vmem:[%s5 + $0x24] sm:$0xf]
    %v258 = vld [vmem:[%s5 + $0x28] sm:$0xf]
    %v259 = vld [vmem:[%s5 + $0x2c] sm:$0xf]
    %v260 = vld [vmem:[%s5 + $0x30] sm:$0xf]
    %v261 = vld [vmem:[%s5 + $0x34] sm:$0xf]
    %v262 = vld [vmem:[%s5 + $0x38] sm:$0xf]
    %v263 = vld [vmem:[%s5 + $0x3c] sm:$0xf]
    %v264 = vld [vmem:[%s6] sm:$0x1]
    %v266 = vlaneseq
    %v267 = vshrl.u32 %v266, 7
    %v268 = vsub.s32 0, %v267
    %v269 = vrot.slane %v264, %v268
    %v287 = vunpack.c.l.b16 %v248
    %v288 = vunpack.c.l.b16 %v249
    %v289 = vunpack.c.l.b16 %v250
    %v290 = vunpack.c.l.b16 %v251
    %v291 = vunpack.c.l.b16 %v252
    %v292 = vunpack.c.l.b16 %v253
    %v293 = vunpack.c.l.b16 %v254
    %v294 = vunpack.c.l.b16 %v255
    %v295 = vunpack.c.l.b16 %v256
    %v296 = vunpack.c.l.b16 %v257
    %v297 = vunpack.c.l.b16 %v258
    %v298 = vunpack.c.l.b16 %v259
    %v299 = vunpack.c.l.b16 %v260
    %v300 = vunpack.c.l.b16 %v261
    %v301 = vunpack.c.l.b16 %v262
    %v302 = vunpack.c.l.b16 %v263
    %v303 = vpack.c.b16 %v288, %v287
    %v304 = vpack.c.b16 %v290, %v289
    %v305 = vpack.c.b16 %v292, %v291
    %v306 = vpack.c.b16 %v294, %v293
    %v307 = vpack.c.b16 %v296, %v295
    %v308 = vpack.c.b16 %v298, %v297
    %v309 = vpack.c.b16 %v300, %v299
    %v310 = vpack.c.b16 %v302, %v301
    %319 = vmatprep.subr.bf16.mxu0 0
    %320 = vmatpush1.bf16.msra.mxu0 %v310
    %321 = vmatprep.subr.bf16.mxu0 0
    %322 = vmatpush1.bf16.msra.mxu0 %v309
    %323 = vmatprep.subr.bf16.mxu0 0
    %324 = vmatpush1.bf16.msra.mxu0 %v308
    %325 = vmatprep.subr.bf16.mxu0 0
    %326 = vmatpush1.bf16.msra.mxu0 %v307
    %327 = vmatprep.subr.bf16.mxu0 0
    %328 = vmatpush1.bf16.msra.mxu0 %v306
    %329 = vmatprep.subr.bf16.mxu0 0
    %330 = vmatpush1.bf16.msra.mxu0 %v305
    %331 = vmatprep.subr.bf16.mxu0 0
    %332 = vmatpush1.bf16.msra.mxu0 %v304
    %333 = vmatprep.subr.bf16.mxu0 0
    %334 = vmatpush1.bf16.msra.mxu0 %v303
    %335 = vmatprep.subr.bf16.mxu0 0
    %336 = vmatpush2.bf16.msra.mxu0 0
    %337 = vmatprep.subr.bf16.mxu0 0
    %338 = vmatpush2.bf16.msra.mxu0 0
    %339 = vmatprep.subr.bf16.mxu0 0
    %340 = vmatpush2.bf16.msra.mxu0 0
    %341 = vmatprep.subr.bf16.mxu0 0
    %342 = vmatpush2.bf16.msra.mxu0 0
    %343 = vmatprep.subr.bf16.mxu0 0
    %344 = vmatpush2.bf16.msra.mxu0 0
    %345 = vmatprep.subr.bf16.mxu0 0
    %346 = vmatpush2.bf16.msra.mxu0 0
    %347 = vmatprep.subr.bf16.mxu0 0
    %348 = vmatpush2.bf16.msra.mxu0 0
    %349 = vmatprep.subr.bf16.mxu0 0
    %350 = vmatpush2.bf16.msra.mxu0 0
    %351 = vmatprep.mubr.bf16.mxu0 0
    %352 = vmatmul.mubr.bf16.gmra.mxu0 %v247
    %v353 = vpop.f32.mrf.mxu0
    %v354 = vadd.f32 %v269, %v353
    %v355 = vpop.f32.mrf.mxu0
    %v356 = vpop.f32.mrf.mxu0
    %v357 = vpop.f32.mrf.mxu0
    %358 = vdwg.mxu0
    %v359 = vlaneseq
    %v360 = vand.u32 %v359, 127
    %vm361 = vcmp.lt.s32.totalorder %v360, 10
    %v362 = vsel %vm361, %v354, -1e+30
    %363 = vmax.xlane.f32.xlu0 %v362
    %v364 = vpop.xlane.xlu0 %363
    %v365 = vsub.f32 %v362, %v364
    %v366 = vmul.f32 %v365, 1.442695
    %v367 = vpow.pop %v366
    %368 = vadd.xlane.f32.xlu0 %v367
    %v369 = vpop.xlane.xlu0 %368
    %v370 = vlog2.pop %v369
    %v371 = vmul.f32 %v370, 0.6931472
    %v372 = vadd.f32 %v371, %v364
    %v373 = vsub.f32 %v362, %v372
    %374 = vst [vmem:[%s7] sm:$0xff] %v373
  $region37: #{spline_cnn_forward.9} parent=0 // pred_fallthru
    _
  // Predicated region
  $region38: #{spline_cnn_forward.9} parent=0 // pred_check
    _
  $region39: #{spline_cnn_forward.9} parent=0 // pred_check_branch
    %376 = sbr.rel (0) target = $region41
  $region40: #{spline_cnn_forward.9} parent=0 // pred_region
    _
  $region41: #{spline_cnn_forward.9} parent=0 // pred_fallthru
    _
  // Predicated region
  $region42: #{spline_cnn_forward.9} parent=0 // pred_check
    _
  $region43: #{spline_cnn_forward.9} parent=0 // pred_check_branch
    %378 = sbr.rel (0) target = $region45
  $region44: #{spline_cnn_forward.9} parent=0 // pred_region
    _
  $region45: #{spline_cnn_forward.9} parent=0 // pred_fallthru
    _

// kernel: spline_cnn_forward.7
$region0: #{spline_cnn_forward.7}
  #allocation0 [shape = 'u32[]', space=smem, size = 0x4, offset = 0x4, fixed_abs, tag = 'smem constant byte address 0x4 - core index']
  #allocation1 [shape = 'u32[144,128]{1,0:T(1,128)}', space=vmem, size = 0x12000, scoped, tag = 'internal scratch']
  %s0 = inlined_call_operand.vmem [shape: bf16[128,128], index: 0, kind: input, shape index: {}]
  %s1 = inlined_call_operand.vmem [shape: bf16[128,32], index: 1, kind: input, shape index: {}]
  %s2 = inlined_call_operand.vmem [shape: bf16[32,3200], index: 2, kind: input, shape index: {}]
  %s3 = inlined_call_operand.vmem [shape: bf16[128,64], index: 3, kind: output, shape index: {}]
  %s4 = sld [smem:[#allocation0]]
  $region22: #{spline_cnn_forward.7} parent=0
    _
  %s6 = ssub.s32 1, %s4
  %s7 = scalar_select 0, %s6, %s4
  // Predicated region
  $region2: #{spline_cnn_forward.7} parent=0 // pred_check
    _
  $region3: #{spline_cnn_forward.7} parent=0 // pred_check_branch
    %9 = sbr.rel (0) target = $region5
  $region4: #{spline_cnn_forward.7} parent=0 // pred_region
    _
  $region5: #{spline_cnn_forward.7} parent=0 // pred_fallthru
    _
  // Predicated region
  $region6: #{spline_cnn_forward.7} parent=0 // pred_check
    _
  $region7: #{spline_cnn_forward.7} parent=0 // pred_check_branch
    %11 = sbr.rel (0) target = $region9
  $region8: #{spline_cnn_forward.7} parent=0 // pred_region
    _
  $region9: #{spline_cnn_forward.7} parent=0 // pred_fallthru
    _
  // Predicated region
  $region10: #{spline_cnn_forward.7} parent=0 // pred_check
    _
  $region11: #{spline_cnn_forward.7} parent=0 // pred_check_branch
    %13 = sbr.rel (0) target = $region13
  $region12: #{spline_cnn_forward.7} parent=0 // pred_region
    _
  $region13: #{spline_cnn_forward.7} parent=0 // pred_fallthru
    _
  %v15 = vld [vmem:[%s1] sm:$0xf]
  %v16 = vld [vmem:[%s1 + $0x4] sm:$0xf]
  %v17 = vld [vmem:[%s1 + $0x8] sm:$0xf]
  %v18 = vld [vmem:[%s1 + $0xc] sm:$0xf]
  %v19 = vld [vmem:[%s1 + $0x10] sm:$0xf]
  %v20 = vld [vmem:[%s1 + $0x14] sm:$0xf]
  %v21 = vld [vmem:[%s1 + $0x18] sm:$0xf]
  %v22 = vld [vmem:[%s1 + $0x1c] sm:$0xf]
  %v23 = vld [vmem:[%s1 + $0x20] sm:$0xf]
  %v24 = vld [vmem:[%s1 + $0x24] sm:$0xf]
  %v25 = vld [vmem:[%s1 + $0x28] sm:$0xf]
  %v26 = vld [vmem:[%s1 + $0x2c] sm:$0xf]
  %v27 = vld [vmem:[%s1 + $0x30] sm:$0xf]
  %v28 = vld [vmem:[%s1 + $0x34] sm:$0xf]
  %v29 = vld [vmem:[%s1 + $0x38] sm:$0xf]
  %v30 = vld [vmem:[%s1 + $0x3c] sm:$0xf]
  %v31 = vld [vmem:[%s2] sm:$0xff]
  %v32 = vld [vmem:[%s2 + $0x8] sm:$0xff]
  %v33 = vld [vmem:[%s2 + $0x10] sm:$0xff]
  %v34 = vld [vmem:[%s2 + $0x18] sm:$0xff]
  %v35 = vld [vmem:[%s2 + $0x20] sm:$0xff]
  %v36 = vld [vmem:[%s2 + $0x28] sm:$0xff]
  %v37 = vld [vmem:[%s2 + $0x30] sm:$0xff]
  %v38 = vld [vmem:[%s2 + $0x38] sm:$0xff]
  %v39 = vld [vmem:[%s2 + $0x40] sm:$0xff]
  %v40 = vld [vmem:[%s2 + $0x48] sm:$0xff]
  %v41 = vld [vmem:[%s2 + $0x50] sm:$0xff]
  %v42 = vld [vmem:[%s2 + $0x58] sm:$0xff]
  %v43 = vld [vmem:[%s2 + $0x60] sm:$0xf]
  %v44 = vld [vmem:[%s2 + $0x64] sm:$0xff]
  %v45 = vld [vmem:[%s2 + $0x6c] sm:$0xff]
  %v46 = vld [vmem:[%s2 + $0x74] sm:$0xff]
  %v47 = vld [vmem:[%s2 + $0x7c] sm:$0xff]
  %v48 = vld [vmem:[%s2 + $0x84] sm:$0xff]
  %v49 = vld [vmem:[%s2 + $0x8c] sm:$0xff]
  %v50 = vld [vmem:[%s2 + $0x94] sm:$0xff]
  %v51 = vld [vmem:[%s2 + $0x9c] sm:$0xff]
  %v52 = vld [vmem:[%s2 + $0xa4] sm:$0xff]
  %v53 = vld [vmem:[%s2 + $0xac] sm:$0xff]
  %v54 = vld [vmem:[%s2 + $0xb4] sm:$0xff]
  %v55 = vld [vmem:[%s2 + $0xbc] sm:$0xff]
  %v56 = vld [vmem:[%s2 + $0xc4] sm:$0xf]
  %v57 = vld [vmem:[%s2 + $0xc8] sm:$0xff]
  %v58 = vld [vmem:[%s2 + $0xd0] sm:$0xff]
  %v59 = vld [vmem:[%s2 + $0xd8] sm:$0xff]
  %v60 = vld [vmem:[%s2 + $0xe0] sm:$0xff]
  %v61 = vld [vmem:[%s2 + $0xe8] sm:$0xff]
  %v62 = vld [vmem:[%s2 + $0xf0] sm:$0xff]
  %v63 = vld [vmem:[%s2 + $0xf8] sm:$0xff]
  %v64 = vld [vmem:[%s2 + $0x100] sm:$0xff]
  %v65 = vld [vmem:[%s2 + $0x108] sm:$0xff]
  %v66 = vld [vmem:[%s2 + $0x110] sm:$0xff]
  %v67 = vld [vmem:[%s2 + $0x118] sm:$0xff]
  %v68 = vld [vmem:[%s2 + $0x120] sm:$0xff]
  %v69 = vld [vmem:[%s2 + $0x128] sm:$0xf]
  %v70 = vld [vmem:[%s2 + $0x12c] sm:$0xff]
  %v71 = vld [vmem:[%s2 + $0x134] sm:$0xff]
  %v72 = vld [vmem:[%s2 + $0x13c] sm:$0xff]
  %v73 = vld [vmem:[%s2 + $0x144] sm:$0xff]
  %v74 = vld [vmem:[%s2 + $0x14c] sm:$0xff]
  %v75 = vld [vmem:[%s2 + $0x154] sm:$0xff]
  %v76 = vld [vmem:[%s2 + $0x15c] sm:$0xff]
  %v77 = vld [vmem:[%s2 + $0x164] sm:$0xff]
  %v78 = vld [vmem:[%s2 + $0x16c] sm:$0xff]
  %v79 = vld [vmem:[%s2 + $0x174] sm:$0xff]
  %v80 = vld [vmem:[%s2 + $0x17c] sm:$0xff]
  %v81 = vld [vmem:[%s2 + $0x184] sm:$0xff]
  %v82 = vld [vmem:[%s2 + $0x18c] sm:$0xf]
  %v99 = vunpack.c.l.b16 %v15
  %v100 = vunpack.c.l.b16 %v16
  %v101 = vunpack.c.l.b16 %v17
  %v102 = vunpack.c.l.b16 %v18
  %v103 = vunpack.c.l.b16 %v19
  %v104 = vunpack.c.l.b16 %v20
  %v105 = vunpack.c.l.b16 %v21
  %v106 = vunpack.c.l.b16 %v22
  %v107 = vunpack.c.l.b16 %v23
  %v108 = vunpack.c.l.b16 %v24
  %v109 = vunpack.c.l.b16 %v25
  %v110 = vunpack.c.l.b16 %v26
  %v111 = vunpack.c.l.b16 %v27
  %v112 = vunpack.c.l.b16 %v28
  %v113 = vunpack.c.l.b16 %v29
  %v114 = vunpack.c.l.b16 %v30
  %v115 = vpack.c.b16 %v100, %v99
  %v116 = vpack.c.b16 %v102, %v101
  %v117 = vpack.c.b16 %v104, %v103
  %v118 = vpack.c.b16 %v106, %v105
  %v119 = vpack.c.b16 %v108, %v107
  %v120 = vpack.c.b16 %v110, %v109
  %v121 = vpack.c.b16 %v112, %v111
  %v122 = vpack.c.b16 %v114, %v113
  %v175 = vunpack.c.l.b16 %v31
  %v176 = vunpack.c.h.b16 %v31
  %v177 = vunpack.c.l.b16 %v32
  %v178 = vunpack.c.h.b16 %v32
  %v179 = vunpack.c.l.b16 %v33
  %v180 = vunpack.c.h.b16 %v33
  %v181 = vunpack.c.l.b16 %v34
  %v182 = vunpack.c.h.b16 %v34
  %v183 = vunpack.c.l.b16 %v35
  %v184 = vunpack.c.h.b16 %v35
  %v185 = vunpack.c.l.b16 %v36
  %v186 = vunpack.c.h.b16 %v36
  %v187 = vunpack.c.l.b16 %v37
  %v188 = vunpack.c.h.b16 %v37
  %v189 = vunpack.c.l.b16 %v38
  %v190 = vunpack.c.h.b16 %v38
  %v191 = vunpack.c.l.b16 %v39
  %v192 = vunpack.c.h.b16 %v39
  %v193 = vunpack.c.l.b16 %v40
  %v194 = vunpack.c.h.b16 %v40
  %v195 = vunpack.c.l.b16 %v41
  %v196 = vunpack.c.h.b16 %v41
  %v197 = vunpack.c.l.b16 %v42
  %v198 = vunpack.c.h.b16 %v42
  %v199 = vunpack.c.l.b16 %v43
  %v200 = vunpack.c.l.b16 %v44
  %v201 = vunpack.c.h.b16 %v44
  %v202 = vunpack.c.l.b16 %v45
  %v203 = vunpack.c.h.b16 %v45
  %v204 = vunpack.c.l.b16 %v46
  %v205 = vunpack.c.h.b16 %v46
  %v206 = vunpack.c.l.b16 %v47
  %v207 = vunpack.c.h.b16 %v47
  %v208 = vunpack.c.l.b16 %v48
  %v209 = vunpack.c.h.b16 %v48
  %v210 = vunpack.c.l.b16 %v49
  %v211 = vunpack.c.h.b16 %v49
  %v212 = vunpack.c.l.b16 %v50
  %v213 = vunpack.c.h.b16 %v50
  %v214 = vunpack.c.l.b16 %v51
  %v215 = vunpack.c.h.b16 %v51
  %v216 = vunpack.c.l.b16 %v52
  %v217 = vunpack.c.h.b16 %v52
  %v218 = vunpack.c.l.b16 %v53
  %v219 = vunpack.c.h.b16 %v53
  %v220 = vunpack.c.l.b16 %v54
  %v221 = vunpack.c.h.b16 %v54
  %v222 = vunpack.c.l.b16 %v55
  %v223 = vunpack.c.h.b16 %v55
  %v224 = vunpack.c.l.b16 %v56
  %v225 = vunpack.c.l.b16 %v57
  %v226 = vunpack.c.h.b16 %v57
  %v227 = vunpack.c.l.b16 %v58
  %v228 = vunpack.c.h.b16 %v58
  %v229 = vunpack.c.l.b16 %v59
  %v230 = vunpack.c.h.b16 %v59
  %v231 = vunpack.c.l.b16 %v60
  %v232 = vunpack.c.h.b16 %v60
  %v233 = vunpack.c.l.b16 %v61
  %v234 = vunpack.c.h.b16 %v61
  %v235 = vunpack.c.l.b16 %v62
  %v236 = vunpack.c.h.b16 %v62
  %v237 = vunpack.c.l.b16 %v63
  %v238 = vunpack.c.h.b16 %v63
  %v239 = vunpack.c.l.b16 %v64
  %v240 = vunpack.c.h.b16 %v64
  %v241 = vunpack.c.l.b16 %v65
  %v242 = vunpack.c.h.b16 %v65
  %v243 = vunpack.c.l.b16 %v66
  %v244 = vunpack.c.h.b16 %v66
  %v245 = vunpack.c.l.b16 %v67
  %v246 = vunpack.c.h.b16 %v67
  %v247 = vunpack.c.l.b16 %v68
  %v248 = vunpack.c.h.b16 %v68
  %v249 = vunpack.c.l.b16 %v69
  %v250 = vunpack.c.l.b16 %v70
  %v251 = vunpack.c.h.b16 %v70
  %v252 = vunpack.c.l.b16 %v71
  %v253 = vunpack.c.h.b16 %v71
  %v254 = vunpack.c.l.b16 %v72
  %v255 = vunpack.c.h.b16 %v72
  %v256 = vunpack.c.l.b16 %v73
  %v257 = vunpack.c.h.b16 %v73
  %v258 = vunpack.c.l.b16 %v74
  %v259 = vunpack.c.h.b16 %v74
  %v260 = vunpack.c.l.b16 %v75
  %v261 = vunpack.c.h.b16 %v75
  %v262 = vunpack.c.l.b16 %v76
  %v263 = vunpack.c.h.b16 %v76
  %v264 = vunpack.c.l.b16 %v77
  %v265 = vunpack.c.h.b16 %v77
  %v266 = vunpack.c.l.b16 %v78
  %v267 = vunpack.c.h.b16 %v78
  %v268 = vunpack.c.l.b16 %v79
  %v269 = vunpack.c.h.b16 %v79
  %v270 = vunpack.c.l.b16 %v80
  %v271 = vunpack.c.h.b16 %v80
  %v272 = vunpack.c.l.b16 %v81
  %v273 = vunpack.c.h.b16 %v81
  %v274 = vunpack.c.l.b16 %v82
  %v275 = vpack.c.b16 %v200, %v175
  %v276 = vpack.c.b16 %v201, %v176
  %v277 = vpack.c.b16 %v202, %v177
  %v278 = vpack.c.b16 %v203, %v178
  %v279 = vpack.c.b16 %v204, %v179
  %v280 = vpack.c.b16 %v205, %v180
  %v281 = vpack.c.b16 %v206, %v181
  %v282 = vpack.c.b16 %v207, %v182
  %v283 = vpack.c.b16 %v208, %v183
  %v284 = vpack.c.b16 %v209, %v184
  %v285 = vpack.c.b16 %v210, %v185
  %v286 = vpack.c.b16 %v211, %v186
  %v287 = vpack.c.b16 %v212, %v187
  %v288 = vpack.c.b16 %v213, %v188
  %v289 = vpack.c.b16 %v214, %v189
  %v290 = vpack.c.b16 %v215, %v190
  %v291 = vpack.c.b16 %v216, %v191
  %v292 = vpack.c.b16 %v217, %v192
  %v293 = vpack.c.b16 %v218, %v193
  %v294 = vpack.c.b16 %v219, %v194
  %v295 = vpack.c.b16 %v220, %v195
  %v296 = vpack.c.b16 %v221, %v196
  %v297 = vpack.c.b16 %v222, %v197
  %v298 = vpack.c.b16 %v223, %v198
  %v299 = vpack.c.b16 %v224, %v199
  %v300 = vpack.c.b16 %v250, %v225
  %v301 = vpack.c.b16 %v251, %v226
  %v302 = vpack.c.b16 %v252, %v227
  %v303 = vpack.c.b16 %v253, %v228
  %v304 = vpack.c.b16 %v254, %v229
  %v305 = vpack.c.b16 %v255, %v230
  %v306 = vpack.c.b16 %v256, %v231
  %v307 = vpack.c.b16 %v257, %v232
  %v308 = vpack.c.b16 %v258, %v233
  %v309 = vpack.c.b16 %v259, %v234
  %v310 = vpack.c.b16 %v260, %v235
  %v311 = vpack.c.b16 %v261, %v236
  %v312 = vpack.c.b16 %v262, %v237
  %v313 = vpack.c.b16 %v263, %v238
  %v314 = vpack.c.b16 %v264, %v239
  %v315 = vpack.c.b16 %v265, %v240
  %v316 = vpack.c.b16 %v266, %v241
  %v317 = vpack.c.b16 %v267, %v242
  %v318 = vpack.c.b16 %v268, %v243
  %v319 = vpack.c.b16 %v269, %v244
  %v320 = vpack.c.b16 %v270, %v245
  %v321 = vpack.c.b16 %v271, %v246
  %v322 = vpack.c.b16 %v272, %v247
  %v323 = vpack.c.b16 %v273, %v248
  %v324 = vpack.c.b16 %v274, %v249
  %vm375 = vcmask 261120
  %v377 = vsel %vm375, %v115, 0
  %v380 = vsel %vm375, %v116, 0
  %v383 = vsel %vm375, %v117, 0
  %v386 = vsel %vm375, %v118, 0
  %v389 = vsel %vm375, %v119, 0
  %v392 = vsel %vm375, %v120, 0
  %v395 = vsel %vm375, %v121, 0
  %v398 = vsel %vm375, %v122, 0
  %400 = vmatprep.subr.bf16.mxu0 0
  %401 = vmatpush1.bf16.msra.mxu0 0
  %402 = vmatprep.subr.bf16.mxu0 0
  %403 = vmatpush1.bf16.msra.mxu0 0
  %404 = vmatprep.subr.bf16.mxu0 0
  %405 = vmatpush1.bf16.msra.mxu0 0
  %406 = vmatprep.subr.bf16.mxu0 0
  %407 = vmatpush1.bf16.msra.mxu0 0
  %408 = vmatprep.subr.bf16.mxu0 0
  %409 = vmatpush1.bf16.msra.mxu0 0
  %410 = vmatprep.subr.bf16.mxu0 0
  %411 = vmatpush1.bf16.msra.mxu0 0
  %412 = vmatprep.subr.bf16.mxu0 %v301
  %413 = vmatpush1.bf16.msra.mxu0 %v300
  %414 = vmatprep.subr.bf16.mxu0 %v276
  %415 = vmatpush1.bf16.msra.mxu0 %v275
  %416 = vmatprep.subr.bf16.mxu0 0
  %417 = vmatpush2.bf16.msra.mxu0 0
  %418 = vmatprep.subr.bf16.mxu0 0
  %419 = vmatpush2.bf16.msra.mxu0 0
  %420 = vmatprep.subr.bf16.mxu0 0
  %421 = vmatpush2.bf16.msra.mxu0 0
  %422 = vmatprep.subr.bf16.mxu0 0
  %423 = vmatpush2.bf16.msra.mxu0 0
  %424 = vmatprep.subr.bf16.mxu0 0
  %425 = vmatpush2.bf16.msra.mxu0 0
  %426 = vmatprep.subr.bf16.mxu0 0
  %427 = vmatpush2.bf16.msra.mxu0 0
  %428 = vmatprep.subr.bf16.mxu0 0
  %429 = vmatpush2.bf16.msra.mxu0 0
  %430 = vmatprep.subr.bf16.mxu0 0
  %431 = vmatpush2.bf16.msra.mxu0 0
  %432 = vmatprep.mubr.bf16.mxu0 0
  %433 = vmatmul.mubr.bf16.gmra.mxu0 %v377
  %v434 = vpop.f32.mrf.mxu0
  %v435 = vadd.f32 0.0, %v434
  %v436 = vpop.f32.mrf.mxu0
  %v437 = vadd.f32 0.0, %v436
  %v438 = vpop.f32.mrf.mxu0
  %v439 = vadd.f32 0.0, %v438
  %v440 = vpop.f32.mrf.mxu0
  %v441 = vadd.f32 0.0, %v440
  %442 = vmatprep.mubr.bf16.mxu0 0
  %443 = vmatmul.mubr.bf16.gmra.mxu0 %v380
  %v444 = vpop.f32.mrf.mxu0
  %v445 = vadd.f32 0.0, %v444
  %v446 = vpop.f32.mrf.mxu0
  %v447 = vadd.f32 0.0, %v446
  %v448 = vpop.f32.mrf.mxu0
  %v449 = vadd.f32 0.0, %v448
  %v450 = vpop.f32.mrf.mxu0
  %v451 = vadd.f32 0.0, %v450
  %452 = vmatprep.mubr.bf16.mxu0 0
  %453 = vmatmul.mubr.bf16.gmra.mxu0 %v383
  %v454 = vpop.f32.mrf.mxu0
  %v455 = vadd.f32 0.0, %v454
  %v456 = vpop.f32.mrf.mxu0
  %v457 = vadd.f32 0.0, %v456
  %v458 = vpop.f32.mrf.mxu0
  %v459 = vadd.f32 0.0, %v458
  %v460 = vpop.f32.mrf.mxu0
  %v461 = vadd.f32 0.0, %v460
  %462 = vmatprep.mubr.bf16.mxu0 0
  %463 = vmatmul.mubr.bf16.gmra.mxu0 %v386
  %v464 = vpop.f32.mrf.mxu0
  %v465 = vadd.f32 0.0, %v464
  %v466 = vpop.f32.mrf.mxu0
  %v467 = vadd.f32 0.0, %v466
  %v468 = vpop.f32.mrf.mxu0
  %v469 = vadd.f32 0.0, %v468
  %v470 = vpop.f32.mrf.mxu0
  %v471 = vadd.f32 0.0, %v470
  %472 = vmatprep.mubr.bf16.mxu0 0
  %473 = vmatmul.mubr.bf16.gmra.mxu0 %v389
  %v474 = vpop.f32.mrf.mxu0
  %v475 = vadd.f32 0.0, %v474
  %v476 = vpop.f32.mrf.mxu0
  %v477 = vadd.f32 0.0, %v476
  %v478 = vpop.f32.mrf.mxu0
  %v479 = vadd.f32 0.0, %v478
  %v480 = vpop.f32.mrf.mxu0
  %v481 = vadd.f32 0.0, %v480
  %482 = vmatprep.mubr.bf16.mxu0 0
  %483 = vmatmul.mubr.bf16.gmra.mxu0 %v392
  %v484 = vpop.f32.mrf.mxu0
  %v485 = vadd.f32 0.0, %v484
  %v486 = vpop.f32.mrf.mxu0
  %v487 = vadd.f32 0.0, %v486
  %v488 = vpop.f32.mrf.mxu0
  %v489 = vadd.f32 0.0, %v488
  %v490 = vpop.f32.mrf.mxu0
  %v491 = vadd.f32 0.0, %v490
  %492 = vmatprep.mubr.bf16.mxu0 0
  %493 = vmatmul.mubr.bf16.gmra.mxu0 %v395
  %v494 = vpop.f32.mrf.mxu0
  %v495 = vadd.f32 0.0, %v494
  %v496 = vpop.f32.mrf.mxu0
  %v497 = vadd.f32 0.0, %v496
  %v498 = vpop.f32.mrf.mxu0
  %v499 = vadd.f32 0.0, %v498
  %v500 = vpop.f32.mrf.mxu0
  %v501 = vadd.f32 0.0, %v500
  %502 = vmatprep.mubr.bf16.mxu0 0
  %503 = vmatmul.mubr.bf16.gmra.mxu0 %v398
  %v504 = vpop.f32.mrf.mxu0
  %v505 = vadd.f32 0.0, %v504
  %v506 = vpop.f32.mrf.mxu0
  %v507 = vadd.f32 0.0, %v506
  %v508 = vpop.f32.mrf.mxu0
  %v509 = vadd.f32 0.0, %v508
  %v510 = vpop.f32.mrf.mxu0
  %v511 = vadd.f32 0.0, %v510
  %512 = vdwg.mxu0
  %513 = vmatprep.subr.bf16.mxu0 0
  %514 = vmatpush1.bf16.msra.mxu0 0
  %515 = vmatprep.subr.bf16.mxu0 0
  %516 = vmatpush1.bf16.msra.mxu0 0
  %517 = vmatprep.subr.bf16.mxu0 0
  %518 = vmatpush1.bf16.msra.mxu0 0
  %519 = vmatprep.subr.bf16.mxu0 0
  %520 = vmatpush1.bf16.msra.mxu0 0
  %521 = vmatprep.subr.bf16.mxu0 0
  %522 = vmatpush1.bf16.msra.mxu0 0
  %523 = vmatprep.subr.bf16.mxu0 0
  %524 = vmatpush1.bf16.msra.mxu0 0
  %525 = vmatprep.subr.bf16.mxu0 %v303
  %526 = vmatpush1.bf16.msra.mxu0 %v302
  %527 = vmatprep.subr.bf16.mxu0 %v278
  %528 = vmatpush1.bf16.msra.mxu0 %v277
  %529 = vmatprep.subr.bf16.mxu0 0
  %530 = vmatpush2.bf16.msra.mxu0 0
  %531 = vmatprep.subr.bf16.mxu0 0
  %532 = vmatpush2.bf16.msra.mxu0 0
  %533 = vmatprep.subr.bf16.mxu0 0
  %534 = vmatpush2.bf16.msra.mxu0 0
  %535 = vmatprep.subr.bf16.mxu0 0
  %536 = vmatpush2.bf16.msra.mxu0 0
  %537 = vmatprep.subr.bf16.mxu0 0
  %538 = vmatpush2.bf16.msra.mxu0 0
  %539 = vmatprep.subr.bf16.mxu0 0
  %540 = vmatpush2.bf16.msra.mxu0 0
  %541 = vmatprep.subr.bf16.mxu0 0
  %542 = vmatpush2.bf16.msra.mxu0 0
  %543 = vmatprep.subr.bf16.mxu0 0
  %544 = vmatpush2.bf16.msra.mxu0 0
  %545 = vmatprep.mubr.bf16.mxu0 0
  %546 = vmatmul.mubr.bf16.gmra.mxu0 %v377
  %v547 = vpop.f32.mrf.mxu0
  %v548 = vadd.f32 0.0, %v547
  %v549 = vpop.f32.mrf.mxu0
  %v550 = vadd.f32 0.0, %v549
  %v551 = vpop.f32.mrf.mxu0
  %v552 = vadd.f32 0.0, %v551
  %v553 = vpop.f32.mrf.mxu0
  %v554 = vadd.f32 0.0, %v553
  %555 = vmatprep.mubr.bf16.mxu0 0
  %556 = vmatmul.mubr.bf16.gmra.mxu0 %v380
  %v557 = vpop.f32.mrf.mxu0
  %v558 = vadd.f32 0.0, %v557
  %v559 = vpop.f32.mrf.mxu0
  %v560 = vadd.f32 0.0, %v559
  %v561 = vpop.f32.mrf.mxu0
  %v562 = vadd.f32 0.0, %v561
  %v563 = vpop.f32.mrf.mxu0
  %v564 = vadd.f32 0.0, %v563
  %565 = vmatprep.mubr.bf16.mxu0 0
  %566 = vmatmul.mubr.bf16.gmra.mxu0 %v383
  %v567 = vpop.f32.mrf.mxu0
  %v568 = vadd.f32 0.0, %v567
  %v569 = vpop.f32.mrf.mxu0
  %v570 = vadd.f32 0.0, %v569
  %v571 = vpop.f32.mrf.mxu0
  %v572 = vadd.f32 0.0, %v571
  %v573 = vpop.f32.mrf.mxu0
  %v574 = vadd.f32 0.0, %v573
  %575 = vmatprep.mubr.bf16.mxu0 0
  %576 = vmatmul.mubr.bf16.gmra.mxu0 %v386
  %v577 = vpop.f32.mrf.mxu0
  %v578 = vadd.f32 0.0, %v577
  %v579 = vpop.f32.mrf.mxu0
  %v580 = vadd.f32 0.0, %v579
  %v581 = vpop.f32.mrf.mxu0
  %v582 = vadd.f32 0.0, %v581
  %v583 = vpop.f32.mrf.mxu0
  %v584 = vadd.f32 0.0, %v583
  %585 = vmatprep.mubr.bf16.mxu0 0
  %586 = vmatmul.mubr.bf16.gmra.mxu0 %v389
  %v587 = vpop.f32.mrf.mxu0
  %v588 = vadd.f32 0.0, %v587
  %v589 = vpop.f32.mrf.mxu0
  %v590 = vadd.f32 0.0, %v589
  %v591 = vpop.f32.mrf.mxu0
  %v592 = vadd.f32 0.0, %v591
  %v593 = vpop.f32.mrf.mxu0
  %v594 = vadd.f32 0.0, %v593
  %595 = vmatprep.mubr.bf16.mxu0 0
  %596 = vmatmul.mubr.bf16.gmra.mxu0 %v392
  %v597 = vpop.f32.mrf.mxu0
  %v598 = vadd.f32 0.0, %v597
  %v599 = vpop.f32.mrf.mxu0
  %v600 = vadd.f32 0.0, %v599
  %v601 = vpop.f32.mrf.mxu0
  %v602 = vadd.f32 0.0, %v601
  %v603 = vpop.f32.mrf.mxu0
  %v604 = vadd.f32 0.0, %v603
  %605 = vmatprep.mubr.bf16.mxu0 0
  %606 = vmatmul.mubr.bf16.gmra.mxu0 %v395
  %v607 = vpop.f32.mrf.mxu0
  %v608 = vadd.f32 0.0, %v607
  %v609 = vpop.f32.mrf.mxu0
  %v610 = vadd.f32 0.0, %v609
  %v611 = vpop.f32.mrf.mxu0
  %v612 = vadd.f32 0.0, %v611
  %v613 = vpop.f32.mrf.mxu0
  %v614 = vadd.f32 0.0, %v613
  %615 = vmatprep.mubr.bf16.mxu0 0
  %616 = vmatmul.mubr.bf16.gmra.mxu0 %v398
  %v617 = vpop.f32.mrf.mxu0
  %v618 = vadd.f32 0.0, %v617
  %v619 = vpop.f32.mrf.mxu0
  %v620 = vadd.f32 0.0, %v619
  %v621 = vpop.f32.mrf.mxu0
  %v622 = vadd.f32 0.0, %v621
  %v623 = vpop.f32.mrf.mxu0
  %v624 = vadd.f32 0.0, %v623
  %625 = vdwg.mxu0
  %626 = vmatprep.subr.bf16.mxu0 0
  %627 = vmatpush1.bf16.msra.mxu0 0
  %628 = vmatprep.subr.bf16.mxu0 0
  %629 = vmatpush1.bf16.msra.mxu0 0
  %630 = vmatprep.subr.bf16.mxu0 0
  %631 = vmatpush1.bf16.msra.mxu0 0
  %632 = vmatprep.subr.bf16.mxu0 0
  %633 = vmatpush1.bf16.msra.mxu0 0
  %634 = vmatprep.subr.bf16.mxu0 0
  %635 = vmatpush1.bf16.msra.mxu0 0
  %636 = vmatprep.subr.bf16.mxu0 0
  %637 = vmatpush1.bf16.msra.mxu0 0
  %638 = vmatprep.subr.bf16.mxu0 %v305
  %639 = vmatpush1.bf16.msra.mxu0 %v304
  %640 = vmatprep.subr.bf16.mxu0 %v280
  %641 = vmatpush1.bf16.msra.mxu0 %v279
  %642 = vmatprep.subr.bf16.mxu0 0
  %643 = vmatpush2.bf16.msra.mxu0 0
  %644 = vmatprep.subr.bf16.mxu0 0
  %645 = vmatpush2.bf16.msra.mxu0 0
  %646 = vmatprep.subr.bf16.mxu0 0
  %647 = vmatpush2.bf16.msra.mxu0 0
  %648 = vmatprep.subr.bf16.mxu0 0
  %649 = vmatpush2.bf16.msra.mxu0 0
  %650 = vmatprep.subr.bf16.mxu0 0
  %651 = vmatpush2.bf16.msra.mxu0 0
  %652 = vmatprep.subr.bf16.mxu0 0
  %653 = vmatpush2.bf16.msra.mxu0 0
  %654 = vmatprep.subr.bf16.mxu0 0
  %655 = vmatpush2.bf16.msra.mxu0 0
  %656 = vmatprep.subr.bf16.mxu0 0
  %657 = vmatpush2.bf16.msra.mxu0 0
  %658 = vmatprep.mubr.bf16.mxu0 0
  %659 = vmatmul.mubr.bf16.gmra.mxu0 %v377
  %v660 = vpop.f32.mrf.mxu0
  %v661 = vadd.f32 0.0, %v660
  %v662 = vpop.f32.mrf.mxu0
  %v663 = vadd.f32 0.0, %v662
  %v664 = vpop.f32.mrf.mxu0
  %v665 = vadd.f32 0.0, %v664
  %v666 = vpop.f32.mrf.mxu0
  %v667 = vadd.f32 0.0, %v666
  %668 = vmatprep.mubr.bf16.mxu0 0
  %669 = vmatmul.mubr.bf16.gmra.mxu0 %v380
  %v670 = vpop.f32.mrf.mxu0
  %v671 = vadd.f32 0.0, %v670
  %v672 = vpop.f32.mrf.mxu0
  %v673 = vadd.f32 0.0, %v672
  %v674 = vpop.f32.mrf.mxu0
  %v675 = vadd.f32 0.0, %v674
  %v676 = vpop.f32.mrf.mxu0
  %v677 = vadd.f32 0.0, %v676
  %678 = vmatprep.mubr.bf16.mxu0 0
  %679 = vmatmul.mubr.bf16.gmra.mxu0 %v383
  %v680 = vpop.f32.mrf.mxu0
  %v681 = vadd.f32 0.0, %v680
  %v682 = vpop.f32.mrf.mxu0
  %v683 = vadd.f32 0.0, %v682
  %v684 = vpop.f32.mrf.mxu0
  %v685 = vadd.f32 0.0, %v684
  %v686 = vpop.f32.mrf.mxu0
  %v687 = vadd.f32 0.0, %v686
  %688 = vmatprep.mubr.bf16.mxu0 0
  %689 = vmatmul.mubr.bf16.gmra.mxu0 %v386
  %v690 = vpop.f32.mrf.mxu0
  %v691 = vadd.f32 0.0, %v690
  %v692 = vpop.f32.mrf.mxu0
  %v693 = vadd.f32 0.0, %v692
  %v694 = vpop.f32.mrf.mxu0
  %v695 = vadd.f32 0.0, %v694
  %v696 = vpop.f32.mrf.mxu0
  %v697 = vadd.f32 0.0, %v696
  %698 = vmatprep.mubr.bf16.mxu0 0
  %699 = vmatmul.mubr.bf16.gmra.mxu0 %v389
  %v700 = vpop.f32.mrf.mxu0
  %v701 = vadd.f32 0.0, %v700
  %v702 = vpop.f32.mrf.mxu0
  %v703 = vadd.f32 0.0, %v702
  %v704 = vpop.f32.mrf.mxu0
  %v705 = vadd.f32 0.0, %v704
  %v706 = vpop.f32.mrf.mxu0
  %v707 = vadd.f32 0.0, %v706
  %708 = vmatprep.mubr.bf16.mxu0 0
  %709 = vmatmul.mubr.bf16.gmra.mxu0 %v392
  %v710 = vpop.f32.mrf.mxu0
  %v711 = vadd.f32 0.0, %v710
  %v712 = vpop.f32.mrf.mxu0
  %v713 = vadd.f32 0.0, %v712
  %v714 = vpop.f32.mrf.mxu0
  %v715 = vadd.f32 0.0, %v714
  %v716 = vpop.f32.mrf.mxu0
  %v717 = vadd.f32 0.0, %v716
  %718 = vmatprep.mubr.bf16.mxu0 0
  %719 = vmatmul.mubr.bf16.gmra.mxu0 %v395
  %v720 = vpop.f32.mrf.mxu0
  %v721 = vadd.f32 0.0, %v720
  %v722 = vpop.f32.mrf.mxu0
  %v723 = vadd.f32 0.0, %v722
  %v724 = vpop.f32.mrf.mxu0
  %v725 = vadd.f32 0.0, %v724
  %v726 = vpop.f32.mrf.mxu0
  %v727 = vadd.f32 0.0, %v726
  %728 = vmatprep.mubr.bf16.mxu0 0
  %729 = vmatmul.mubr.bf16.gmra.mxu0 %v398
  %v730 = vpop.f32.mrf.mxu0
  %v731 = vadd.f32 0.0, %v730
  %v732 = vpop.f32.mrf.mxu0
  %v733 = vadd.f32 0.0, %v732
  %v734 = vpop.f32.mrf.mxu0
  %v735 = vadd.f32 0.0, %v734
  %v736 = vpop.f32.mrf.mxu0
  %v737 = vadd.f32 0.0, %v736
  %738 = vdwg.mxu0
  %739 = vmatprep.subr.bf16.mxu0 0
  %740 = vmatpush1.bf16.msra.mxu0 0
  %741 = vmatprep.subr.bf16.mxu0 0
  %742 = vmatpush1.bf16.msra.mxu0 0
  %743 = vmatprep.subr.bf16.mxu0 0
  %744 = vmatpush1.bf16.msra.mxu0 0
  %745 = vmatprep.subr.bf16.mxu0 0
  %746 = vmatpush1.bf16.msra.mxu0 0
  %747 = vmatprep.subr.bf16.mxu0 0
  %748 = vmatpush1.bf16.msra.mxu0 0
  %749 = vmatprep.subr.bf16.mxu0 0
  %750 = vmatpush1.bf16.msra.mxu0 0
  %751 = vmatprep.subr.bf16.mxu0 %v307
  %752 = vmatpush1.bf16.msra.mxu0 %v306
  %753 = vmatprep.subr.bf16.mxu0 %v282
  %754 = vmatpush1.bf16.msra.mxu0 %v281
  %755 = vmatprep.subr.bf16.mxu0 0
  %756 = vmatpush2.bf16.msra.mxu0 0
  %757 = vmatprep.subr.bf16.mxu0 0
  %758 = vmatpush2.bf16.msra.mxu0 0
  %759 = vmatprep.subr.bf16.mxu0 0
  %760 = vmatpush2.bf16.msra.mxu0 0
  %761 = vmatprep.subr.bf16.mxu0 0
  %762 = vmatpush2.bf16.msra.mxu0 0
  %763 = vmatprep.subr.bf16.mxu0 0
  %764 = vmatpush2.bf16.msra.mxu0 0
  %765 = vmatprep.subr.bf16.mxu0 0
  %766 = vmatpush2.bf16.msra.mxu0 0
  %767 = vmatprep.subr.bf16.mxu0 0
  %768 = vmatpush2.bf16.msra.mxu0 0
  %769 = vmatprep.subr.bf16.mxu0 0
  %770 = vmatpush2.bf16.msra.mxu0 0
  %771 = vmatprep.mubr.bf16.mxu0 0
  %772 = vmatmul.mubr.bf16.gmra.mxu0 %v377
  %v773 = vpop.f32.mrf.mxu0
  %v774 = vadd.f32 0.0, %v773
  %v775 = vpop.f32.mrf.mxu0
  %v776 = vadd.f32 0.0, %v775
  %v777 = vpop.f32.mrf.mxu0
  %v778 = vadd.f32 0.0, %v777
  %v779 = vpop.f32.mrf.mxu0
  %v780 = vadd.f32 0.0, %v779
  %781 = vmatprep.mubr.bf16.mxu0 0
  %782 = vmatmul.mubr.bf16.gmra.mxu0 %v380
  %v783 = vpop.f32.mrf.mxu0
  %v784 = vadd.f32 0.0, %v783
  %v785 = vpop.f32.mrf.mxu0
  %v786 = vadd.f32 0.0, %v785
  %v787 = vpop.f32.mrf.mxu0
  %v788 = vadd.f32 0.0, %v787
  %v789 = vpop.f32.mrf.mxu0
  %v790 = vadd.f32 0.0, %v789
  %791 = vmatprep.mubr.bf16.mxu0 0
  %792 = vmatmul.mubr.bf16.gmra.mxu0 %v383
  %v793 = vpop.f32.mrf.mxu0
  %v794 = vadd.f32 0.0, %v793
  %v795 = vpop.f32.mrf.mxu0
  %v796 = vadd.f32 0.0, %v795
  %v797 = vpop.f32.mrf.mxu0
  %v798 = vadd.f32 0.0, %v797
  %v799 = vpop.f32.mrf.mxu0
  %v800 = vadd.f32 0.0, %v799
  %801 = vmatprep.mubr.bf16.mxu0 0
  %802 = vmatmul.mubr.bf16.gmra.mxu0 %v386
  %v803 = vpop.f32.mrf.mxu0
  %v804 = vadd.f32 0.0, %v803
  %v805 = vpop.f32.mrf.mxu0
  %v806 = vadd.f32 0.0, %v805
  %v807 = vpop.f32.mrf.mxu0
  %v808 = vadd.f32 0.0, %v807
  %v809 = vpop.f32.mrf.mxu0
  %v810 = vadd.f32 0.0, %v809
  %811 = vmatprep.mubr.bf16.mxu0 0
  %812 = vmatmul.mubr.bf16.gmra.mxu0 %v389
  %v813 = vpop.f32.mrf.mxu0
  %v814 = vadd.f32 0.0, %v813
  %v815 = vpop.f32.mrf.mxu0
  %v816 = vadd.f32 0.0, %v815
  %v817 = vpop.f32.mrf.mxu0
  %v818 = vadd.f32 0.0, %v817
  %v819 = vpop.f32.mrf.mxu0
  %v820 = vadd.f32 0.0, %v819
  %821 = vmatprep.mubr.bf16.mxu0 0
  %822 = vmatmul.mubr.bf16.gmra.mxu0 %v392
  %v823 = vpop.f32.mrf.mxu0
  %v824 = vadd.f32 0.0, %v823
  %v825 = vpop.f32.mrf.mxu0
  %v826 = vadd.f32 0.0, %v825
  %v827 = vpop.f32.mrf.mxu0
  %v828 = vadd.f32 0.0, %v827
  %v829 = vpop.f32.mrf.mxu0
  %v830 = vadd.f32 0.0, %v829
  %831 = vmatprep.mubr.bf16.mxu0 0
  %832 = vmatmul.mubr.bf16.gmra.mxu0 %v395
  %v833 = vpop.f32.mrf.mxu0
  %v834 = vadd.f32 0.0, %v833
  %v835 = vpop.f32.mrf.mxu0
  %v836 = vadd.f32 0.0, %v835
  %v837 = vpop.f32.mrf.mxu0
  %v838 = vadd.f32 0.0, %v837
  %v839 = vpop.f32.mrf.mxu0
  %v840 = vadd.f32 0.0, %v839
  %841 = vmatprep.mubr.bf16.mxu0 0
  %842 = vmatmul.mubr.bf16.gmra.mxu0 %v398
  %v843 = vpop.f32.mrf.mxu0
  %v844 = vadd.f32 0.0, %v843
  %v845 = vpop.f32.mrf.mxu0
  %v846 = vadd.f32 0.0, %v845
  %v847 = vpop.f32.mrf.mxu0
  %v848 = vadd.f32 0.0, %v847
  %v849 = vpop.f32.mrf.mxu0
  %v850 = vadd.f32 0.0, %v849
  %851 = vdwg.mxu0
  %852 = vmatprep.subr.bf16.mxu0 0
  %853 = vmatpush1.bf16.msra.mxu0 0
  %854 = vmatprep.subr.bf16.mxu0 0
  %855 = vmatpush1.bf16.msra.mxu0 0
  %856 = vmatprep.subr.bf16.mxu0 0
  %857 = vmatpush1.bf16.msra.mxu0 0
  %858 = vmatprep.subr.bf16.mxu0 0
  %859 = vmatpush1.bf16.msra.mxu0 0
  %860 = vmatprep.subr.bf16.mxu0 0
  %861 = vmatpush1.bf16.msra.mxu0 0
  %862 = vmatprep.subr.bf16.mxu0 0
  %863 = vmatpush1.bf16.msra.mxu0 0
  %864 = vmatprep.subr.bf16.mxu0 %v309
  %865 = vmatpush1.bf16.msra.mxu0 %v308
  %866 = vmatprep.subr.bf16.mxu0 %v284
  %867 = vmatpush1.bf16.msra.mxu0 %v283
  %868 = vmatprep.subr.bf16.mxu0 0
  %869 = vmatpush2.bf16.msra.mxu0 0
  %870 = vmatprep.subr.bf16.mxu0 0
  %871 = vmatpush2.bf16.msra.mxu0 0
  %872 = vmatprep.subr.bf16.mxu0 0
  %873 = vmatpush2.bf16.msra.mxu0 0
  %874 = vmatprep.subr.bf16.mxu0 0
  %875 = vmatpush2.bf16.msra.mxu0 0
  %876 = vmatprep.subr.bf16.mxu0 0
  %877 = vmatpush2.bf16.msra.mxu0 0
  %878 = vmatprep.subr.bf16.mxu0 0
  %879 = vmatpush2.bf16.msra.mxu0 0
  %880 = vmatprep.subr.bf16.mxu0 0
  %881 = vmatpush2.bf16.msra.mxu0 0
  %882 = vmatprep.subr.bf16.mxu0 0
  %883 = vmatpush2.bf16.msra.mxu0 0
  %884 = vmatprep.mubr.bf16.mxu0 0
  %885 = vmatmul.mubr.bf16.gmra.mxu0 %v377
  %v886 = vpop.f32.mrf.mxu0
  %v887 = vadd.f32 0.0, %v886
  %v888 = vpop.f32.mrf.mxu0
  %v889 = vadd.f32 0.0, %v888
  %v890 = vpop.f32.mrf.mxu0
  %v891 = vadd.f32 0.0, %v890
  %v892 = vpop.f32.mrf.mxu0
  %v893 = vadd.f32 0.0, %v892
  %894 = vmatprep.mubr.bf16.mxu0 0
  %895 = vmatmul.mubr.bf16.gmra.mxu0 %v380
  %v896 = vpop.f32.mrf.mxu0
  %v897 = vadd.f32 0.0, %v896
  %v898 = vpop.f32.mrf.mxu0
  %v899 = vadd.f32 0.0, %v898
  %v900 = vpop.f32.mrf.mxu0
  %v901 = vadd.f32 0.0, %v900
  %v902 = vpop.f32.mrf.mxu0
  %v903 = vadd.f32 0.0, %v902
  %904 = vmatprep.mubr.bf16.mxu0 0
  %905 = vmatmul.mubr.bf16.gmra.mxu0 %v383
  %v906 = vpop.f32.mrf.mxu0
  %v907 = vadd.f32 0.0, %v906
  %v908 = vpop.f32.mrf.mxu0
  %v909 = vadd.f32 0.0, %v908
  %v910 = vpop.f32.mrf.mxu0
  %v911 = vadd.f32 0.0, %v910
  %v912 = vpop.f32.mrf.mxu0
  %v913 = vadd.f32 0.0, %v912
  %914 = vmatprep.mubr.bf16.mxu0 0
  %915 = vmatmul.mubr.bf16.gmra.mxu0 %v386
  %v916 = vpop.f32.mrf.mxu0
  %v917 = vadd.f32 0.0, %v916
  %v918 = vpop.f32.mrf.mxu0
  %v919 = vadd.f32 0.0, %v918
  %v920 = vpop.f32.mrf.mxu0
  %v921 = vadd.f32 0.0, %v920
  %v922 = vpop.f32.mrf.mxu0
  %v923 = vadd.f32 0.0, %v922
  %924 = vmatprep.mubr.bf16.mxu0 0
  %925 = vmatmul.mubr.bf16.gmra.mxu0 %v389
  %v926 = vpop.f32.mrf.mxu0
  %v927 = vadd.f32 0.0, %v926
  %v928 = vpop.f32.mrf.mxu0
  %v929 = vadd.f32 0.0, %v928
  %v930 = vpop.f32.mrf.mxu0
  %v931 = vadd.f32 0.0, %v930
  %v932 = vpop.f32.mrf.mxu0
  %v933 = vadd.f32 0.0, %v932
  %934 = vmatprep.mubr.bf16.mxu0 0
  %935 = vmatmul.mubr.bf16.gmra.mxu0 %v392
  %v936 = vpop.f32.mrf.mxu0
  %v937 = vadd.f32 0.0, %v936
  %v938 = vpop.f32.mrf.mxu0
  %v939 = vadd.f32 0.0, %v938
  %v940 = vpop.f32.mrf.mxu0
  %v941 = vadd.f32 0.0, %v940
  %v942 = vpop.f32.mrf.mxu0
  %v943 = vadd.f32 0.0, %v942
  %944 = vmatprep.mubr.bf16.mxu0 0
  %945 = vmatmul.mubr.bf16.gmra.mxu0 %v395
  %v946 = vpop.f32.mrf.mxu0
  %v947 = vadd.f32 0.0, %v946
  %v948 = vpop.f32.mrf.mxu0
  %v949 = vadd.f32 0.0, %v948
  %v950 = vpop.f32.mrf.mxu0
  %v951 = vadd.f32 0.0, %v950
  %v952 = vpop.f32.mrf.mxu0
  %v953 = vadd.f32 0.0, %v952
  %954 = vmatprep.mubr.bf16.mxu0 0
  %955 = vmatmul.mubr.bf16.gmra.mxu0 %v398
  %v956 = vpop.f32.mrf.mxu0
  %v957 = vadd.f32 0.0, %v956
  %v958 = vpop.f32.mrf.mxu0
  %v959 = vadd.f32 0.0, %v958
  %v960 = vpop.f32.mrf.mxu0
  %v961 = vadd.f32 0.0, %v960
  %v962 = vpop.f32.mrf.mxu0
  %v963 = vadd.f32 0.0, %v962
  %964 = vdwg.mxu0
  %965 = vmatprep.subr.bf16.mxu0 0
  %966 = vmatpush1.bf16.msra.mxu0 0
  %967 = vmatprep.subr.bf16.mxu0 0
  %968 = vmatpush1.bf16.msra.mxu0 0
  %969 = vmatprep.subr.bf16.mxu0 0
  %970 = vmatpush1.bf16.msra.mxu0 0
  %971 = vmatprep.subr.bf16.mxu0 0
  %972 = vmatpush1.bf16.msra.mxu0 0
  %973 = vmatprep.subr.bf16.mxu0 0
  %974 = vmatpush1.bf16.msra.mxu0 0
  %975 = vmatprep.subr.bf16.mxu0 0
  %976 = vmatpush1.bf16.msra.mxu0 0
  %977 = vmatprep.subr.bf16.mxu0 %v311
  %978 = vmatpush1.bf16.msra.mxu0 %v310
  %979 = vmatprep.subr.bf16.mxu0 %v286
  %980 = vmatpush1.bf16.msra.mxu0 %v285
  %981 = vmatprep.subr.bf16.mxu0 0
  %982 = vmatpush2.bf16.msra.mxu0 0
  %983 = vmatprep.subr.bf16.mxu0 0
  %984 = vmatpush2.bf16.msra.mxu0 0
  %985 = vmatprep.subr.bf16.mxu0 0
  %986 = vmatpush2.bf16.msra.mxu0 0
  %987 = vmatprep.subr.bf16.mxu0 0
  %988 = vmatpush2.bf16.msra.mxu0 0
  %989 = vmatprep.subr.bf16.mxu0 0
  %990 = vmatpush2.bf16.msra.mxu0 0
  %991 = vmatprep.subr.bf16.mxu0 0
  %992 = vmatpush2.bf16.msra.mxu0 0
  %993 = vmatprep.subr.bf16.mxu0 0
  %994 = vmatpush2.bf16.msra.mxu0 0
  %995 = vmatprep.subr.bf16.mxu0 0
  %996 = vmatpush2.bf16.msra.mxu0 0
  %997 = vmatprep.mubr.bf16.mxu0 0
  %998 = vmatmul.mubr.bf16.gmra.mxu0 %v377
  %v999 = vpop.f32.mrf.mxu0
  %v1000 = vadd.f32 0.0, %v999
  %v1001 = vpop.f32.mrf.mxu0
  %v1002 = vadd.f32 0.0, %v1001
  %v1003 = vpop.f32.mrf.mxu0
  %v1004 = vadd.f32 0.0, %v1003
  %v1005 = vpop.f32.mrf.mxu0
  %v1006 = vadd.f32 0.0, %v1005
  %1007 = vmatprep.mubr.bf16.mxu0 0
  %1008 = vmatmul.mubr.bf16.gmra.mxu0 %v380
  %v1009 = vpop.f32.mrf.mxu0
  %v1010 = vadd.f32 0.0, %v1009
  %v1011 = vpop.f32.mrf.mxu0
  %v1012 = vadd.f32 0.0, %v1011
  %v1013 = vpop.f32.mrf.mxu0
  %v1014 = vadd.f32 0.0, %v1013
  %v1015 = vpop.f32.mrf.mxu0
  %v1016 = vadd.f32 0.0, %v1015
  %1017 = vmatprep.mubr.bf16.mxu0 0
  %1018 = vmatmul.mubr.bf16.gmra.mxu0 %v383
  %v1019 = vpop.f32.mrf.mxu0
  %v1020 = vadd.f32 0.0, %v1019
  %v1021 = vpop.f32.mrf.mxu0
  %v1022 = vadd.f32 0.0, %v1021
  %v1023 = vpop.f32.mrf.mxu0
  %v1024 = vadd.f32 0.0, %v1023
  %v1025 = vpop.f32.mrf.mxu0
  %v1026 = vadd.f32 0.0, %v1025
  %1027 = vmatprep.mubr.bf16.mxu0 0
  %1028 = vmatmul.mubr.bf16.gmra.mxu0 %v386
  %v1029 = vpop.f32.mrf.mxu0
  %v1030 = vadd.f32 0.0, %v1029
  %v1031 = vpop.f32.mrf.mxu0
  %v1032 = vadd.f32 0.0, %v1031
  %v1033 = vpop.f32.mrf.mxu0
  %v1034 = vadd.f32 0.0, %v1033
  %v1035 = vpop.f32.mrf.mxu0
  %v1036 = vadd.f32 0.0, %v1035
  %1037 = vmatprep.mubr.bf16.mxu0 0
  %1038 = vmatmul.mubr.bf16.gmra.mxu0 %v389
  %v1039 = vpop.f32.mrf.mxu0
  %v1040 = vadd.f32 0.0, %v1039
  %v1041 = vpop.f32.mrf.mxu0
  %v1042 = vadd.f32 0.0, %v1041
  %v1043 = vpop.f32.mrf.mxu0
  %v1044 = vadd.f32 0.0, %v1043
  %v1045 = vpop.f32.mrf.mxu0
  %v1046 = vadd.f32 0.0, %v1045
  %1047 = vmatprep.mubr.bf16.mxu0 0
  %1048 = vmatmul.mubr.bf16.gmra.mxu0 %v392
  %v1049 = vpop.f32.mrf.mxu0
  %v1050 = vadd.f32 0.0, %v1049
  %v1051 = vpop.f32.mrf.mxu0
  %v1052 = vadd.f32 0.0, %v1051
  %v1053 = vpop.f32.mrf.mxu0
  %v1054 = vadd.f32 0.0, %v1053
  %v1055 = vpop.f32.mrf.mxu0
  %v1056 = vadd.f32 0.0, %v1055
  %1057 = vmatprep.mubr.bf16.mxu0 0
  %1058 = vmatmul.mubr.bf16.gmra.mxu0 %v395
  %v1059 = vpop.f32.mrf.mxu0
  %v1060 = vadd.f32 0.0, %v1059
  %v1061 = vpop.f32.mrf.mxu0
  %v1062 = vadd.f32 0.0, %v1061
  %v1063 = vpop.f32.mrf.mxu0
  %v1064 = vadd.f32 0.0, %v1063
  %v1065 = vpop.f32.mrf.mxu0
  %v1066 = vadd.f32 0.0, %v1065
  %1067 = vmatprep.mubr.bf16.mxu0 0
  %1068 = vmatmul.mubr.bf16.gmra.mxu0 %v398
  %v1069 = vpop.f32.mrf.mxu0
  %v1070 = vadd.f32 0.0, %v1069
  %v1071 = vpop.f32.mrf.mxu0
  %v1072 = vadd.f32 0.0, %v1071
  %v1073 = vpop.f32.mrf.mxu0
  %v1074 = vadd.f32 0.0, %v1073
  %v1075 = vpop.f32.mrf.mxu0
  %v1076 = vadd.f32 0.0, %v1075
  %1077 = vdwg.mxu0
  %1078 = vmatprep.subr.bf16.mxu0 0
  %1079 = vmatpush1.bf16.msra.mxu0 0
  %1080 = vmatprep.subr.bf16.mxu0 0
  %1081 = vmatpush1.bf16.msra.mxu0 0
  %1082 = vmatprep.subr.bf16.mxu0 0
  %1083 = vmatpush1.bf16.msra.mxu0 0
  %1084 = vmatprep.subr.bf16.mxu0 0
  %1085 = vmatpush1.bf16.msra.mxu0 0
  %1086 = vmatprep.subr.bf16.mxu0 0
  %1087 = vmatpush1.bf16.msra.mxu0 0
  %1088 = vmatprep.subr.bf16.mxu0 0
  %1089 = vmatpush1.bf16.msra.mxu0 0
  %1090 = vmatprep.subr.bf16.mxu0 %v313
  %1091 = vmatpush1.bf16.msra.mxu0 %v312
  %1092 = vmatprep.subr.bf16.mxu0 %v288
  %1093 = vmatpush1.bf16.msra.mxu0 %v287
  %1094 = vmatprep.subr.bf16.mxu0 0
  %1095 = vmatpush2.bf16.msra.mxu0 0
  %1096 = vmatprep.subr.bf16.mxu0 0
  %1097 = vmatpush2.bf16.msra.mxu0 0
  %1098 = vmatprep.subr.bf16.mxu0 0
  %1099 = vmatpush2.bf16.msra.mxu0 0
  %1100 = vmatprep.subr.bf16.mxu0 0
  %1101 = vmatpush2.bf16.msra.mxu0 0
  %1102 = vmatprep.subr.bf16.mxu0 0
  %1103 = vmatpush2.bf16.msra.mxu0 0
  %1104 = vmatprep.subr.bf16.mxu0 0
  %1105 = vmatpush2.bf16.msra.mxu0 0
  %1106 = vmatprep.subr.bf16.mxu0 0
  %1107 = vmatpush2.bf16.msra.mxu0 0
  %1108 = vmatprep.subr.bf16.mxu0 0
  %1109 = vmatpush2.bf16.msra.mxu0 0
  %1110 = vmatprep.mubr.bf16.mxu0 0
  %1111 = vmatmul.mubr.bf16.gmra.mxu0 %v377
  %v1112 = vpop.f32.mrf.mxu0
  %v1113 = vadd.f32 0.0, %v1112
  %v1114 = vpop.f32.mrf.mxu0
  %v1115 = vadd.f32 0.0, %v1114
  %v1116 = vpop.f32.mrf.mxu0
  %v1117 = vadd.f32 0.0, %v1116
  %v1118 = vpop.f32.mrf.mxu0
  %v1119 = vadd.f32 0.0, %v1118
  %1120 = vmatprep.mubr.bf16.mxu0 0
  %1121 = vmatmul.mubr.bf16.gmra.mxu0 %v380
  %v1122 = vpop.f32.mrf.mxu0
  %v1123 = vadd.f32 0.0, %v1122
  %v1124 = vpop.f32.mrf.mxu0
  %v1125 = vadd.f32 0.0, %v1124
  %v1126 = vpop.f32.mrf.mxu0
  %v1127 = vadd.f32 0.0, %v1126
  %v1128 = vpop.f32.mrf.mxu0
  %v1129 = vadd.f32 0.0, %v1128
  %1130 = vmatprep.mubr.bf16.mxu0 0
  %1131 = vmatmul.mubr.bf16.gmra.mxu0 %v383
  %v1132 = vpop.f32.mrf.mxu0
  %v1133 = vadd.f32 0.0, %v1132
  %v1134 = vpop.f32.mrf.mxu0
  %v1135 = vadd.f32 0.0, %v1134
  %v1136 = vpop.f32.mrf.mxu0
  %v1137 = vadd.f32 0.0, %v1136
  %v1138 = vpop.f32.mrf.mxu0
  %v1139 = vadd.f32 0.0, %v1138
  %1140 = vmatprep.mubr.bf16.mxu0 0
  %1141 = vmatmul.mubr.bf16.gmra.mxu0 %v386
  %v1142 = vpop.f32.mrf.mxu0
  %v1143 = vadd.f32 0.0, %v1142
  %v1144 = vpop.f32.mrf.mxu0
  %v1145 = vadd.f32 0.0, %v1144
  %v1146 = vpop.f32.mrf.mxu0
  %v1147 = vadd.f32 0.0, %v1146
  %v1148 = vpop.f32.mrf.mxu0
  %v1149 = vadd.f32 0.0, %v1148
  %1150 = vmatprep.mubr.bf16.mxu0 0
  %1151 = vmatmul.mubr.bf16.gmra.mxu0 %v389
  %v1152 = vpop.f32.mrf.mxu0
  %v1153 = vadd.f32 0.0, %v1152
  %v1154 = vpop.f32.mrf.mxu0
  %v1155 = vadd.f32 0.0, %v1154
  %v1156 = vpop.f32.mrf.mxu0
  %v1157 = vadd.f32 0.0, %v1156
  %v1158 = vpop.f32.mrf.mxu0
  %v1159 = vadd.f32 0.0, %v1158
  %1160 = vmatprep.mubr.bf16.mxu0 0
  %1161 = vmatmul.mubr.bf16.gmra.mxu0 %v392
  %v1162 = vpop.f32.mrf.mxu0
  %v1163 = vadd.f32 0.0, %v1162
  %v1164 = vpop.f32.mrf.mxu0
  %v1165 = vadd.f32 0.0, %v1164
  %v1166 = vpop.f32.mrf.mxu0
  %v1167 = vadd.f32 0.0, %v1166
  %v1168 = vpop.f32.mrf.mxu0
  %v1169 = vadd.f32 0.0, %v1168
  %1170 = vmatprep.mubr.bf16.mxu0 0
  %1171 = vmatmul.mubr.bf16.gmra.mxu0 %v395
  %v1172 = vpop.f32.mrf.mxu0
  %v1173 = vadd.f32 0.0, %v1172
  %v1174 = vpop.f32.mrf.mxu0
  %v1175 = vadd.f32 0.0, %v1174
  %v1176 = vpop.f32.mrf.mxu0
  %v1177 = vadd.f32 0.0, %v1176
  %v1178 = vpop.f32.mrf.mxu0
  %v1179 = vadd.f32 0.0, %v1178
  %1180 = vmatprep.mubr.bf16.mxu0 0
  %1181 = vmatmul.mubr.bf16.gmra.mxu0 %v398
  %v1182 = vpop.f32.mrf.mxu0
  %v1183 = vadd.f32 0.0, %v1182
  %v1184 = vpop.f32.mrf.mxu0
  %v1185 = vadd.f32 0.0, %v1184
  %v1186 = vpop.f32.mrf.mxu0
  %v1187 = vadd.f32 0.0, %v1186
  %v1188 = vpop.f32.mrf.mxu0
  %v1189 = vadd.f32 0.0, %v1188
  %1190 = vdwg.mxu0
  %1191 = vmatprep.subr.bf16.mxu0 0
  %1192 = vmatpush1.bf16.msra.mxu0 0
  %1193 = vmatprep.subr.bf16.mxu0 0
  %1194 = vmatpush1.bf16.msra.mxu0 0
  %1195 = vmatprep.subr.bf16.mxu0 0
  %1196 = vmatpush1.bf16.msra.mxu0 0
  %1197 = vmatprep.subr.bf16.mxu0 0
  %1198 = vmatpush1.bf16.msra.mxu0 0
  %1199 = vmatprep.subr.bf16.mxu0 0
  %1200 = vmatpush1.bf16.msra.mxu0 0
  %1201 = vmatprep.subr.bf16.mxu0 0
  %1202 = vmatpush1.bf16.msra.mxu0 0
  %1203 = vmatprep.subr.bf16.mxu0 %v315
  %1204 = vmatpush1.bf16.msra.mxu0 %v314
  %1205 = vmatprep.subr.bf16.mxu0 %v290
  %1206 = vmatpush1.bf16.msra.mxu0 %v289
  %1207 = vmatprep.subr.bf16.mxu0 0
  %1208 = vmatpush2.bf16.msra.mxu0 0
  %1209 = vmatprep.subr.bf16.mxu0 0
  %1210 = vmatpush2.bf16.msra.mxu0 0
  %1211 = vmatprep.subr.bf16.mxu0 0
  %1212 = vmatpush2.bf16.msra.mxu0 0
  %1213 = vmatprep.subr.bf16.mxu0 0
  %1214 = vmatpush2.bf16.msra.mxu0 0
  %1215 = vmatprep.subr.bf16.mxu0 0
  %1216 = vmatpush2.bf16.msra.mxu0 0
  %1217 = vmatprep.subr.bf16.mxu0 0
  %1218 = vmatpush2.bf16.msra.mxu0 0
  %1219 = vmatprep.subr.bf16.mxu0 0
  %1220 = vmatpush2.bf16.msra.mxu0 0
  %1221 = vmatprep.subr.bf16.mxu0 0
  %1222 = vmatpush2.bf16.msra.mxu0 0
  %1223 = vmatprep.mubr.bf16.mxu0 0
  %1224 = vmatmul.mubr.bf16.gmra.mxu0 %v377
  %v1225 = vpop.f32.mrf.mxu0
  %v1226 = vadd.f32 0.0, %v1225
  %v1227 = vpop.f32.mrf.mxu0
  %v1228 = vadd.f32 0.0, %v1227
  %v1229 = vpop.f32.mrf.mxu0
  %v1230 = vadd.f32 0.0, %v1229
  %v1231 = vpop.f32.mrf.mxu0
  %v1232 = vadd.f32 0.0, %v1231
  %1233 = vmatprep.mubr.bf16.mxu0 0
  %1234 = vmatmul.mubr.bf16.gmra.mxu0 %v380
  %v1235 = vpop.f32.mrf.mxu0
  %v1236 = vadd.f32 0.0, %v1235
  %v1237 = vpop.f32.mrf.mxu0
  %v1238 = vadd.f32 0.0, %v1237
  %v1239 = vpop.f32.mrf.mxu0
  %v1240 = vadd.f32 0.0, %v1239
  %v1241 = vpop.f32.mrf.mxu0
  %v1242 = vadd.f32 0.0, %v1241
  %1243 = vmatprep.mubr.bf16.mxu0 0
  %1244 = vmatmul.mubr.bf16.gmra.mxu0 %v383
  %v1245 = vpop.f32.mrf.mxu0
  %v1246 = vadd.f32 0.0, %v1245
  %v1247 = vpop.f32.mrf.mxu0
  %v1248 = vadd.f32 0.0, %v1247
  %v1249 = vpop.f32.mrf.mxu0
  %v1250 = vadd.f32 0.0, %v1249
  %v1251 = vpop.f32.mrf.mxu0
  %v1252 = vadd.f32 0.0, %v1251
  %1253 = vmatprep.mubr.bf16.mxu0 0
  %1254 = vmatmul.mubr.bf16.gmra.mxu0 %v386
  %v1255 = vpop.f32.mrf.mxu0
  %v1256 = vadd.f32 0.0, %v1255
  %v1257 = vpop.f32.mrf.mxu0
  %v1258 = vadd.f32 0.0, %v1257
  %v1259 = vpop.f32.mrf.mxu0
  %v1260 = vadd.f32 0.0, %v1259
  %v1261 = vpop.f32.mrf.mxu0
  %v1262 = vadd.f32 0.0, %v1261
  %1263 = vmatprep.mubr.bf16.mxu0 0
  %1264 = vmatmul.mubr.bf16.gmra.mxu0 %v389
  %v1265 = vpop.f32.mrf.mxu0
  %v1266 = vadd.f32 0.0, %v1265
  %v1267 = vpop.f32.mrf.mxu0
  %v1268 = vadd.f32 0.0, %v1267
  %v1269 = vpop.f32.mrf.mxu0
  %v1270 = vadd.f32 0.0, %v1269
  %v1271 = vpop.f32.mrf.mxu0
  %v1272 = vadd.f32 0.0, %v1271
  %1273 = vmatprep.mubr.bf16.mxu0 0
  %1274 = vmatmul.mubr.bf16.gmra.mxu0 %v392
  %v1275 = vpop.f32.mrf.mxu0
  %v1276 = vadd.f32 0.0, %v1275
  %v1277 = vpop.f32.mrf.mxu0
  %v1278 = vadd.f32 0.0, %v1277
  %v1279 = vpop.f32.mrf.mxu0
  %v1280 = vadd.f32 0.0, %v1279
  %v1281 = vpop.f32.mrf.mxu0
  %v1282 = vadd.f32 0.0, %v1281
  %1283 = vmatprep.mubr.bf16.mxu0 0
  %1284 = vmatmul.mubr.bf16.gmra.mxu0 %v395
  %v1285 = vpop.f32.mrf.mxu0
  %v1286 = vadd.f32 0.0, %v1285
  %v1287 = vpop.f32.mrf.mxu0
  %v1288 = vadd.f32 0.0, %v1287
  %v1289 = vpop.f32.mrf.mxu0
  %v1290 = vadd.f32 0.0, %v1289
  %v1291 = vpop.f32.mrf.mxu0
  %v1292 = vadd.f32 0.0, %v1291
  %1293 = vmatprep.mubr.bf16.mxu0 0
  %1294 = vmatmul.mubr.bf16.gmra.mxu0 %v398
  %v1295 = vpop.f32.mrf.mxu0
  %v1296 = vadd.f32 0.0, %v1295
  %v1297 = vpop.f32.mrf.mxu0
  %v1298 = vadd.f32 0.0, %v1297
  %v1299 = vpop.f32.mrf.mxu0
  %v1300 = vadd.f32 0.0, %v1299
  %v1301 = vpop.f32.mrf.mxu0
  %v1302 = vadd.f32 0.0, %v1301
  %1303 = vdwg.mxu0
  %1304 = vmatprep.subr.bf16.mxu0 0
  %1305 = vmatpush1.bf16.msra.mxu0 0
  %1306 = vmatprep.subr.bf16.mxu0 0
  %1307 = vmatpush1.bf16.msra.mxu0 0
  %1308 = vmatprep.subr.bf16.mxu0 0
  %1309 = vmatpush1.bf16.msra.mxu0 0
  %1310 = vmatprep.subr.bf16.mxu0 0
  %1311 = vmatpush1.bf16.msra.mxu0 0
  %1312 = vmatprep.subr.bf16.mxu0 0
  %1313 = vmatpush1.bf16.msra.mxu0 0
  %1314 = vmatprep.subr.bf16.mxu0 0
  %1315 = vmatpush1.bf16.msra.mxu0 0
  %1316 = vmatprep.subr.bf16.mxu0 %v317
  %1317 = vmatpush1.bf16.msra.mxu0 %v316
  %1318 = vmatprep.subr.bf16.mxu0 %v292
  %1319 = vmatpush1.bf16.msra.mxu0 %v291
  %1320 = vmatprep.subr.bf16.mxu0 0
  %1321 = vmatpush2.bf16.msra.mxu0 0
  %1322 = vmatprep.subr.bf16.mxu0 0
  %1323 = vmatpush2.bf16.msra.mxu0 0
  %1324 = vmatprep.subr.bf16.mxu0 0
  %1325 = vmatpush2.bf16.msra.mxu0 0
  %1326 = vmatprep.subr.bf16.mxu0 0
  %1327 = vmatpush2.bf16.msra.mxu0 0
  %1328 = vmatprep.subr.bf16.mxu0 0
  %1329 = vmatpush2.bf16.msra.mxu0 0
  %1330 = vmatprep.subr.bf16.mxu0 0
  %1331 = vmatpush2.bf16.msra.mxu0 0
  %1332 = vmatprep.subr.bf16.mxu0 0
  %1333 = vmatpush2.bf16.msra.mxu0 0
  %1334 = vmatprep.subr.bf16.mxu0 0
  %1335 = vmatpush2.bf16.msra.mxu0 0
  %1336 = vmatprep.mubr.bf16.mxu0 0
  %1337 = vmatmul.mubr.bf16.gmra.mxu0 %v377
  %v1338 = vpop.f32.mrf.mxu0
  %v1339 = vadd.f32 0.0, %v1338
  %v1340 = vpop.f32.mrf.mxu0
  %v1341 = vadd.f32 0.0, %v1340
  %v1342 = vpop.f32.mrf.mxu0
  %v1343 = vadd.f32 0.0, %v1342
  %v1344 = vpop.f32.mrf.mxu0
  %v1345 = vadd.f32 0.0, %v1344
  %1346 = vmatprep.mubr.bf16.mxu0 0
  %1347 = vmatmul.mubr.bf16.gmra.mxu0 %v380
  %v1348 = vpop.f32.mrf.mxu0
  %v1349 = vadd.f32 0.0, %v1348
  %v1350 = vpop.f32.mrf.mxu0
  %v1351 = vadd.f32 0.0, %v1350
  %v1352 = vpop.f32.mrf.mxu0
  %v1353 = vadd.f32 0.0, %v1352
  %v1354 = vpop.f32.mrf.mxu0
  %v1355 = vadd.f32 0.0, %v1354
  %1356 = vmatprep.mubr.bf16.mxu0 0
  %1357 = vmatmul.mubr.bf16.gmra.mxu0 %v383
  %v1358 = vpop.f32.mrf.mxu0
  %v1359 = vadd.f32 0.0, %v1358
  %v1360 = vpop.f32.mrf.mxu0
  %v1361 = vadd.f32 0.0, %v1360
  %v1362 = vpop.f32.mrf.mxu0
  %v1363 = vadd.f32 0.0, %v1362
  %v1364 = vpop.f32.mrf.mxu0
  %v1365 = vadd.f32 0.0, %v1364
  %1366 = vmatprep.mubr.bf16.mxu0 0
  %1367 = vmatmul.mubr.bf16.gmra.mxu0 %v386
  %v1368 = vpop.f32.mrf.mxu0
  %v1369 = vadd.f32 0.0, %v1368
  %v1370 = vpop.f32.mrf.mxu0
  %v1371 = vadd.f32 0.0, %v1370
  %v1372 = vpop.f32.mrf.mxu0
  %v1373 = vadd.f32 0.0, %v1372
  %v1374 = vpop.f32.mrf.mxu0
  %v1375 = vadd.f32 0.0, %v1374
  %1376 = vmatprep.mubr.bf16.mxu0 0
  %1377 = vmatmul.mubr.bf16.gmra.mxu0 %v389
  %v1378 = vpop.f32.mrf.mxu0
  %v1379 = vadd.f32 0.0, %v1378
  %v1380 = vpop.f32.mrf.mxu0
  %v1381 = vadd.f32 0.0, %v1380
  %v1382 = vpop.f32.mrf.mxu0
  %v1383 = vadd.f32 0.0, %v1382
  %v1384 = vpop.f32.mrf.mxu0
  %v1385 = vadd.f32 0.0, %v1384
  %1386 = vmatprep.mubr.bf16.mxu0 0
  %1387 = vmatmul.mubr.bf16.gmra.mxu0 %v392
  %v1388 = vpop.f32.mrf.mxu0
  %v1389 = vadd.f32 0.0, %v1388
  %v1390 = vpop.f32.mrf.mxu0
  %v1391 = vadd.f32 0.0, %v1390
  %v1392 = vpop.f32.mrf.mxu0
  %v1393 = vadd.f32 0.0, %v1392
  %v1394 = vpop.f32.mrf.mxu0
  %v1395 = vadd.f32 0.0, %v1394
  %1396 = vmatprep.mubr.bf16.mxu0 0
  %1397 = vmatmul.mubr.bf16.gmra.mxu0 %v395
  %v1398 = vpop.f32.mrf.mxu0
  %v1399 = vadd.f32 0.0, %v1398
  %v1400 = vpop.f32.mrf.mxu0
  %v1401 = vadd.f32 0.0, %v1400
  %v1402 = vpop.f32.mrf.mxu0
  %v1403 = vadd.f32 0.0, %v1402
  %v1404 = vpop.f32.mrf.mxu0
  %v1405 = vadd.f32 0.0, %v1404
  %1406 = vmatprep.mubr.bf16.mxu0 0
  %1407 = vmatmul.mubr.bf16.gmra.mxu0 %v398
  %v1408 = vpop.f32.mrf.mxu0
  %v1409 = vadd.f32 0.0, %v1408
  %v1410 = vpop.f32.mrf.mxu0
  %v1411 = vadd.f32 0.0, %v1410
  %v1412 = vpop.f32.mrf.mxu0
  %v1413 = vadd.f32 0.0, %v1412
  %v1414 = vpop.f32.mrf.mxu0
  %v1415 = vadd.f32 0.0, %v1414
  %1416 = vdwg.mxu0
  %1417 = vmatprep.subr.bf16.mxu0 0
  %1418 = vmatpush1.bf16.msra.mxu0 0
  %1419 = vmatprep.subr.bf16.mxu0 0
  %1420 = vmatpush1.bf16.msra.mxu0 0
  %1421 = vmatprep.subr.bf16.mxu0 0
  %1422 = vmatpush1.bf16.msra.mxu0 0
  %1423 = vmatprep.subr.bf16.mxu0 0
  %1424 = vmatpush1.bf16.msra.mxu0 0
  %1425 = vmatprep.subr.bf16.mxu0 0
  %1426 = vmatpush1.bf16.msra.mxu0 0
  %1427 = vmatprep.subr.bf16.mxu0 0
  %1428 = vmatpush1.bf16.msra.mxu0 0
  %1429 = vmatprep.subr.bf16.mxu0 %v319
  %1430 = vmatpush1.bf16.msra.mxu0 %v318
  %1431 = vmatprep.subr.bf16.mxu0 %v294
  %1432 = vmatpush1.bf16.msra.mxu0 %v293
  %1433 = vmatprep.subr.bf16.mxu0 0
  %1434 = vmatpush2.bf16.msra.mxu0 0
  %1435 = vmatprep.subr.bf16.mxu0 0
  %1436 = vmatpush2.bf16.msra.mxu0 0
  %1437 = vmatprep.subr.bf16.mxu0 0
  %1438 = vmatpush2.bf16.msra.mxu0 0
  %1439 = vmatprep.subr.bf16.mxu0 0
  %1440 = vmatpush2.bf16.msra.mxu0 0
  %1441 = vmatprep.subr.bf16.mxu0 0
  %1442 = vmatpush2.bf16.msra.mxu0 0
  %1443 = vmatprep.subr.bf16.mxu0 0
  %1444 = vmatpush2.bf16.msra.mxu0 0
  %1445 = vmatprep.subr.bf16.mxu0 0
  %1446 = vmatpush2.bf16.msra.mxu0 0
  %1447 = vmatprep.subr.bf16.mxu0 0
  %1448 = vmatpush2.bf16.msra.mxu0 0
  %1449 = vmatprep.mubr.bf16.mxu0 0
  %1450 = vmatmul.mubr.bf16.gmra.mxu0 %v377
  %v1451 = vpop.f32.mrf.mxu0
  %v1452 = vadd.f32 0.0, %v1451
  %v1453 = vpop.f32.mrf.mxu0
  %v1454 = vadd.f32 0.0, %v1453
  %v1455 = vpop.f32.mrf.mxu0
  %v1456 = vadd.f32 0.0, %v1455
  %v1457 = vpop.f32.mrf.mxu0
  %v1458 = vadd.f32 0.0, %v1457
  %1459 = vmatprep.mubr.bf16.mxu0 0
  %1460 = vmatmul.mubr.bf16.gmra.mxu0 %v380
  %v1461 = vpop.f32.mrf.mxu0
  %v1462 = vadd.f32 0.0, %v1461
  %v1463 = vpop.f32.mrf.mxu0
  %v1464 = vadd.f32 0.0, %v1463
  %v1465 = vpop.f32.mrf.mxu0
  %v1466 = vadd.f32 0.0, %v1465
  %v1467 = vpop.f32.mrf.mxu0
  %v1468 = vadd.f32 0.0, %v1467
  %1469 = vmatprep.mubr.bf16.mxu0 0
  %1470 = vmatmul.mubr.bf16.gmra.mxu0 %v383
  %v1471 = vpop.f32.mrf.mxu0
  %v1472 = vadd.f32 0.0, %v1471
  %v1473 = vpop.f32.mrf.mxu0
  %v1474 = vadd.f32 0.0, %v1473
  %v1475 = vpop.f32.mrf.mxu0
  %v1476 = vadd.f32 0.0, %v1475
  %v1477 = vpop.f32.mrf.mxu0
  %v1478 = vadd.f32 0.0, %v1477
  %1479 = vmatprep.mubr.bf16.mxu0 0
  %1480 = vmatmul.mubr.bf16.gmra.mxu0 %v386
  %v1481 = vpop.f32.mrf.mxu0
  %v1482 = vadd.f32 0.0, %v1481
  %v1483 = vpop.f32.mrf.mxu0
  %v1484 = vadd.f32 0.0, %v1483
  %v1485 = vpop.f32.mrf.mxu0
  %v1486 = vadd.f32 0.0, %v1485
  %v1487 = vpop.f32.mrf.mxu0
  %v1488 = vadd.f32 0.0, %v1487
  %1489 = vmatprep.mubr.bf16.mxu0 0
  %1490 = vmatmul.mubr.bf16.gmra.mxu0 %v389
  %v1491 = vpop.f32.mrf.mxu0
  %v1492 = vadd.f32 0.0, %v1491
  %v1493 = vpop.f32.mrf.mxu0
  %v1494 = vadd.f32 0.0, %v1493
  %v1495 = vpop.f32.mrf.mxu0
  %v1496 = vadd.f32 0.0, %v1495
  %v1497 = vpop.f32.mrf.mxu0
  %v1498 = vadd.f32 0.0, %v1497
  %1499 = vmatprep.mubr.bf16.mxu0 0
  %1500 = vmatmul.mubr.bf16.gmra.mxu0 %v392
  %v1501 = vpop.f32.mrf.mxu0
  %v1502 = vadd.f32 0.0, %v1501
  %v1503 = vpop.f32.mrf.mxu0
  %v1504 = vadd.f32 0.0, %v1503
  %v1505 = vpop.f32.mrf.mxu0
  %v1506 = vadd.f32 0.0, %v1505
  %v1507 = vpop.f32.mrf.mxu0
  %v1508 = vadd.f32 0.0, %v1507
  %1509 = vmatprep.mubr.bf16.mxu0 0
  %1510 = vmatmul.mubr.bf16.gmra.mxu0 %v395
  %v1511 = vpop.f32.mrf.mxu0
  %v1512 = vadd.f32 0.0, %v1511
  %v1513 = vpop.f32.mrf.mxu0
  %v1514 = vadd.f32 0.0, %v1513
  %v1515 = vpop.f32.mrf.mxu0
  %v1516 = vadd.f32 0.0, %v1515
  %v1517 = vpop.f32.mrf.mxu0
  %v1518 = vadd.f32 0.0, %v1517
  %1519 = vmatprep.mubr.bf16.mxu0 0
  %1520 = vmatmul.mubr.bf16.gmra.mxu0 %v398
  %v1521 = vpop.f32.mrf.mxu0
  %v1522 = vadd.f32 0.0, %v1521
  %v1523 = vpop.f32.mrf.mxu0
  %v1524 = vadd.f32 0.0, %v1523
  %v1525 = vpop.f32.mrf.mxu0
  %v1526 = vadd.f32 0.0, %v1525
  %v1527 = vpop.f32.mrf.mxu0
  %v1528 = vadd.f32 0.0, %v1527
  %1529 = vdwg.mxu0
  %1530 = vmatprep.subr.bf16.mxu0 0
  %1531 = vmatpush1.bf16.msra.mxu0 0
  %1532 = vmatprep.subr.bf16.mxu0 0
  %1533 = vmatpush1.bf16.msra.mxu0 0
  %1534 = vmatprep.subr.bf16.mxu0 0
  %1535 = vmatpush1.bf16.msra.mxu0 0
  %1536 = vmatprep.subr.bf16.mxu0 0
  %1537 = vmatpush1.bf16.msra.mxu0 0
  %1538 = vmatprep.subr.bf16.mxu0 0
  %1539 = vmatpush1.bf16.msra.mxu0 0
  %1540 = vmatprep.subr.bf16.mxu0 0
  %1541 = vmatpush1.bf16.msra.mxu0 0
  %1542 = vmatprep.subr.bf16.mxu0 %v321
  %1543 = vmatpush1.bf16.msra.mxu0 %v320
  %1544 = vmatprep.subr.bf16.mxu0 %v296
  %1545 = vmatpush1.bf16.msra.mxu0 %v295
  %1546 = vmatprep.subr.bf16.mxu0 0
  %1547 = vmatpush2.bf16.msra.mxu0 0
  %1548 = vmatprep.subr.bf16.mxu0 0
  %1549 = vmatpush2.bf16.msra.mxu0 0
  %1550 = vmatprep.subr.bf16.mxu0 0
  %1551 = vmatpush2.bf16.msra.mxu0 0
  %1552 = vmatprep.subr.bf16.mxu0 0
  %1553 = vmatpush2.bf16.msra.mxu0 0
  %1554 = vmatprep.subr.bf16.mxu0 0
  %1555 = vmatpush2.bf16.msra.mxu0 0
  %1556 = vmatprep.subr.bf16.mxu0 0
  %1557 = vmatpush2.bf16.msra.mxu0 0
  %1558 = vmatprep.subr.bf16.mxu0 0
  %1559 = vmatpush2.bf16.msra.mxu0 0
  %1560 = vmatprep.subr.bf16.mxu0 0
  %1561 = vmatpush2.bf16.msra.mxu0 0
  %1562 = vmatprep.mubr.bf16.mxu0 0
  %1563 = vmatmul.mubr.bf16.gmra.mxu0 %v377
  %v1564 = vpop.f32.mrf.mxu0
  %v1565 = vadd.f32 0.0, %v1564
  %v1566 = vpop.f32.mrf.mxu0
  %v1567 = vadd.f32 0.0, %v1566
  %v1568 = vpop.f32.mrf.mxu0
  %v1569 = vadd.f32 0.0, %v1568
  %v1570 = vpop.f32.mrf.mxu0
  %v1571 = vadd.f32 0.0, %v1570
  %1572 = vmatprep.mubr.bf16.mxu0 0
  %1573 = vmatmul.mubr.bf16.gmra.mxu0 %v380
  %v1574 = vpop.f32.mrf.mxu0
  %v1575 = vadd.f32 0.0, %v1574
  %v1576 = vpop.f32.mrf.mxu0
  %v1577 = vadd.f32 0.0, %v1576
  %v1578 = vpop.f32.mrf.mxu0
  %v1579 = vadd.f32 0.0, %v1578
  %v1580 = vpop.f32.mrf.mxu0
  %v1581 = vadd.f32 0.0, %v1580
  %1582 = vmatprep.mubr.bf16.mxu0 0
  %1583 = vmatmul.mubr.bf16.gmra.mxu0 %v383
  %v1584 = vpop.f32.mrf.mxu0
  %v1585 = vadd.f32 0.0, %v1584
  %v1586 = vpop.f32.mrf.mxu0
  %v1587 = vadd.f32 0.0, %v1586
  %v1588 = vpop.f32.mrf.mxu0
  %v1589 = vadd.f32 0.0, %v1588
  %v1590 = vpop.f32.mrf.mxu0
  %v1591 = vadd.f32 0.0, %v1590
  %1592 = vmatprep.mubr.bf16.mxu0 0
  %1593 = vmatmul.mubr.bf16.gmra.mxu0 %v386
  %v1594 = vpop.f32.mrf.mxu0
  %v1595 = vadd.f32 0.0, %v1594
  %v1596 = vpop.f32.mrf.mxu0
  %v1597 = vadd.f32 0.0, %v1596
  %v1598 = vpop.f32.mrf.mxu0
  %v1599 = vadd.f32 0.0, %v1598
  %v1600 = vpop.f32.mrf.mxu0
  %v1601 = vadd.f32 0.0, %v1600
  %1602 = vmatprep.mubr.bf16.mxu0 0
  %1603 = vmatmul.mubr.bf16.gmra.mxu0 %v389
  %v1604 = vpop.f32.mrf.mxu0
  %v1605 = vadd.f32 0.0, %v1604
  %v1606 = vpop.f32.mrf.mxu0
  %v1607 = vadd.f32 0.0, %v1606
  %v1608 = vpop.f32.mrf.mxu0
  %v1609 = vadd.f32 0.0, %v1608
  %v1610 = vpop.f32.mrf.mxu0
  %v1611 = vadd.f32 0.0, %v1610
  %1612 = vmatprep.mubr.bf16.mxu0 0
  %1613 = vmatmul.mubr.bf16.gmra.mxu0 %v392
  %v1614 = vpop.f32.mrf.mxu0
  %v1615 = vadd.f32 0.0, %v1614
  %v1616 = vpop.f32.mrf.mxu0
  %v1617 = vadd.f32 0.0, %v1616
  %v1618 = vpop.f32.mrf.mxu0
  %v1619 = vadd.f32 0.0, %v1618
  %v1620 = vpop.f32.mrf.mxu0
  %v1621 = vadd.f32 0.0, %v1620
  %1622 = vmatprep.mubr.bf16.mxu0 0
  %1623 = vmatmul.mubr.bf16.gmra.mxu0 %v395
  %v1624 = vpop.f32.mrf.mxu0
  %v1625 = vadd.f32 0.0, %v1624
  %v1626 = vpop.f32.mrf.mxu0
  %v1627 = vadd.f32 0.0, %v1626
  %v1628 = vpop.f32.mrf.mxu0
  %v1629 = vadd.f32 0.0, %v1628
  %v1630 = vpop.f32.mrf.mxu0
  %v1631 = vadd.f32 0.0, %v1630
  %1632 = vmatprep.mubr.bf16.mxu0 0
  %1633 = vmatmul.mubr.bf16.gmra.mxu0 %v398
  %v1634 = vpop.f32.mrf.mxu0
  %v1635 = vadd.f32 0.0, %v1634
  %v1636 = vpop.f32.mrf.mxu0
  %v1637 = vadd.f32 0.0, %v1636
  %v1638 = vpop.f32.mrf.mxu0
  %v1639 = vadd.f32 0.0, %v1638
  %v1640 = vpop.f32.mrf.mxu0
  %v1641 = vadd.f32 0.0, %v1640
  %1642 = vdwg.mxu0
  %1643 = vmatprep.subr.bf16.mxu0 0
  %1644 = vmatpush1.bf16.msra.mxu0 0
  %1645 = vmatprep.subr.bf16.mxu0 0
  %1646 = vmatpush1.bf16.msra.mxu0 0
  %1647 = vmatprep.subr.bf16.mxu0 0
  %1648 = vmatpush1.bf16.msra.mxu0 0
  %1649 = vmatprep.subr.bf16.mxu0 0
  %1650 = vmatpush1.bf16.msra.mxu0 0
  %1651 = vmatprep.subr.bf16.mxu0 0
  %1652 = vmatpush1.bf16.msra.mxu0 0
  %1653 = vmatprep.subr.bf16.mxu0 0
  %1654 = vmatpush1.bf16.msra.mxu0 0
  %1655 = vmatprep.subr.bf16.mxu0 %v323
  %1656 = vmatpush1.bf16.msra.mxu0 %v322
  %1657 = vmatprep.subr.bf16.mxu0 %v298
  %1658 = vmatpush1.bf16.msra.mxu0 %v297
  %1659 = vmatprep.subr.bf16.mxu0 0
  %1660 = vmatpush2.bf16.msra.mxu0 0
  %1661 = vmatprep.subr.bf16.mxu0 0
  %1662 = vmatpush2.bf16.msra.mxu0 0
  %1663 = vmatprep.subr.bf16.mxu0 0
  %1664 = vmatpush2.bf16.msra.mxu0 0
  %1665 = vmatprep.subr.bf16.mxu0 0
  %1666 = vmatpush2.bf16.msra.mxu0 0
  %1667 = vmatprep.subr.bf16.mxu0 0
  %1668 = vmatpush2.bf16.msra.mxu0 0
  %1669 = vmatprep.subr.bf16.mxu0 0
  %1670 = vmatpush2.bf16.msra.mxu0 0
  %1671 = vmatprep.subr.bf16.mxu0 0
  %1672 = vmatpush2.bf16.msra.mxu0 0
  %1673 = vmatprep.subr.bf16.mxu0 0
  %1674 = vmatpush2.bf16.msra.mxu0 0
  %1675 = vmatprep.mubr.bf16.mxu0 0
  %1676 = vmatmul.mubr.bf16.gmra.mxu0 %v377
  %v1677 = vpop.f32.mrf.mxu0
  %v1678 = vadd.f32 0.0, %v1677
  %v1679 = vpop.f32.mrf.mxu0
  %v1680 = vadd.f32 0.0, %v1679
  %v1681 = vpop.f32.mrf.mxu0
  %v1682 = vadd.f32 0.0, %v1681
  %v1683 = vpop.f32.mrf.mxu0
  %v1684 = vadd.f32 0.0, %v1683
  %1685 = vmatprep.mubr.bf16.mxu0 0
  %1686 = vmatmul.mubr.bf16.gmra.mxu0 %v380
  %v1687 = vpop.f32.mrf.mxu0
  %v1688 = vadd.f32 0.0, %v1687
  %v1689 = vpop.f32.mrf.mxu0
  %v1690 = vadd.f32 0.0, %v1689
  %v1691 = vpop.f32.mrf.mxu0
  %v1692 = vadd.f32 0.0, %v1691
  %v1693 = vpop.f32.mrf.mxu0
  %v1694 = vadd.f32 0.0, %v1693
  %1695 = vmatprep.mubr.bf16.mxu0 0
  %1696 = vmatmul.mubr.bf16.gmra.mxu0 %v383
  %v1697 = vpop.f32.mrf.mxu0
  %v1698 = vadd.f32 0.0, %v1697
  %v1699 = vpop.f32.mrf.mxu0
  %v1700 = vadd.f32 0.0, %v1699
  %v1701 = vpop.f32.mrf.mxu0
  %v1702 = vadd.f32 0.0, %v1701
  %v1703 = vpop.f32.mrf.mxu0
  %v1704 = vadd.f32 0.0, %v1703
  %1705 = vmatprep.mubr.bf16.mxu0 0
  %1706 = vmatmul.mubr.bf16.gmra.mxu0 %v386
  %v1707 = vpop.f32.mrf.mxu0
  %v1708 = vadd.f32 0.0, %v1707
  %v1709 = vpop.f32.mrf.mxu0
  %v1710 = vadd.f32 0.0, %v1709
  %v1711 = vpop.f32.mrf.mxu0
  %v1712 = vadd.f32 0.0, %v1711
  %v1713 = vpop.f32.mrf.mxu0
  %v1714 = vadd.f32 0.0, %v1713
  %1715 = vmatprep.mubr.bf16.mxu0 0
  %1716 = vmatmul.mubr.bf16.gmra.mxu0 %v389
  %v1717 = vpop.f32.mrf.mxu0
  %v1718 = vadd.f32 0.0, %v1717
  %v1719 = vpop.f32.mrf.mxu0
  %v1720 = vadd.f32 0.0, %v1719
  %v1721 = vpop.f32.mrf.mxu0
  %v1722 = vadd.f32 0.0, %v1721
  %v1723 = vpop.f32.mrf.mxu0
  %v1724 = vadd.f32 0.0, %v1723
  %1725 = vmatprep.mubr.bf16.mxu0 0
  %1726 = vmatmul.mubr.bf16.gmra.mxu0 %v392
  %v1727 = vpop.f32.mrf.mxu0
  %v1728 = vadd.f32 0.0, %v1727
  %v1729 = vpop.f32.mrf.mxu0
  %v1730 = vadd.f32 0.0, %v1729
  %v1731 = vpop.f32.mrf.mxu0
  %v1732 = vadd.f32 0.0, %v1731
  %v1733 = vpop.f32.mrf.mxu0
  %v1734 = vadd.f32 0.0, %v1733
  %1735 = vmatprep.mubr.bf16.mxu0 0
  %1736 = vmatmul.mubr.bf16.gmra.mxu0 %v395
  %v1737 = vpop.f32.mrf.mxu0
  %v1738 = vadd.f32 0.0, %v1737
  %v1739 = vpop.f32.mrf.mxu0
  %v1740 = vadd.f32 0.0, %v1739
  %v1741 = vpop.f32.mrf.mxu0
  %v1742 = vadd.f32 0.0, %v1741
  %v1743 = vpop.f32.mrf.mxu0
  %v1744 = vadd.f32 0.0, %v1743
  %1745 = vmatprep.mubr.bf16.mxu0 0
  %1746 = vmatmul.mubr.bf16.gmra.mxu0 %v398
  %v1747 = vpop.f32.mrf.mxu0
  %v1748 = vadd.f32 0.0, %v1747
  %v1749 = vpop.f32.mrf.mxu0
  %v1750 = vadd.f32 0.0, %v1749
  %v1751 = vpop.f32.mrf.mxu0
  %v1752 = vadd.f32 0.0, %v1751
  %v1753 = vpop.f32.mrf.mxu0
  %v1754 = vadd.f32 0.0, %v1753
  %1755 = vdwg.mxu0
  %1756 = vmatprep.subr.bf16.mxu0 0
  %1757 = vmatpush1.bf16.msra.mxu0 0
  %1758 = vmatprep.subr.bf16.mxu0 0
  %1759 = vmatpush1.bf16.msra.mxu0 0
  %1760 = vmatprep.subr.bf16.mxu0 0
  %1761 = vmatpush1.bf16.msra.mxu0 0
  %1762 = vmatprep.subr.bf16.mxu0 0
  %1763 = vmatpush1.bf16.msra.mxu0 0
  %1764 = vmatprep.subr.bf16.mxu0 0
  %1765 = vmatpush1.bf16.msra.mxu0 0
  %1766 = vmatprep.subr.bf16.mxu0 0
  %1767 = vmatpush1.bf16.msra.mxu0 0
  %1768 = vmatprep.subr.bf16.mxu0 0
  %1769 = vmatpush1.bf16.msra.mxu0 %v324
  %1770 = vmatprep.subr.bf16.mxu0 0
  %1771 = vmatpush1.bf16.msra.mxu0 %v299
  %1772 = vmatprep.subr.bf16.mxu0 0
  %1773 = vmatpush2.bf16.msra.mxu0 0
  %1774 = vmatprep.subr.bf16.mxu0 0
  %1775 = vmatpush2.bf16.msra.mxu0 0
  %1776 = vmatprep.subr.bf16.mxu0 0
  %1777 = vmatpush2.bf16.msra.mxu0 0
  %1778 = vmatprep.subr.bf16.mxu0 0
  %1779 = vmatpush2.bf16.msra.mxu0 0
  %1780 = vmatprep.subr.bf16.mxu0 0
  %1781 = vmatpush2.bf16.msra.mxu0 0
  %1782 = vmatprep.subr.bf16.mxu0 0
  %1783 = vmatpush2.bf16.msra.mxu0 0
  %1784 = vmatprep.subr.bf16.mxu0 0
  %1785 = vmatpush2.bf16.msra.mxu0 0
  %1786 = vmatprep.subr.bf16.mxu0 0
  %1787 = vmatpush2.bf16.msra.mxu0 0
  %1788 = vmatprep.mubr.bf16.mxu0 0
  %1789 = vmatmul.mubr.bf16.gmra.mxu0 %v377
  %v1790 = vpop.f32.mrf.mxu0
  %v1791 = vadd.f32 0.0, %v1790
  %v1792 = vpop.f32.mrf.mxu0
  %v1793 = vpop.f32.mrf.mxu0
  %v1794 = vadd.f32 0.0, %v1793
  %v1795 = vpop.f32.mrf.mxu0
  %1796 = vmatprep.mubr.bf16.mxu0 0
  %1797 = vmatmul.mubr.bf16.gmra.mxu0 %v380
  %v1798 = vpop.f32.mrf.mxu0
  %v1799 = vadd.f32 0.0, %v1798
  %v1800 = vpop.f32.mrf.mxu0
  %v1801 = vpop.f32.mrf.mxu0
  %v1802 = vadd.f32 0.0, %v1801
  %v1803 = vpop.f32.mrf.mxu0
  %1804 = vmatprep.mubr.bf16.mxu0 0
  %1805 = vmatmul.mubr.bf16.gmra.mxu0 %v383
  %v1806 = vpop.f32.mrf.mxu0
  %v1807 = vadd.f32 0.0, %v1806
  %v1808 = vpop.f32.mrf.mxu0
  %v1809 = vpop.f32.mrf.mxu0
  %v1810 = vadd.f32 0.0, %v1809
  %v1811 = vpop.f32.mrf.mxu0
  %1812 = vmatprep.mubr.bf16.mxu0 0
  %1813 = vmatmul.mubr.bf16.gmra.mxu0 %v386
  %v1814 = vpop.f32.mrf.mxu0
  %v1815 = vadd.f32 0.0, %v1814
  %v1816 = vpop.f32.mrf.mxu0
  %v1817 = vpop.f32.mrf.mxu0
  %v1818 = vadd.f32 0.0, %v1817
  %v1819 = vpop.f32.mrf.mxu0
  %1820 = vmatprep.mubr.bf16.mxu0 0
  %1821 = vmatmul.mubr.bf16.gmra.mxu0 %v389
  %v1822 = vpop.f32.mrf.mxu0
  %v1823 = vadd.f32 0.0, %v1822
  %v1824 = vpop.f32.mrf.mxu0
  %v1825 = vpop.f32.mrf.mxu0
  %v1826 = vadd.f32 0.0, %v1825
  %v1827 = vpop.f32.mrf.mxu0
  %1828 = vmatprep.mubr.bf16.mxu0 0
  %1829 = vmatmul.mubr.bf16.gmra.mxu0 %v392
  %v1830 = vpop.f32.mrf.mxu0
  %v1831 = vadd.f32 0.0, %v1830
  %v1832 = vpop.f32.mrf.mxu0
  %v1833 = vpop.f32.mrf.mxu0
  %v1834 = vadd.f32 0.0, %v1833
  %v1835 = vpop.f32.mrf.mxu0
  %1836 = vmatprep.mubr.bf16.mxu0 0
  %1837 = vmatmul.mubr.bf16.gmra.mxu0 %v395
  %v1838 = vpop.f32.mrf.mxu0
  %v1839 = vadd.f32 0.0, %v1838
  %v1840 = vpop.f32.mrf.mxu0
  %v1841 = vpop.f32.mrf.mxu0
  %v1842 = vadd.f32 0.0, %v1841
  %v1843 = vpop.f32.mrf.mxu0
  %1844 = vmatprep.mubr.bf16.mxu0 0
  %1845 = vmatmul.mubr.bf16.gmra.mxu0 %v398
  %v1846 = vpop.f32.mrf.mxu0
  %v1847 = vadd.f32 0.0, %v1846
  %v1848 = vpop.f32.mrf.mxu0
  %v1849 = vpop.f32.mrf.mxu0
  %v1850 = vadd.f32 0.0, %v1849
  %v1851 = vpop.f32.mrf.mxu0
  %1852 = vdwg.mxu0
  %v1853 = vld [vmem:[%s0] sm:$0xf]
  %v1854 = vld [vmem:[%s0 + $0x4] sm:$0xf]
  %v1855 = vld [vmem:[%s0 + $0x8] sm:$0xf]
  %v1856 = vld [vmem:[%s0 + $0xc] sm:$0xf]
  %v1857 = vld [vmem:[%s0 + $0x10] sm:$0xf]
  %v1858 = vld [vmem:[%s0 + $0x14] sm:$0xf]
  %v1859 = vld [vmem:[%s0 + $0x18] sm:$0xf]
  %v1860 = vld [vmem:[%s0 + $0x1c] sm:$0xf]
  %v1861 = vld [vmem:[%s0 + $0x20] sm:$0xf]
  %v1862 = vld [vmem:[%s0 + $0x24] sm:$0xf]
  %v1863 = vld [vmem:[%s0 + $0x28] sm:$0xf]
  %v1864 = vld [vmem:[%s0 + $0x2c] sm:$0xf]
  %v1865 = vld [vmem:[%s0 + $0x30] sm:$0xf]
  %v1866 = vld [vmem:[%s0 + $0x34] sm:$0xf]
  %v1867 = vld [vmem:[%s0 + $0x38] sm:$0xf]
  %v1868 = vld [vmem:[%s0 + $0x3c] sm:$0xf]
  %v1869 = vunpack.c.l.bf16 %v1853
  %v1870 = vunpack.c.l.bf16 %v1854
  %v1871 = vunpack.c.l.bf16 %v1855
  %v1872 = vunpack.c.l.bf16 %v1856
  %v1873 = vunpack.c.l.bf16 %v1857
  %v1874 = vunpack.c.l.bf16 %v1858
  %v1875 = vunpack.c.l.bf16 %v1859
  %v1876 = vunpack.c.l.bf16 %v1860
  %v1877 = vunpack.c.l.bf16 %v1861
  %v1878 = vunpack.c.l.bf16 %v1862
  %v1879 = vunpack.c.l.bf16 %v1863
  %v1880 = vunpack.c.l.bf16 %v1864
  %v1881 = vunpack.c.l.bf16 %v1865
  %v1882 = vunpack.c.l.bf16 %v1866
  %v1883 = vunpack.c.l.bf16 %v1867
  %v1884 = vunpack.c.l.bf16 %v1868
  %1886 = vset.pattern.permute.xlu0 0
  %1887 = vperm.xlu0 %1886, %v1869
  %v1888 = vpop.permute.xlu0 %1887
  %1891 = vset.pattern.permute.xlu0 0
  %1892 = vperm.xlu0 %1891, %v1870
  %v1893 = vpop.permute.xlu0 %1892
  %1896 = vset.pattern.permute.xlu0 0
  %1897 = vperm.xlu0 %1896, %v1871
  %v1898 = vpop.permute.xlu0 %1897
  %1901 = vset.pattern.permute.xlu0 0
  %1902 = vperm.xlu0 %1901, %v1872
  %v1903 = vpop.permute.xlu0 %1902
  %1906 = vset.pattern.permute.xlu0 0
  %1907 = vperm.xlu0 %1906, %v1873
  %v1908 = vpop.permute.xlu0 %1907
  %1911 = vset.pattern.permute.xlu0 0
  %1912 = vperm.xlu0 %1911, %v1874
  %v1913 = vpop.permute.xlu0 %1912
  %1916 = vset.pattern.permute.xlu0 0
  %1917 = vperm.xlu0 %1916, %v1875
  %v1918 = vpop.permute.xlu0 %1917
  %1921 = vset.pattern.permute.xlu0 0
  %1922 = vperm.xlu0 %1921, %v1876
  %v1923 = vpop.permute.xlu0 %1922
  %1926 = vset.pattern.permute.xlu0 0
  %1927 = vperm.xlu0 %1926, %v1877
  %v1928 = vpop.permute.xlu0 %1927
  %1931 = vset.pattern.permute.xlu0 0
  %1932 = vperm.xlu0 %1931, %v1878
  %v1933 = vpop.permute.xlu0 %1932
  %1936 = vset.pattern.permute.xlu0 0
  %1937 = vperm.xlu0 %1936, %v1879
  %v1938 = vpop.permute.xlu0 %1937
  %1941 = vset.pattern.permute.xlu0 0
  %1942 = vperm.xlu0 %1941, %v1880
  %v1943 = vpop.permute.xlu0 %1942
  %1946 = vset.pattern.permute.xlu0 0
  %1947 = vperm.xlu0 %1946, %v1881
  %v1948 = vpop.permute.xlu0 %1947
  %1951 = vset.pattern.permute.xlu0 0
  %1952 = vperm.xlu0 %1951, %v1882
  %v1953 = vpop.permute.xlu0 %1952
  %1956 = vset.pattern.permute.xlu0 0
  %1957 = vperm.xlu0 %1956, %v1883
  %v1958 = vpop.permute.xlu0 %1957
  %1961 = vset.pattern.permute.xlu0 0
  %1962 = vperm.xlu0 %1961, %v1884
  %v1963 = vpop.permute.xlu0 %1962
  %v1965 = vmul.f32 %v1888, %v435
  %v1966 = vmul.f32 %v1893, %v439
  %v1967 = vmul.f32 %v1898, %v445
  %v1968 = vmul.f32 %v1903, %v449
  %v1969 = vmul.f32 %v1908, %v455
  %v1970 = vmul.f32 %v1913, %v459
  %v1971 = vmul.f32 %v1918, %v465
  %v1972 = vmul.f32 %v1923, %v469
  %v1973 = vmul.f32 %v1928, %v475
  %v1974 = vmul.f32 %v1933, %v479
  %v1975 = vmul.f32 %v1938, %v485
  %v1976 = vmul.f32 %v1943, %v489
  %v1977 = vmul.f32 %v1948, %v495
  %v1978 = vmul.f32 %v1953, %v499
  %v1979 = vmul.f32 %v1958, %v505
  %v1980 = vmul.f32 %v1963, %v509
  %1981 = vset.pattern.permute.xlu0 1
  %1982 = vperm.xlu0 %1981, %v1869
  %v1983 = vpop.permute.xlu0 %1982
  %1985 = vset.pattern.permute.xlu0 1
  %1986 = vperm.xlu0 %1985, %v1870
  %v1987 = vpop.permute.xlu0 %1986
  %1989 = vset.pattern.permute.xlu0 1
  %1990 = vperm.xlu0 %1989, %v1871
  %v1991 = vpop.permute.xlu0 %1990
  %1993 = vset.pattern.permute.xlu0 1
  %1994 = vperm.xlu0 %1993, %v1872
  %v1995 = vpop.permute.xlu0 %1994
  %1997 = vset.pattern.permute.xlu0 1
  %1998 = vperm.xlu0 %1997, %v1873
  %v1999 = vpop.permute.xlu0 %1998
  %2001 = vset.pattern.permute.xlu0 1
  %2002 = vperm.xlu0 %2001, %v1874
  %v2003 = vpop.permute.xlu0 %2002
  %2005 = vset.pattern.permute.xlu0 1
  %2006 = vperm.xlu0 %2005, %v1875
  %v2007 = vpop.permute.xlu0 %2006
  %2009 = vset.pattern.permute.xlu0 1
  %2010 = vperm.xlu0 %2009, %v1876
  %v2011 = vpop.permute.xlu0 %2010
  %2013 = vset.pattern.permute.xlu0 1
  %2014 = vperm.xlu0 %2013, %v1877
  %v2015 = vpop.permute.xlu0 %2014
  %2017 = vset.pattern.permute.xlu0 1
  %2018 = vperm.xlu0 %2017, %v1878
  %v2019 = vpop.permute.xlu0 %2018
  %2021 = vset.pattern.permute.xlu0 1
  %2022 = vperm.xlu0 %2021, %v1879
  %v2023 = vpop.permute.xlu0 %2022
  %2025 = vset.pattern.permute.xlu0 1
  %2026 = vperm.xlu0 %2025, %v1880
  %v2027 = vpop.permute.xlu0 %2026
  %2029 = vset.pattern.permute.xlu0 1
  %2030 = vperm.xlu0 %2029, %v1881
  %v2031 = vpop.permute.xlu0 %2030
  %2033 = vset.pattern.permute.xlu0 1
  %2034 = vperm.xlu0 %2033, %v1882
  %v2035 = vpop.permute.xlu0 %2034
  %2037 = vset.pattern.permute.xlu0 1
  %2038 = vperm.xlu0 %2037, %v1883
  %v2039 = vpop.permute.xlu0 %2038
  %2041 = vset.pattern.permute.xlu0 1
  %2042 = vperm.xlu0 %2041, %v1884
  %v2043 = vpop.permute.xlu0 %2042
  %v2045 = vmul.f32 %v1983, %v437
  %v2046 = vmul.f32 %v1987, %v441
  %v2047 = vmul.f32 %v1991, %v447
  %v2048 = vmul.f32 %v1995, %v451
  %v2049 = vmul.f32 %v1999, %v457
  %v2050 = vmul.f32 %v2003, %v461
  %v2051 = vmul.f32 %v2007, %v467
  %v2052 = vmul.f32 %v2011, %v471
  %v2053 = vmul.f32 %v2015, %v477
  %v2054 = vmul.f32 %v2019, %v481
  %v2055 = vmul.f32 %v2023, %v487
  %v2056 = vmul.f32 %v2027, %v491
  %v2057 = vmul.f32 %v2031, %v497
  %v2058 = vmul.f32 %v2035, %v501
  %v2059 = vmul.f32 %v2039, %v507
  %v2060 = vmul.f32 %v2043, %v511
  %v2061 = vadd.f32 %v1965, %v2045
  %v2062 = vadd.f32 %v1966, %v2046
  %v2063 = vadd.f32 %v1967, %v2047
  %v2064 = vadd.f32 %v1968, %v2048
  %v2065 = vadd.f32 %v1969, %v2049
  %v2066 = vadd.f32 %v1970, %v2050
  %v2067 = vadd.f32 %v1971, %v2051
  %v2068 = vadd.f32 %v1972, %v2052
  %v2069 = vadd.f32 %v1973, %v2053
  %v2070 = vadd.f32 %v1974, %v2054
  %v2071 = vadd.f32 %v1975, %v2055
  %v2072 = vadd.f32 %v1976, %v2056
  %v2073 = vadd.f32 %v1977, %v2057
  %v2074 = vadd.f32 %v1978, %v2058
  %v2075 = vadd.f32 %v1979, %v2059
  %v2076 = vadd.f32 %v1980, %v2060
  %2077 = vset.pattern.permute.xlu0 2
  %2078 = vperm.xlu0 %2077, %v1869
  %v2079 = vpop.permute.xlu0 %2078
  %2081 = vset.pattern.permute.xlu0 2
  %2082 = vperm.xlu0 %2081, %v1870
  %v2083 = vpop.permute.xlu0 %2082
  %2085 = vset.pattern.permute.xlu0 2
  %2086 = vperm.xlu0 %2085, %v1871
  %v2087 = vpop.permute.xlu0 %2086
  %2089 = vset.pattern.permute.xlu0 2
  %2090 = vperm.xlu0 %2089, %v1872
  %v2091 = vpop.permute.xlu0 %2090
  %2093 = vset.pattern.permute.xlu0 2
  %2094 = vperm.xlu0 %2093, %v1873
  %v2095 = vpop.permute.xlu0 %2094
  %2097 = vset.pattern.permute.xlu0 2
  %2098 = vperm.xlu0 %2097, %v1874
  %v2099 = vpop.permute.xlu0 %2098
  %2101 = vset.pattern.permute.xlu0 2
  %2102 = vperm.xlu0 %2101, %v1875
  %v2103 = vpop.permute.xlu0 %2102
  %2105 = vset.pattern.permute.xlu0 2
  %2106 = vperm.xlu0 %2105, %v1876
  %v2107 = vpop.permute.xlu0 %2106
  %2109 = vset.pattern.permute.xlu0 2
  %2110 = vperm.xlu0 %2109, %v1877
  %v2111 = vpop.permute.xlu0 %2110
  %2113 = vset.pattern.permute.xlu0 2
  %2114 = vperm.xlu0 %2113, %v1878
  %v2115 = vpop.permute.xlu0 %2114
  %2117 = vset.pattern.permute.xlu0 2
  %2118 = vperm.xlu0 %2117, %v1879
  %v2119 = vpop.permute.xlu0 %2118
  %2121 = vset.pattern.permute.xlu0 2
  %2122 = vperm.xlu0 %2121, %v1880
  %v2123 = vpop.permute.xlu0 %2122
  %2125 = vset.pattern.permute.xlu0 2
  %2126 = vperm.xlu0 %2125, %v1881
  %v2127 = vpop.permute.xlu0 %2126
  %2129 = vset.pattern.permute.xlu0 2
  %2130 = vperm.xlu0 %2129, %v1882
  %v2131 = vpop.permute.xlu0 %2130
  %2133 = vset.pattern.permute.xlu0 2
  %2134 = vperm.xlu0 %2133, %v1883
  %v2135 = vpop.permute.xlu0 %2134
  %2137 = vset.pattern.permute.xlu0 2
  %2138 = vperm.xlu0 %2137, %v1884
  %v2139 = vpop.permute.xlu0 %2138
  %v2141 = vmul.f32 %v2079, %v548
  %v2142 = vmul.f32 %v2083, %v552
  %v2143 = vmul.f32 %v2087, %v558
  %v2144 = vmul.f32 %v2091, %v562
  %v2145 = vmul.f32 %v2095, %v568
  %v2146 = vmul.f32 %v2099, %v572
  %v2147 = vmul.f32 %v2103, %v578
  %v2148 = vmul.f32 %v2107, %v582
  %v2149 = vmul.f32 %v2111, %v588
  %v2150 = vmul.f32 %v2115, %v592
  %v2151 = vmul.f32 %v2119, %v598
  %v2152 = vmul.f32 %v2123, %v602
  %v2153 = vmul.f32 %v2127, %v608
  %v2154 = vmul.f32 %v2131, %v612
  %v2155 = vmul.f32 %v2135, %v618
  %v2156 = vmul.f32 %v2139, %v622
  %v2157 = vadd.f32 %v2061, %v2141
  %v2158 = vadd.f32 %v2062, %v2142
  %v2159 = vadd.f32 %v2063, %v2143
  %v2160 = vadd.f32 %v2064, %v2144
  %v2161 = vadd.f32 %v2065, %v2145
  %v2162 = vadd.f32 %v2066, %v2146
  %v2163 = vadd.f32 %v2067, %v2147
  %v2164 = vadd.f32 %v2068, %v2148
  %v2165 = vadd.f32 %v2069, %v2149
  %v2166 = vadd.f32 %v2070, %v2150
  %v2167 = vadd.f32 %v2071, %v2151
  %v2168 = vadd.f32 %v2072, %v2152
  %v2169 = vadd.f32 %v2073, %v2153
  %v2170 = vadd.f32 %v2074, %v2154
  %v2171 = vadd.f32 %v2075, %v2155
  %v2172 = vadd.f32 %v2076, %v2156
  %2173 = vset.pattern.permute.xlu0 3
  %2174 = vperm.xlu0 %2173, %v1869
  %v2175 = vpop.permute.xlu0 %2174
  %2177 = vset.pattern.permute.xlu0 3
  %2178 = vperm.xlu0 %2177, %v1870
  %v2179 = vpop.permute.xlu0 %2178
  %2181 = vset.pattern.permute.xlu0 3
  %2182 = vperm.xlu0 %2181, %v1871
  %v2183 = vpop.permute.xlu0 %2182
  %2185 = vset.pattern.permute.xlu0 3
  %2186 = vperm.xlu0 %2185, %v1872
  %v2187 = vpop.permute.xlu0 %2186
  %2189 = vset.pattern.permute.xlu0 3
  %2190 = vperm.xlu0 %2189, %v1873
  %v2191 = vpop.permute.xlu0 %2190
  %2193 = vset.pattern.permute.xlu0 3
  %2194 = vperm.xlu0 %2193, %v1874
  %v2195 = vpop.permute.xlu0 %2194
  %2197 = vset.pattern.permute.xlu0 3
  %2198 = vperm.xlu0 %2197, %v1875
  %v2199 = vpop.permute.xlu0 %2198
  %2201 = vset.pattern.permute.xlu0 3
  %2202 = vperm.xlu0 %2201, %v1876
  %v2203 = vpop.permute.xlu0 %2202
  %2205 = vset.pattern.permute.xlu0 3
  %2206 = vperm.xlu0 %2205, %v1877
  %v2207 = vpop.permute.xlu0 %2206
  %2209 = vset.pattern.permute.xlu0 3
  %2210 = vperm.xlu0 %2209, %v1878
  %v2211 = vpop.permute.xlu0 %2210
  %2213 = vset.pattern.permute.xlu0 3
  %2214 = vperm.xlu0 %2213, %v1879
  %v2215 = vpop.permute.xlu0 %2214
  %2217 = vset.pattern.permute.xlu0 3
  %2218 = vperm.xlu0 %2217, %v1880
  %v2219 = vpop.permute.xlu0 %2218
  %2221 = vset.pattern.permute.xlu0 3
  %2222 = vperm.xlu0 %2221, %v1881
  %v2223 = vpop.permute.xlu0 %2222
  %2225 = vset.pattern.permute.xlu0 3
  %2226 = vperm.xlu0 %2225, %v1882
  %v2227 = vpop.permute.xlu0 %2226
  %2229 = vset.pattern.permute.xlu0 3
  %2230 = vperm.xlu0 %2229, %v1883
  %v2231 = vpop.permute.xlu0 %2230
  %2233 = vset.pattern.permute.xlu0 3
  %2234 = vperm.xlu0 %2233, %v1884
  %v2235 = vpop.permute.xlu0 %2234
  %v2237 = vmul.f32 %v2175, %v550
  %v2238 = vmul.f32 %v2179, %v554
  %v2239 = vmul.f32 %v2183, %v560
  %v2240 = vmul.f32 %v2187, %v564
  %v2241 = vmul.f32 %v2191, %v570
  %v2242 = vmul.f32 %v2195, %v574
  %v2243 = vmul.f32 %v2199, %v580
  %v2244 = vmul.f32 %v2203, %v584
  %v2245 = vmul.f32 %v2207, %v590
  %v2246 = vmul.f32 %v2211, %v594
  %v2247 = vmul.f32 %v2215, %v600
  %v2248 = vmul.f32 %v2219, %v604
  %v2249 = vmul.f32 %v2223, %v610
  %v2250 = vmul.f32 %v2227, %v614
  %v2251 = vmul.f32 %v2231, %v620
  %v2252 = vmul.f32 %v2235, %v624
  %v2253 = vadd.f32 %v2157, %v2237
  %v2254 = vadd.f32 %v2158, %v2238
  %v2255 = vadd.f32 %v2159, %v2239
  %v2256 = vadd.f32 %v2160, %v2240
  %v2257 = vadd.f32 %v2161, %v2241
  %v2258 = vadd.f32 %v2162, %v2242
  %v2259 = vadd.f32 %v2163, %v2243
  %v2260 = vadd.f32 %v2164, %v2244
  %v2261 = vadd.f32 %v2165, %v2245
  %v2262 = vadd.f32 %v2166, %v2246
  %v2263 = vadd.f32 %v2167, %v2247
  %v2264 = vadd.f32 %v2168, %v2248
  %v2265 = vadd.f32 %v2169, %v2249
  %v2266 = vadd.f32 %v2170, %v2250
  %v2267 = vadd.f32 %v2171, %v2251
  %v2268 = vadd.f32 %v2172, %v2252
  %2269 = vset.pattern.permute.xlu0 4
  %2270 = vperm.xlu0 %2269, %v1869
  %v2271 = vpop.permute.xlu0 %2270
  %2273 = vset.pattern.permute.xlu0 4
  %2274 = vperm.xlu0 %2273, %v1870
  %v2275 = vpop.permute.xlu0 %2274
  %2277 = vset.pattern.permute.xlu0 4
  %2278 = vperm.xlu0 %2277, %v1871
  %v2279 = vpop.permute.xlu0 %2278
  %2281 = vset.pattern.permute.xlu0 4
  %2282 = vperm.xlu0 %2281, %v1872
  %v2283 = vpop.permute.xlu0 %2282
  %2285 = vset.pattern.permute.xlu0 4
  %2286 = vperm.xlu0 %2285, %v1873
  %v2287 = vpop.permute.xlu0 %2286
  %2289 = vset.pattern.permute.xlu0 4
  %2290 = vperm.xlu0 %2289, %v1874
  %v2291 = vpop.permute.xlu0 %2290
  %2293 = vset.pattern.permute.xlu0 4
  %2294 = vperm.xlu0 %2293, %v1875
  %v2295 = vpop.permute.xlu0 %2294
  %2297 = vset.pattern.permute.xlu0 4
  %2298 = vperm.xlu0 %2297, %v1876
  %v2299 = vpop.permute.xlu0 %2298
  %2301 = vset.pattern.permute.xlu0 4
  %2302 = vperm.xlu0 %2301, %v1877
  %v2303 = vpop.permute.xlu0 %2302
  %2305 = vset.pattern.permute.xlu0 4
  %2306 = vperm.xlu0 %2305, %v1878
  %v2307 = vpop.permute.xlu0 %2306
  %2309 = vset.pattern.permute.xlu0 4
  %2310 = vperm.xlu0 %2309, %v1879
  %v2311 = vpop.permute.xlu0 %2310
  %2313 = vset.pattern.permute.xlu0 4
  %2314 = vperm.xlu0 %2313, %v1880
  %v2315 = vpop.permute.xlu0 %2314
  %2317 = vset.pattern.permute.xlu0 4
  %2318 = vperm.xlu0 %2317, %v1881
  %v2319 = vpop.permute.xlu0 %2318
  %2321 = vset.pattern.permute.xlu0 4
  %2322 = vperm.xlu0 %2321, %v1882
  %v2323 = vpop.permute.xlu0 %2322
  %2325 = vset.pattern.permute.xlu0 4
  %2326 = vperm.xlu0 %2325, %v1883
  %v2327 = vpop.permute.xlu0 %2326
  %2329 = vset.pattern.permute.xlu0 4
  %2330 = vperm.xlu0 %2329, %v1884
  %v2331 = vpop.permute.xlu0 %2330
  %v2333 = vmul.f32 %v2271, %v661
  %v2334 = vmul.f32 %v2275, %v665
  %v2335 = vmul.f32 %v2279, %v671
  %v2336 = vmul.f32 %v2283, %v675
  %v2337 = vmul.f32 %v2287, %v681
  %v2338 = vmul.f32 %v2291, %v685
  %v2339 = vmul.f32 %v2295, %v691
  %v2340 = vmul.f32 %v2299, %v695
  %v2341 = vmul.f32 %v2303, %v701
  %v2342 = vmul.f32 %v2307, %v705
  %v2343 = vmul.f32 %v2311, %v711
  %v2344 = vmul.f32 %v2315, %v715
  %v2345 = vmul.f32 %v2319, %v721
  %v2346 = vmul.f32 %v2323, %v725
  %v2347 = vmul.f32 %v2327, %v731
  %v2348 = vmul.f32 %v2331, %v735
  %v2349 = vadd.f32 %v2253, %v2333
  %v2350 = vadd.f32 %v2254, %v2334
  %v2351 = vadd.f32 %v2255, %v2335
  %v2352 = vadd.f32 %v2256, %v2336
  %v2353 = vadd.f32 %v2257, %v2337
  %v2354 = vadd.f32 %v2258, %v2338
  %v2355 = vadd.f32 %v2259, %v2339
  %v2356 = vadd.f32 %v2260, %v2340
  %v2357 = vadd.f32 %v2261, %v2341
  %v2358 = vadd.f32 %v2262, %v2342
  %v2359 = vadd.f32 %v2263, %v2343
  %v2360 = vadd.f32 %v2264, %v2344
  %v2361 = vadd.f32 %v2265, %v2345
  %v2362 = vadd.f32 %v2266, %v2346
  %v2363 = vadd.f32 %v2267, %v2347
  %v2364 = vadd.f32 %v2268, %v2348
  %2365 = vset.pattern.permute.xlu0 5
  %2366 = vperm.xlu0 %2365, %v1869
  %v2367 = vpop.permute.xlu0 %2366
  %2369 = vset.pattern.permute.xlu0 5
  %2370 = vperm.xlu0 %2369, %v1870
  %v2371 = vpop.permute.xlu0 %2370
  %2373 = vset.pattern.permute.xlu0 5
  %2374 = vperm.xlu0 %2373, %v1871
  %v2375 = vpop.permute.xlu0 %2374
  %2377 = vset.pattern.permute.xlu0 5
  %2378 = vperm.xlu0 %2377, %v1872
  %v2379 = vpop.permute.xlu0 %2378
  %2381 = vset.pattern.permute.xlu0 5
  %2382 = vperm.xlu0 %2381, %v1873
  %v2383 = vpop.permute.xlu0 %2382
  %2385 = vset.pattern.permute.xlu0 5
  %2386 = vperm.xlu0 %2385, %v1874
  %v2387 = vpop.permute.xlu0 %2386
  %2389 = vset.pattern.permute.xlu0 5
  %2390 = vperm.xlu0 %2389, %v1875
  %v2391 = vpop.permute.xlu0 %2390
  %2393 = vset.pattern.permute.xlu0 5
  %2394 = vperm.xlu0 %2393, %v1876
  %v2395 = vpop.permute.xlu0 %2394
  %2397 = vset.pattern.permute.xlu0 5
  %2398 = vperm.xlu0 %2397, %v1877
  %v2399 = vpop.permute.xlu0 %2398
  %2401 = vset.pattern.permute.xlu0 5
  %2402 = vperm.xlu0 %2401, %v1878
  %v2403 = vpop.permute.xlu0 %2402
  %2405 = vset.pattern.permute.xlu0 5
  %2406 = vperm.xlu0 %2405, %v1879
  %v2407 = vpop.permute.xlu0 %2406
  %2409 = vset.pattern.permute.xlu0 5
  %2410 = vperm.xlu0 %2409, %v1880
  %v2411 = vpop.permute.xlu0 %2410
  %2413 = vset.pattern.permute.xlu0 5
  %2414 = vperm.xlu0 %2413, %v1881
  %v2415 = vpop.permute.xlu0 %2414
  %2417 = vset.pattern.permute.xlu0 5
  %2418 = vperm.xlu0 %2417, %v1882
  %v2419 = vpop.permute.xlu0 %2418
  %2421 = vset.pattern.permute.xlu0 5
  %2422 = vperm.xlu0 %2421, %v1883
  %v2423 = vpop.permute.xlu0 %2422
  %2425 = vset.pattern.permute.xlu0 5
  %2426 = vperm.xlu0 %2425, %v1884
  %v2427 = vpop.permute.xlu0 %2426
  %v2429 = vmul.f32 %v2367, %v663
  %v2430 = vmul.f32 %v2371, %v667
  %v2431 = vmul.f32 %v2375, %v673
  %v2432 = vmul.f32 %v2379, %v677
  %v2433 = vmul.f32 %v2383, %v683
  %v2434 = vmul.f32 %v2387, %v687
  %v2435 = vmul.f32 %v2391, %v693
  %v2436 = vmul.f32 %v2395, %v697
  %v2437 = vmul.f32 %v2399, %v703
  %v2438 = vmul.f32 %v2403, %v707
  %v2439 = vmul.f32 %v2407, %v713
  %v2440 = vmul.f32 %v2411, %v717
  %v2441 = vmul.f32 %v2415, %v723
  %v2442 = vmul.f32 %v2419, %v727
  %v2443 = vmul.f32 %v2423, %v733
  %v2444 = vmul.f32 %v2427, %v737
  %v2445 = vadd.f32 %v2349, %v2429
  %v2446 = vadd.f32 %v2350, %v2430
  %v2447 = vadd.f32 %v2351, %v2431
  %v2448 = vadd.f32 %v2352, %v2432
  %v2449 = vadd.f32 %v2353, %v2433
  %v2450 = vadd.f32 %v2354, %v2434
  %v2451 = vadd.f32 %v2355, %v2435
  %v2452 = vadd.f32 %v2356, %v2436
  %v2453 = vadd.f32 %v2357, %v2437
  %v2454 = vadd.f32 %v2358, %v2438
  %v2455 = vadd.f32 %v2359, %v2439
  %v2456 = vadd.f32 %v2360, %v2440
  %v2457 = vadd.f32 %v2361, %v2441
  %v2458 = vadd.f32 %v2362, %v2442
  %v2459 = vadd.f32 %v2363, %v2443
  %v2460 = vadd.f32 %v2364, %v2444
  %2461 = vset.pattern.permute.xlu0 6
  %2462 = vperm.xlu0 %2461, %v1869
  %v2463 = vpop.permute.xlu0 %2462
  %2465 = vset.pattern.permute.xlu0 6
  %2466 = vperm.xlu0 %2465, %v1870
  %v2467 = vpop.permute.xlu0 %2466
  %2469 = vset.pattern.permute.xlu0 6
  %2470 = vperm.xlu0 %2469, %v1871
  %v2471 = vpop.permute.xlu0 %2470
  %2473 = vset.pattern.permute.xlu0 6
  %2474 = vperm.xlu0 %2473, %v1872
  %v2475 = vpop.permute.xlu0 %2474
  %2477 = vset.pattern.permute.xlu0 6
  %2478 = vperm.xlu0 %2477, %v1873
  %v2479 = vpop.permute.xlu0 %2478
  %2481 = vset.pattern.permute.xlu0 6
  %2482 = vperm.xlu0 %2481, %v1874
  %v2483 = vpop.permute.xlu0 %2482
  %2485 = vset.pattern.permute.xlu0 6
  %2486 = vperm.xlu0 %2485, %v1875
  %v2487 = vpop.permute.xlu0 %2486
  %2489 = vset.pattern.permute.xlu0 6
  %2490 = vperm.xlu0 %2489, %v1876
  %v2491 = vpop.permute.xlu0 %2490
  %2493 = vset.pattern.permute.xlu0 6
  %2494 = vperm.xlu0 %2493, %v1877
  %v2495 = vpop.permute.xlu0 %2494
  %2497 = vset.pattern.permute.xlu0 6
  %2498 = vperm.xlu0 %2497, %v1878
  %v2499 = vpop.permute.xlu0 %2498
  %2501 = vset.pattern.permute.xlu0 6
  %2502 = vperm.xlu0 %2501, %v1879
  %v2503 = vpop.permute.xlu0 %2502
  %2505 = vset.pattern.permute.xlu0 6
  %2506 = vperm.xlu0 %2505, %v1880
  %v2507 = vpop.permute.xlu0 %2506
  %2509 = vset.pattern.permute.xlu0 6
  %2510 = vperm.xlu0 %2509, %v1881
  %v2511 = vpop.permute.xlu0 %2510
  %2513 = vset.pattern.permute.xlu0 6
  %2514 = vperm.xlu0 %2513, %v1882
  %v2515 = vpop.permute.xlu0 %2514
  %2517 = vset.pattern.permute.xlu0 6
  %2518 = vperm.xlu0 %2517, %v1883
  %v2519 = vpop.permute.xlu0 %2518
  %2521 = vset.pattern.permute.xlu0 6
  %2522 = vperm.xlu0 %2521, %v1884
  %v2523 = vpop.permute.xlu0 %2522
  %v2525 = vmul.f32 %v2463, %v774
  %v2526 = vmul.f32 %v2467, %v778
  %v2527 = vmul.f32 %v2471, %v784
  %v2528 = vmul.f32 %v2475, %v788
  %v2529 = vmul.f32 %v2479, %v794
  %v2530 = vmul.f32 %v2483, %v798
  %v2531 = vmul.f32 %v2487, %v804
  %v2532 = vmul.f32 %v2491, %v808
  %v2533 = vmul.f32 %v2495, %v814
  %v2534 = vmul.f32 %v2499, %v818
  %v2535 = vmul.f32 %v2503, %v824
  %v2536 = vmul.f32 %v2507, %v828
  %v2537 = vmul.f32 %v2511, %v834
  %v2538 = vmul.f32 %v2515, %v838
  %v2539 = vmul.f32 %v2519, %v844
  %v2540 = vmul.f32 %v2523, %v848
  %v2541 = vadd.f32 %v2445, %v2525
  %v2542 = vadd.f32 %v2446, %v2526
  %v2543 = vadd.f32 %v2447, %v2527
  %v2544 = vadd.f32 %v2448, %v2528
  %v2545 = vadd.f32 %v2449, %v2529
  %v2546 = vadd.f32 %v2450, %v2530
  %v2547 = vadd.f32 %v2451, %v2531
  %v2548 = vadd.f32 %v2452, %v2532
  %v2549 = vadd.f32 %v2453, %v2533
  %v2550 = vadd.f32 %v2454, %v2534
  %v2551 = vadd.f32 %v2455, %v2535
  %v2552 = vadd.f32 %v2456, %v2536
  %v2553 = vadd.f32 %v2457, %v2537
  %v2554 = vadd.f32 %v2458, %v2538
  %v2555 = vadd.f32 %v2459, %v2539
  %v2556 = vadd.f32 %v2460, %v2540
  %2557 = vset.pattern.permute.xlu0 7
  %2558 = vperm.xlu0 %2557, %v1869
  %v2559 = vpop.permute.xlu0 %2558
  %2561 = vset.pattern.permute.xlu0 7
  %2562 = vperm.xlu0 %2561, %v1870
  %v2563 = vpop.permute.xlu0 %2562
  %2565 = vset.pattern.permute.xlu0 7
  %2566 = vperm.xlu0 %2565, %v1871
  %v2567 = vpop.permute.xlu0 %2566
  %2569 = vset.pattern.permute.xlu0 7
  %2570 = vperm.xlu0 %2569, %v1872
  %v2571 = vpop.permute.xlu0 %2570
  %2573 = vset.pattern.permute.xlu0 7
  %2574 = vperm.xlu0 %2573, %v1873
  %v2575 = vpop.permute.xlu0 %2574
  %2577 = vset.pattern.permute.xlu0 7
  %2578 = vperm.xlu0 %2577, %v1874
  %v2579 = vpop.permute.xlu0 %2578
  %2581 = vset.pattern.permute.xlu0 7
  %2582 = vperm.xlu0 %2581, %v1875
  %v2583 = vpop.permute.xlu0 %2582
  %2585 = vset.pattern.permute.xlu0 7
  %2586 = vperm.xlu0 %2585, %v1876
  %v2587 = vpop.permute.xlu0 %2586
  %2589 = vset.pattern.permute.xlu0 7
  %2590 = vperm.xlu0 %2589, %v1877
  %v2591 = vpop.permute.xlu0 %2590
  %2593 = vset.pattern.permute.xlu0 7
  %2594 = vperm.xlu0 %2593, %v1878
  %v2595 = vpop.permute.xlu0 %2594
  %2597 = vset.pattern.permute.xlu0 7
  %2598 = vperm.xlu0 %2597, %v1879
  %v2599 = vpop.permute.xlu0 %2598
  %2601 = vset.pattern.permute.xlu0 7
  %2602 = vperm.xlu0 %2601, %v1880
  %v2603 = vpop.permute.xlu0 %2602
  %2605 = vset.pattern.permute.xlu0 7
  %2606 = vperm.xlu0 %2605, %v1881
  %v2607 = vpop.permute.xlu0 %2606
  %2609 = vset.pattern.permute.xlu0 7
  %2610 = vperm.xlu0 %2609, %v1882
  %v2611 = vpop.permute.xlu0 %2610
  %2613 = vset.pattern.permute.xlu0 7
  %2614 = vperm.xlu0 %2613, %v1883
  %v2615 = vpop.permute.xlu0 %2614
  %2617 = vset.pattern.permute.xlu0 7
  %2618 = vperm.xlu0 %2617, %v1884
  %v2619 = vpop.permute.xlu0 %2618
  %v2621 = vmul.f32 %v2559, %v776
  %v2622 = vmul.f32 %v2563, %v780
  %v2623 = vmul.f32 %v2567, %v786
  %v2624 = vmul.f32 %v2571, %v790
  %v2625 = vmul.f32 %v2575, %v796
  %v2626 = vmul.f32 %v2579, %v800
  %v2627 = vmul.f32 %v2583, %v806
  %v2628 = vmul.f32 %v2587, %v810
  %v2629 = vmul.f32 %v2591, %v816
  %v2630 = vmul.f32 %v2595, %v820
  %v2631 = vmul.f32 %v2599, %v826
  %v2632 = vmul.f32 %v2603, %v830
  %v2633 = vmul.f32 %v2607, %v836
  %v2634 = vmul.f32 %v2611, %v840
  %v2635 = vmul.f32 %v2615, %v846
  %v2636 = vmul.f32 %v2619, %v850
  %v2637 = vadd.f32 %v2541, %v2621
  %v2638 = vadd.f32 %v2542, %v2622
  %v2639 = vadd.f32 %v2543, %v2623
  %v2640 = vadd.f32 %v2544, %v2624
  %v2641 = vadd.f32 %v2545, %v2625
  %v2642 = vadd.f32 %v2546, %v2626
  %v2643 = vadd.f32 %v2547, %v2627
  %v2644 = vadd.f32 %v2548, %v2628
  %v2645 = vadd.f32 %v2549, %v2629
  %v2646 = vadd.f32 %v2550, %v2630
  %v2647 = vadd.f32 %v2551, %v2631
  %v2648 = vadd.f32 %v2552, %v2632
  %v2649 = vadd.f32 %v2553, %v2633
  %v2650 = vadd.f32 %v2554, %v2634
  %v2651 = vadd.f32 %v2555, %v2635
  %v2652 = vadd.f32 %v2556, %v2636
  %2653 = vset.pattern.permute.xlu0 8
  %2654 = vperm.xlu0 %2653, %v1869
  %v2655 = vpop.permute.xlu0 %2654
  %2657 = vset.pattern.permute.xlu0 8
  %2658 = vperm.xlu0 %2657, %v1870
  %v2659 = vpop.permute.xlu0 %2658
  %2661 = vset.pattern.permute.xlu0 8
  %2662 = vperm.xlu0 %2661, %v1871
  %v2663 = vpop.permute.xlu0 %2662
  %2665 = vset.pattern.permute.xlu0 8
  %2666 = vperm.xlu0 %2665, %v1872
  %v2667 = vpop.permute.xlu0 %2666
  %2669 = vset.pattern.permute.xlu0 8
  %2670 = vperm.xlu0 %2669, %v1873
  %v2671 = vpop.permute.xlu0 %2670
  %2673 = vset.pattern.permute.xlu0 8
  %2674 = vperm.xlu0 %2673, %v1874
  %v2675 = vpop.permute.xlu0 %2674
  %2677 = vset.pattern.permute.xlu0 8
  %2678 = vperm.xlu0 %2677, %v1875
  %v2679 = vpop.permute.xlu0 %2678
  %2681 = vset.pattern.permute.xlu0 8
  %2682 = vperm.xlu0 %2681, %v1876
  %v2683 = vpop.permute.xlu0 %2682
  %2685 = vset.pattern.permute.xlu0 8
  %2686 = vperm.xlu0 %2685, %v1877
  %v2687 = vpop.permute.xlu0 %2686
  %2689 = vset.pattern.permute.xlu0 8
  %2690 = vperm.xlu0 %2689, %v1878
  %v2691 = vpop.permute.xlu0 %2690
  %2693 = vset.pattern.permute.xlu0 8
  %2694 = vperm.xlu0 %2693, %v1879
  %v2695 = vpop.permute.xlu0 %2694
  %2697 = vset.pattern.permute.xlu0 8
  %2698 = vperm.xlu0 %2697, %v1880
  %v2699 = vpop.permute.xlu0 %2698
  %2701 = vset.pattern.permute.xlu0 8
  %2702 = vperm.xlu0 %2701, %v1881
  %v2703 = vpop.permute.xlu0 %2702
  %2705 = vset.pattern.permute.xlu0 8
  %2706 = vperm.xlu0 %2705, %v1882
  %v2707 = vpop.permute.xlu0 %2706
  %2709 = vset.pattern.permute.xlu0 8
  %2710 = vperm.xlu0 %2709, %v1883
  %v2711 = vpop.permute.xlu0 %2710
  %2713 = vset.pattern.permute.xlu0 8
  %2714 = vperm.xlu0 %2713, %v1884
  %v2715 = vpop.permute.xlu0 %2714
  %v2717 = vmul.f32 %v2655, %v887
  %v2718 = vmul.f32 %v2659, %v891
  %v2719 = vmul.f32 %v2663, %v897
  %v2720 = vmul.f32 %v2667, %v901
  %v2721 = vmul.f32 %v2671, %v907
  %v2722 = vmul.f32 %v2675, %v911
  %v2723 = vmul.f32 %v2679, %v917
  %v2724 = vmul.f32 %v2683, %v921
  %v2725 = vmul.f32 %v2687, %v927
  %v2726 = vmul.f32 %v2691, %v931
  %v2727 = vmul.f32 %v2695, %v937
  %v2728 = vmul.f32 %v2699, %v941
  %v2729 = vmul.f32 %v2703, %v947
  %v2730 = vmul.f32 %v2707, %v951
  %v2731 = vmul.f32 %v2711, %v957
  %v2732 = vmul.f32 %v2715, %v961
  %v2733 = vadd.f32 %v2637, %v2717
  %v2734 = vadd.f32 %v2638, %v2718
  %v2735 = vadd.f32 %v2639, %v2719
  %v2736 = vadd.f32 %v2640, %v2720
  %v2737 = vadd.f32 %v2641, %v2721
  %v2738 = vadd.f32 %v2642, %v2722
  %v2739 = vadd.f32 %v2643, %v2723
  %v2740 = vadd.f32 %v2644, %v2724
  %v2741 = vadd.f32 %v2645, %v2725
  %v2742 = vadd.f32 %v2646, %v2726
  %v2743 = vadd.f32 %v2647, %v2727
  %v2744 = vadd.f32 %v2648, %v2728
  %v2745 = vadd.f32 %v2649, %v2729
  %v2746 = vadd.f32 %v2650, %v2730
  %v2747 = vadd.f32 %v2651, %v2731
  %v2748 = vadd.f32 %v2652, %v2732
  %2749 = vset.pattern.permute.xlu0 9
  %2750 = vperm.xlu0 %2749, %v1869
  %v2751 = vpop.permute.xlu0 %2750
  %2753 = vset.pattern.permute.xlu0 9
  %2754 = vperm.xlu0 %2753, %v1870
  %v2755 = vpop.permute.xlu0 %2754
  %2757 = vset.pattern.permute.xlu0 9
  %2758 = vperm.xlu0 %2757, %v1871
  %v2759 = vpop.permute.xlu0 %2758
  %2761 = vset.pattern.permute.xlu0 9
  %2762 = vperm.xlu0 %2761, %v1872
  %v2763 = vpop.permute.xlu0 %2762
  %2765 = vset.pattern.permute.xlu0 9
  %2766 = vperm.xlu0 %2765, %v1873
  %v2767 = vpop.permute.xlu0 %2766
  %2769 = vset.pattern.permute.xlu0 9
  %2770 = vperm.xlu0 %2769, %v1874
  %v2771 = vpop.permute.xlu0 %2770
  %2773 = vset.pattern.permute.xlu0 9
  %2774 = vperm.xlu0 %2773, %v1875
  %v2775 = vpop.permute.xlu0 %2774
  %2777 = vset.pattern.permute.xlu0 9
  %2778 = vperm.xlu0 %2777, %v1876
  %v2779 = vpop.permute.xlu0 %2778
  %2781 = vset.pattern.permute.xlu0 9
  %2782 = vperm.xlu0 %2781, %v1877
  %v2783 = vpop.permute.xlu0 %2782
  %2785 = vset.pattern.permute.xlu0 9
  %2786 = vperm.xlu0 %2785, %v1878
  %v2787 = vpop.permute.xlu0 %2786
  %2789 = vset.pattern.permute.xlu0 9
  %2790 = vperm.xlu0 %2789, %v1879
  %v2791 = vpop.permute.xlu0 %2790
  %2793 = vset.pattern.permute.xlu0 9
  %2794 = vperm.xlu0 %2793, %v1880
  %v2795 = vpop.permute.xlu0 %2794
  %2797 = vset.pattern.permute.xlu0 9
  %2798 = vperm.xlu0 %2797, %v1881
  %v2799 = vpop.permute.xlu0 %2798
  %2801 = vset.pattern.permute.xlu0 9
  %2802 = vperm.xlu0 %2801, %v1882
  %v2803 = vpop.permute.xlu0 %2802
  %2805 = vset.pattern.permute.xlu0 9
  %2806 = vperm.xlu0 %2805, %v1883
  %v2807 = vpop.permute.xlu0 %2806
  %2809 = vset.pattern.permute.xlu0 9
  %2810 = vperm.xlu0 %2809, %v1884
  %v2811 = vpop.permute.xlu0 %2810
  %v2813 = vmul.f32 %v2751, %v889
  %v2814 = vmul.f32 %v2755, %v893
  %v2815 = vmul.f32 %v2759, %v899
  %v2816 = vmul.f32 %v2763, %v903
  %v2817 = vmul.f32 %v2767, %v909
  %v2818 = vmul.f32 %v2771, %v913
  %v2819 = vmul.f32 %v2775, %v919
  %v2820 = vmul.f32 %v2779, %v923
  %v2821 = vmul.f32 %v2783, %v929
  %v2822 = vmul.f32 %v2787, %v933
  %v2823 = vmul.f32 %v2791, %v939
  %v2824 = vmul.f32 %v2795, %v943
  %v2825 = vmul.f32 %v2799, %v949
  %v2826 = vmul.f32 %v2803, %v953
  %v2827 = vmul.f32 %v2807, %v959
  %v2828 = vmul.f32 %v2811, %v963
  %v2829 = vadd.f32 %v2733, %v2813
  %v2830 = vadd.f32 %v2734, %v2814
  %v2831 = vadd.f32 %v2735, %v2815
  %v2832 = vadd.f32 %v2736, %v2816
  %v2833 = vadd.f32 %v2737, %v2817
  %v2834 = vadd.f32 %v2738, %v2818
  %v2835 = vadd.f32 %v2739, %v2819
  %v2836 = vadd.f32 %v2740, %v2820
  %v2837 = vadd.f32 %v2741, %v2821
  %v2838 = vadd.f32 %v2742, %v2822
  %v2839 = vadd.f32 %v2743, %v2823
  %v2840 = vadd.f32 %v2744, %v2824
  %v2841 = vadd.f32 %v2745, %v2825
  %v2842 = vadd.f32 %v2746, %v2826
  %v2843 = vadd.f32 %v2747, %v2827
  %v2844 = vadd.f32 %v2748, %v2828
  %2845 = vset.pattern.permute.xlu0 10
  %2846 = vperm.xlu0 %2845, %v1869
  %v2847 = vpop.permute.xlu0 %2846
  %2849 = vset.pattern.permute.xlu0 10
  %2850 = vperm.xlu0 %2849, %v1870
  %v2851 = vpop.permute.xlu0 %2850
  %2853 = vset.pattern.permute.xlu0 10
  %2854 = vperm.xlu0 %2853, %v1871
  %v2855 = vpop.permute.xlu0 %2854
  %2857 = vset.pattern.permute.xlu0 10
  %2858 = vperm.xlu0 %2857, %v1872
  %v2859 = vpop.permute.xlu0 %2858
  %2861 = vset.pattern.permute.xlu0 10
  %2862 = vperm.xlu0 %2861, %v1873
  %v2863 = vpop.permute.xlu0 %2862
  %2865 = vset.pattern.permute.xlu0 10
  %2866 = vperm.xlu0 %2865, %v1874
  %v2867 = vpop.permute.xlu0 %2866
  %2869 = vset.pattern.permute.xlu0 10
  %2870 = vperm.xlu0 %2869, %v1875
  %v2871 = vpop.permute.xlu0 %2870
  %2873 = vset.pattern.permute.xlu0 10
  %2874 = vperm.xlu0 %2873, %v1876
  %v2875 = vpop.permute.xlu0 %2874
  %2877 = vset.pattern.permute.xlu0 10
  %2878 = vperm.xlu0 %2877, %v1877
  %v2879 = vpop.permute.xlu0 %2878
  %2881 = vset.pattern.permute.xlu0 10
  %2882 = vperm.xlu0 %2881, %v1878
  %v2883 = vpop.permute.xlu0 %2882
  %2885 = vset.pattern.permute.xlu0 10
  %2886 = vperm.xlu0 %2885, %v1879
  %v2887 = vpop.permute.xlu0 %2886
  %2889 = vset.pattern.permute.xlu0 10
  %2890 = vperm.xlu0 %2889, %v1880
  %v2891 = vpop.permute.xlu0 %2890
  %2893 = vset.pattern.permute.xlu0 10
  %2894 = vperm.xlu0 %2893, %v1881
  %v2895 = vpop.permute.xlu0 %2894
  %2897 = vset.pattern.permute.xlu0 10
  %2898 = vperm.xlu0 %2897, %v1882
  %v2899 = vpop.permute.xlu0 %2898
  %2901 = vset.pattern.permute.xlu0 10
  %2902 = vperm.xlu0 %2901, %v1883
  %v2903 = vpop.permute.xlu0 %2902
  %2905 = vset.pattern.permute.xlu0 10
  %2906 = vperm.xlu0 %2905, %v1884
  %v2907 = vpop.permute.xlu0 %2906
  %v2909 = vmul.f32 %v2847, %v1000
  %v2910 = vmul.f32 %v2851, %v1004
  %v2911 = vmul.f32 %v2855, %v1010
  %v2912 = vmul.f32 %v2859, %v1014
  %v2913 = vmul.f32 %v2863, %v1020
  %v2914 = vmul.f32 %v2867, %v1024
  %v2915 = vmul.f32 %v2871, %v1030
  %v2916 = vmul.f32 %v2875, %v1034
  %v2917 = vmul.f32 %v2879, %v1040
  %v2918 = vmul.f32 %v2883, %v1044
  %v2919 = vmul.f32 %v2887, %v1050
  %v2920 = vmul.f32 %v2891, %v1054
  %v2921 = vmul.f32 %v2895, %v1060
  %v2922 = vmul.f32 %v2899, %v1064
  %v2923 = vmul.f32 %v2903, %v1070
  %v2924 = vmul.f32 %v2907, %v1074
  %v2925 = vadd.f32 %v2829, %v2909
  %v2926 = vadd.f32 %v2830, %v2910
  %v2927 = vadd.f32 %v2831, %v2911
  %v2928 = vadd.f32 %v2832, %v2912
  %v2929 = vadd.f32 %v2833, %v2913
  %v2930 = vadd.f32 %v2834, %v2914
  %v2931 = vadd.f32 %v2835, %v2915
  %v2932 = vadd.f32 %v2836, %v2916
  %v2933 = vadd.f32 %v2837, %v2917
  %v2934 = vadd.f32 %v2838, %v2918
  %v2935 = vadd.f32 %v2839, %v2919
  %v2936 = vadd.f32 %v2840, %v2920
  %v2937 = vadd.f32 %v2841, %v2921
  %v2938 = vadd.f32 %v2842, %v2922
  %v2939 = vadd.f32 %v2843, %v2923
  %v2940 = vadd.f32 %v2844, %v2924
  %2941 = vset.pattern.permute.xlu0 11
  %2942 = vperm.xlu0 %2941, %v1869
  %v2943 = vpop.permute.xlu0 %2942
  %2945 = vset.pattern.permute.xlu0 11
  %2946 = vperm.xlu0 %2945, %v1870
  %v2947 = vpop.permute.xlu0 %2946
  %2949 = vset.pattern.permute.xlu0 11
  %2950 = vperm.xlu0 %2949, %v1871
  %v2951 = vpop.permute.xlu0 %2950
  %2953 = vset.pattern.permute.xlu0 11
  %2954 = vperm.xlu0 %2953, %v1872
  %v2955 = vpop.permute.xlu0 %2954
  %2957 = vset.pattern.permute.xlu0 11
  %2958 = vperm.xlu0 %2957, %v1873
  %v2959 = vpop.permute.xlu0 %2958
  %2961 = vset.pattern.permute.xlu0 11
  %2962 = vperm.xlu0 %2961, %v1874
  %v2963 = vpop.permute.xlu0 %2962
  %2965 = vset.pattern.permute.xlu0 11
  %2966 = vperm.xlu0 %2965, %v1875
  %v2967 = vpop.permute.xlu0 %2966
  %2969 = vset.pattern.permute.xlu0 11
  %2970 = vperm.xlu0 %2969, %v1876
  %v2971 = vpop.permute.xlu0 %2970
  %2973 = vset.pattern.permute.xlu0 11
  %2974 = vperm.xlu0 %2973, %v1877
  %v2975 = vpop.permute.xlu0 %2974
  %2977 = vset.pattern.permute.xlu0 11
  %2978 = vperm.xlu0 %2977, %v1878
  %v2979 = vpop.permute.xlu0 %2978
  %2981 = vset.pattern.permute.xlu0 11
  %2982 = vperm.xlu0 %2981, %v1879
  %v2983 = vpop.permute.xlu0 %2982
  %2985 = vset.pattern.permute.xlu0 11
  %2986 = vperm.xlu0 %2985, %v1880
  %v2987 = vpop.permute.xlu0 %2986
  %2989 = vset.pattern.permute.xlu0 11
  %2990 = vperm.xlu0 %2989, %v1881
  %v2991 = vpop.permute.xlu0 %2990
  %2993 = vset.pattern.permute.xlu0 11
  %2994 = vperm.xlu0 %2993, %v1882
  %v2995 = vpop.permute.xlu0 %2994
  %2997 = vset.pattern.permute.xlu0 11
  %2998 = vperm.xlu0 %2997, %v1883
  %v2999 = vpop.permute.xlu0 %2998
  %3001 = vset.pattern.permute.xlu0 11
  %3002 = vperm.xlu0 %3001, %v1884
  %v3003 = vpop.permute.xlu0 %3002
  %v3005 = vmul.f32 %v2943, %v1002
  %v3006 = vmul.f32 %v2947, %v1006
  %v3007 = vmul.f32 %v2951, %v1012
  %v3008 = vmul.f32 %v2955, %v1016
  %v3009 = vmul.f32 %v2959, %v1022
  %v3010 = vmul.f32 %v2963, %v1026
  %v3011 = vmul.f32 %v2967, %v1032
  %v3012 = vmul.f32 %v2971, %v1036
  %v3013 = vmul.f32 %v2975, %v1042
  %v3014 = vmul.f32 %v2979, %v1046
  %v3015 = vmul.f32 %v2983, %v1052
  %v3016 = vmul.f32 %v2987, %v1056
  %v3017 = vmul.f32 %v2991, %v1062
  %v3018 = vmul.f32 %v2995, %v1066
  %v3019 = vmul.f32 %v2999, %v1072
  %v3020 = vmul.f32 %v3003, %v1076
  %v3021 = vadd.f32 %v2925, %v3005
  %v3022 = vadd.f32 %v2926, %v3006
  %v3023 = vadd.f32 %v2927, %v3007
  %v3024 = vadd.f32 %v2928, %v3008
  %v3025 = vadd.f32 %v2929, %v3009
  %v3026 = vadd.f32 %v2930, %v3010
  %v3027 = vadd.f32 %v2931, %v3011
  %v3028 = vadd.f32 %v2932, %v3012
  %v3029 = vadd.f32 %v2933, %v3013
  %v3030 = vadd.f32 %v2934, %v3014
  %v3031 = vadd.f32 %v2935, %v3015
  %v3032 = vadd.f32 %v2936, %v3016
  %v3033 = vadd.f32 %v2937, %v3017
  %v3034 = vadd.f32 %v2938, %v3018
  %v3035 = vadd.f32 %v2939, %v3019
  %v3036 = vadd.f32 %v2940, %v3020
  %3037 = vset.pattern.permute.xlu0 12
  %3038 = vperm.xlu0 %3037, %v1869
  %v3039 = vpop.permute.xlu0 %3038
  %3041 = vset.pattern.permute.xlu0 12
  %3042 = vperm.xlu0 %3041, %v1870
  %v3043 = vpop.permute.xlu0 %3042
  %3045 = vset.pattern.permute.xlu0 12
  %3046 = vperm.xlu0 %3045, %v1871
  %v3047 = vpop.permute.xlu0 %3046
  %3049 = vset.pattern.permute.xlu0 12
  %3050 = vperm.xlu0 %3049, %v1872
  %v3051 = vpop.permute.xlu0 %3050
  %3053 = vset.pattern.permute.xlu0 12
  %3054 = vperm.xlu0 %3053, %v1873
  %v3055 = vpop.permute.xlu0 %3054
  %3057 = vset.pattern.permute.xlu0 12
  %3058 = vperm.xlu0 %3057, %v1874
  %v3059 = vpop.permute.xlu0 %3058
  %3061 = vset.pattern.permute.xlu0 12
  %3062 = vperm.xlu0 %3061, %v1875
  %v3063 = vpop.permute.xlu0 %3062
  %3065 = vset.pattern.permute.xlu0 12
  %3066 = vperm.xlu0 %3065, %v1876
  %v3067 = vpop.permute.xlu0 %3066
  %3069 = vset.pattern.permute.xlu0 12
  %3070 = vperm.xlu0 %3069, %v1877
  %v3071 = vpop.permute.xlu0 %3070
  %3073 = vset.pattern.permute.xlu0 12
  %3074 = vperm.xlu0 %3073, %v1878
  %v3075 = vpop.permute.xlu0 %3074
  %3077 = vset.pattern.permute.xlu0 12
  %3078 = vperm.xlu0 %3077, %v1879
  %v3079 = vpop.permute.xlu0 %3078
  %3081 = vset.pattern.permute.xlu0 12
  %3082 = vperm.xlu0 %3081, %v1880
  %v3083 = vpop.permute.xlu0 %3082
  %3085 = vset.pattern.permute.xlu0 12
  %3086 = vperm.xlu0 %3085, %v1881
  %v3087 = vpop.permute.xlu0 %3086
  %3089 = vset.pattern.permute.xlu0 12
  %3090 = vperm.xlu0 %3089, %v1882
  %v3091 = vpop.permute.xlu0 %3090
  %3093 = vset.pattern.permute.xlu0 12
  %3094 = vperm.xlu0 %3093, %v1883
  %v3095 = vpop.permute.xlu0 %3094
  %3097 = vset.pattern.permute.xlu0 12
  %3098 = vperm.xlu0 %3097, %v1884
  %v3099 = vpop.permute.xlu0 %3098
  %v3101 = vmul.f32 %v3039, %v1113
  %v3102 = vmul.f32 %v3043, %v1117
  %v3103 = vmul.f32 %v3047, %v1123
  %v3104 = vmul.f32 %v3051, %v1127
  %v3105 = vmul.f32 %v3055, %v1133
  %v3106 = vmul.f32 %v3059, %v1137
  %v3107 = vmul.f32 %v3063, %v1143
  %v3108 = vmul.f32 %v3067, %v1147
  %v3109 = vmul.f32 %v3071, %v1153
  %v3110 = vmul.f32 %v3075, %v1157
  %v3111 = vmul.f32 %v3079, %v1163
  %v3112 = vmul.f32 %v3083, %v1167
  %v3113 = vmul.f32 %v3087, %v1173
  %v3114 = vmul.f32 %v3091, %v1177
  %v3115 = vmul.f32 %v3095, %v1183
  %v3116 = vmul.f32 %v3099, %v1187
  %v3117 = vadd.f32 %v3021, %v3101
  %v3118 = vadd.f32 %v3022, %v3102
  %v3119 = vadd.f32 %v3023, %v3103
  %v3120 = vadd.f32 %v3024, %v3104
  %v3121 = vadd.f32 %v3025, %v3105
  %v3122 = vadd.f32 %v3026, %v3106
  %v3123 = vadd.f32 %v3027, %v3107
  %v3124 = vadd.f32 %v3028, %v3108
  %v3125 = vadd.f32 %v3029, %v3109
  %v3126 = vadd.f32 %v3030, %v3110
  %v3127 = vadd.f32 %v3031, %v3111
  %v3128 = vadd.f32 %v3032, %v3112
  %v3129 = vadd.f32 %v3033, %v3113
  %v3130 = vadd.f32 %v3034, %v3114
  %v3131 = vadd.f32 %v3035, %v3115
  %v3132 = vadd.f32 %v3036, %v3116
  %3133 = vset.pattern.permute.xlu0 13
  %3134 = vperm.xlu0 %3133, %v1869
  %v3135 = vpop.permute.xlu0 %3134
  %3137 = vset.pattern.permute.xlu0 13
  %3138 = vperm.xlu0 %3137, %v1870
  %v3139 = vpop.permute.xlu0 %3138
  %3141 = vset.pattern.permute.xlu0 13
  %3142 = vperm.xlu0 %3141, %v1871
  %v3143 = vpop.permute.xlu0 %3142
  %3145 = vset.pattern.permute.xlu0 13
  %3146 = vperm.xlu0 %3145, %v1872
  %v3147 = vpop.permute.xlu0 %3146
  %3149 = vset.pattern.permute.xlu0 13
  %3150 = vperm.xlu0 %3149, %v1873
  %v3151 = vpop.permute.xlu0 %3150
  %3153 = vset.pattern.permute.xlu0 13
  %3154 = vperm.xlu0 %3153, %v1874
  %v3155 = vpop.permute.xlu0 %3154
  %3157 = vset.pattern.permute.xlu0 13
  %3158 = vperm.xlu0 %3157, %v1875
  %v3159 = vpop.permute.xlu0 %3158
  %3161 = vset.pattern.permute.xlu0 13
  %3162 = vperm.xlu0 %3161, %v1876
  %v3163 = vpop.permute.xlu0 %3162
  %3165 = vset.pattern.permute.xlu0 13
  %3166 = vperm.xlu0 %3165, %v1877
  %v3167 = vpop.permute.xlu0 %3166
  %3169 = vset.pattern.permute.xlu0 13
  %3170 = vperm.xlu0 %3169, %v1878
  %v3171 = vpop.permute.xlu0 %3170
  %3173 = vset.pattern.permute.xlu0 13
  %3174 = vperm.xlu0 %3173, %v1879
  %v3175 = vpop.permute.xlu0 %3174
  %3177 = vset.pattern.permute.xlu0 13
  %3178 = vperm.xlu0 %3177, %v1880
  %v3179 = vpop.permute.xlu0 %3178
  %3181 = vset.pattern.permute.xlu0 13
  %3182 = vperm.xlu0 %3181, %v1881
  %v3183 = vpop.permute.xlu0 %3182
  %3185 = vset.pattern.permute.xlu0 13
  %3186 = vperm.xlu0 %3185, %v1882
  %v3187 = vpop.permute.xlu0 %3186
  %3189 = vset.pattern.permute.xlu0 13
  %3190 = vperm.xlu0 %3189, %v1883
  %v3191 = vpop.permute.xlu0 %3190
  %3193 = vset.pattern.permute.xlu0 13
  %3194 = vperm.xlu0 %3193, %v1884
  %v3195 = vpop.permute.xlu0 %3194
  %v3197 = vmul.f32 %v3135, %v1115
  %v3198 = vmul.f32 %v3139, %v1119
  %v3199 = vmul.f32 %v3143, %v1125
  %v3200 = vmul.f32 %v3147, %v1129
  %v3201 = vmul.f32 %v3151, %v1135
  %v3202 = vmul.f32 %v3155, %v1139
  %v3203 = vmul.f32 %v3159, %v1145
  %v3204 = vmul.f32 %v3163, %v1149
  %v3205 = vmul.f32 %v3167, %v1155
  %v3206 = vmul.f32 %v3171, %v1159
  %v3207 = vmul.f32 %v3175, %v1165
  %v3208 = vmul.f32 %v3179, %v1169
  %v3209 = vmul.f32 %v3183, %v1175
  %v3210 = vmul.f32 %v3187, %v1179
  %v3211 = vmul.f32 %v3191, %v1185
  %v3212 = vmul.f32 %v3195, %v1189
  %v3213 = vadd.f32 %v3117, %v3197
  %v3214 = vadd.f32 %v3118, %v3198
  %v3215 = vadd.f32 %v3119, %v3199
  %v3216 = vadd.f32 %v3120, %v3200
  %v3217 = vadd.f32 %v3121, %v3201
  %v3218 = vadd.f32 %v3122, %v3202
  %v3219 = vadd.f32 %v3123, %v3203
  %v3220 = vadd.f32 %v3124, %v3204
  %v3221 = vadd.f32 %v3125, %v3205
  %v3222 = vadd.f32 %v3126, %v3206
  %v3223 = vadd.f32 %v3127, %v3207
  %v3224 = vadd.f32 %v3128, %v3208
  %v3225 = vadd.f32 %v3129, %v3209
  %v3226 = vadd.f32 %v3130, %v3210
  %v3227 = vadd.f32 %v3131, %v3211
  %v3228 = vadd.f32 %v3132, %v3212
  %3229 = vset.pattern.permute.xlu0 14
  %3230 = vperm.xlu0 %3229, %v1869
  %v3231 = vpop.permute.xlu0 %3230
  %3233 = vset.pattern.permute.xlu0 14
  %3234 = vperm.xlu0 %3233, %v1870
  %v3235 = vpop.permute.xlu0 %3234
  %3237 = vset.pattern.permute.xlu0 14
  %3238 = vperm.xlu0 %3237, %v1871
  %v3239 = vpop.permute.xlu0 %3238
  %3241 = vset.pattern.permute.xlu0 14
  %3242 = vperm.xlu0 %3241, %v1872
  %v3243 = vpop.permute.xlu0 %3242
  %3245 = vset.pattern.permute.xlu0 14
  %3246 = vperm.xlu0 %3245, %v1873
  %v3247 = vpop.permute.xlu0 %3246
  %3249 = vset.pattern.permute.xlu0 14
  %3250 = vperm.xlu0 %3249, %v1874
  %v3251 = vpop.permute.xlu0 %3250
  %3253 = vset.pattern.permute.xlu0 14
  %3254 = vperm.xlu0 %3253, %v1875
  %v3255 = vpop.permute.xlu0 %3254
  %3257 = vset.pattern.permute.xlu0 14
  %3258 = vperm.xlu0 %3257, %v1876
  %v3259 = vpop.permute.xlu0 %3258
  %3261 = vset.pattern.permute.xlu0 14
  %3262 = vperm.xlu0 %3261, %v1877
  %v3263 = vpop.permute.xlu0 %3262
  %3265 = vset.pattern.permute.xlu0 14
  %3266 = vperm.xlu0 %3265, %v1878
  %v3267 = vpop.permute.xlu0 %3266
  %3269 = vset.pattern.permute.xlu0 14
  %3270 = vperm.xlu0 %3269, %v1879
  %v3271 = vpop.permute.xlu0 %3270
  %3273 = vset.pattern.permute.xlu0 14
  %3274 = vperm.xlu0 %3273, %v1880
  %v3275 = vpop.permute.xlu0 %3274
  %3277 = vset.pattern.permute.xlu0 14
  %3278 = vperm.xlu0 %3277, %v1881
  %v3279 = vpop.permute.xlu0 %3278
  %3281 = vset.pattern.permute.xlu0 14
  %3282 = vperm.xlu0 %3281, %v1882
  %v3283 = vpop.permute.xlu0 %3282
  %3285 = vset.pattern.permute.xlu0 14
  %3286 = vperm.xlu0 %3285, %v1883
  %v3287 = vpop.permute.xlu0 %3286
  %3289 = vset.pattern.permute.xlu0 14
  %3290 = vperm.xlu0 %3289, %v1884
  %v3291 = vpop.permute.xlu0 %3290
  %v3293 = vmul.f32 %v3231, %v1226
  %v3294 = vmul.f32 %v3235, %v1230
  %v3295 = vmul.f32 %v3239, %v1236
  %v3296 = vmul.f32 %v3243, %v1240
  %v3297 = vmul.f32 %v3247, %v1246
  %v3298 = vmul.f32 %v3251, %v1250
  %v3299 = vmul.f32 %v3255, %v1256
  %v3300 = vmul.f32 %v3259, %v1260
  %v3301 = vmul.f32 %v3263, %v1266
  %v3302 = vmul.f32 %v3267, %v1270
  %v3303 = vmul.f32 %v3271, %v1276
  %v3304 = vmul.f32 %v3275, %v1280
  %v3305 = vmul.f32 %v3279, %v1286
  %v3306 = vmul.f32 %v3283, %v1290
  %v3307 = vmul.f32 %v3287, %v1296
  %v3308 = vmul.f32 %v3291, %v1300
  %v3309 = vadd.f32 %v3213, %v3293
  %v3310 = vadd.f32 %v3214, %v3294
  %v3311 = vadd.f32 %v3215, %v3295
  %v3312 = vadd.f32 %v3216, %v3296
  %v3313 = vadd.f32 %v3217, %v3297
  %v3314 = vadd.f32 %v3218, %v3298
  %v3315 = vadd.f32 %v3219, %v3299
  %v3316 = vadd.f32 %v3220, %v3300
  %v3317 = vadd.f32 %v3221, %v3301
  %v3318 = vadd.f32 %v3222, %v3302
  %v3319 = vadd.f32 %v3223, %v3303
  %v3320 = vadd.f32 %v3224, %v3304
  %v3321 = vadd.f32 %v3225, %v3305
  %v3322 = vadd.f32 %v3226, %v3306
  %v3323 = vadd.f32 %v3227, %v3307
  %v3324 = vadd.f32 %v3228, %v3308
  %3325 = vset.pattern.permute.xlu0 15
  %3326 = vperm.xlu0 %3325, %v1869
  %v3327 = vpop.permute.xlu0 %3326
  %3329 = vset.pattern.permute.xlu0 15
  %3330 = vperm.xlu0 %3329, %v1870
  %v3331 = vpop.permute.xlu0 %3330
  %3333 = vset.pattern.permute.xlu0 15
  %3334 = vperm.xlu0 %3333, %v1871
  %v3335 = vpop.permute.xlu0 %3334
  %3337 = vset.pattern.permute.xlu0 15
  %3338 = vperm.xlu0 %3337, %v1872
  %v3339 = vpop.permute.xlu0 %3338
  %3341 = vset.pattern.permute.xlu0 15
  %3342 = vperm.xlu0 %3341, %v1873
  %v3343 = vpop.permute.xlu0 %3342
  %3345 = vset.pattern.permute.xlu0 15
  %3346 = vperm.xlu0 %3345, %v1874
  %v3347 = vpop.permute.xlu0 %3346
  %3349 = vset.pattern.permute.xlu0 15
  %3350 = vperm.xlu0 %3349, %v1875
  %v3351 = vpop.permute.xlu0 %3350
  %3353 = vset.pattern.permute.xlu0 15
  %3354 = vperm.xlu0 %3353, %v1876
  %v3355 = vpop.permute.xlu0 %3354
  %3357 = vset.pattern.permute.xlu0 15
  %3358 = vperm.xlu0 %3357, %v1877
  %v3359 = vpop.permute.xlu0 %3358
  %3361 = vset.pattern.permute.xlu0 15
  %3362 = vperm.xlu0 %3361, %v1878
  %v3363 = vpop.permute.xlu0 %3362
  %3365 = vset.pattern.permute.xlu0 15
  %3366 = vperm.xlu0 %3365, %v1879
  %v3367 = vpop.permute.xlu0 %3366
  %3369 = vset.pattern.permute.xlu0 15
  %3370 = vperm.xlu0 %3369, %v1880
  %v3371 = vpop.permute.xlu0 %3370
  %3373 = vset.pattern.permute.xlu0 15
  %3374 = vperm.xlu0 %3373, %v1881
  %v3375 = vpop.permute.xlu0 %3374
  %3377 = vset.pattern.permute.xlu0 15
  %3378 = vperm.xlu0 %3377, %v1882
  %v3379 = vpop.permute.xlu0 %3378
  %3381 = vset.pattern.permute.xlu0 15
  %3382 = vperm.xlu0 %3381, %v1883
  %v3383 = vpop.permute.xlu0 %3382
  %3385 = vset.pattern.permute.xlu0 15
  %3386 = vperm.xlu0 %3385, %v1884
  %v3387 = vpop.permute.xlu0 %3386
  %v3389 = vmul.f32 %v3327, %v1228
  %v3390 = vmul.f32 %v3331, %v1232
  %v3391 = vmul.f32 %v3335, %v1238
  %v3392 = vmul.f32 %v3339, %v1242
  %v3393 = vmul.f32 %v3343, %v1248
  %v3394 = vmul.f32 %v3347, %v1252
  %v3395 = vmul.f32 %v3351, %v1258
  %v3396 = vmul.f32 %v3355, %v1262
  %v3397 = vmul.f32 %v3359, %v1268
  %v3398 = vmul.f32 %v3363, %v1272
  %v3399 = vmul.f32 %v3367, %v1278
  %v3400 = vmul.f32 %v3371, %v1282
  %v3401 = vmul.f32 %v3375, %v1288
  %v3402 = vmul.f32 %v3379, %v1292
  %v3403 = vmul.f32 %v3383, %v1298
  %v3404 = vmul.f32 %v3387, %v1302
  %v3405 = vadd.f32 %v3309, %v3389
  %v3406 = vadd.f32 %v3310, %v3390
  %v3407 = vadd.f32 %v3311, %v3391
  %v3408 = vadd.f32 %v3312, %v3392
  %v3409 = vadd.f32 %v3313, %v3393
  %v3410 = vadd.f32 %v3314, %v3394
  %v3411 = vadd.f32 %v3315, %v3395
  %v3412 = vadd.f32 %v3316, %v3396
  %v3413 = vadd.f32 %v3317, %v3397
  %v3414 = vadd.f32 %v3318, %v3398
  %v3415 = vadd.f32 %v3319, %v3399
  %v3416 = vadd.f32 %v3320, %v3400
  %v3417 = vadd.f32 %v3321, %v3401
  %v3418 = vadd.f32 %v3322, %v3402
  %v3419 = vadd.f32 %v3323, %v3403
  %v3420 = vadd.f32 %v3324, %v3404
  %3421 = vset.pattern.permute.xlu0 16
  %3422 = vperm.xlu0 %3421, %v1869
  %v3423 = vpop.permute.xlu0 %3422
  %3425 = vset.pattern.permute.xlu0 16
  %3426 = vperm.xlu0 %3425, %v1870
  %v3427 = vpop.permute.xlu0 %3426
  %3429 = vset.pattern.permute.xlu0 16
  %3430 = vperm.xlu0 %3429, %v1871
  %v3431 = vpop.permute.xlu0 %3430
  %3433 = vset.pattern.permute.xlu0 16
  %3434 = vperm.xlu0 %3433, %v1872
  %v3435 = vpop.permute.xlu0 %3434
  %3437 = vset.pattern.permute.xlu0 16
  %3438 = vperm.xlu0 %3437, %v1873
  %v3439 = vpop.permute.xlu0 %3438
  %3441 = vset.pattern.permute.xlu0 16
  %3442 = vperm.xlu0 %3441, %v1874
  %v3443 = vpop.permute.xlu0 %3442
  %3445 = vset.pattern.permute.xlu0 16
  %3446 = vperm.xlu0 %3445, %v1875
  %v3447 = vpop.permute.xlu0 %3446
  %3449 = vset.pattern.permute.xlu0 16
  %3450 = vperm.xlu0 %3449, %v1876
  %v3451 = vpop.permute.xlu0 %3450
  %3453 = vset.pattern.permute.xlu0 16
  %3454 = vperm.xlu0 %3453, %v1877
  %v3455 = vpop.permute.xlu0 %3454
  %3457 = vset.pattern.permute.xlu0 16
  %3458 = vperm.xlu0 %3457, %v1878
  %v3459 = vpop.permute.xlu0 %3458
  %3461 = vset.pattern.permute.xlu0 16
  %3462 = vperm.xlu0 %3461, %v1879
  %v3463 = vpop.permute.xlu0 %3462
  %3465 = vset.pattern.permute.xlu0 16
  %3466 = vperm.xlu0 %3465, %v1880
  %v3467 = vpop.permute.xlu0 %3466
  %3469 = vset.pattern.permute.xlu0 16
  %3470 = vperm.xlu0 %3469, %v1881
  %v3471 = vpop.permute.xlu0 %3470
  %3473 = vset.pattern.permute.xlu0 16
  %3474 = vperm.xlu0 %3473, %v1882
  %v3475 = vpop.permute.xlu0 %3474
  %3477 = vset.pattern.permute.xlu0 16
  %3478 = vperm.xlu0 %3477, %v1883
  %v3479 = vpop.permute.xlu0 %3478
  %3481 = vset.pattern.permute.xlu0 16
  %3482 = vperm.xlu0 %3481, %v1884
  %v3483 = vpop.permute.xlu0 %3482
  %v3485 = vmul.f32 %v3423, %v1339
  %v3486 = vmul.f32 %v3427, %v1343
  %v3487 = vmul.f32 %v3431, %v1349
  %v3488 = vmul.f32 %v3435, %v1353
  %v3489 = vmul.f32 %v3439, %v1359
  %v3490 = vmul.f32 %v3443, %v1363
  %v3491 = vmul.f32 %v3447, %v1369
  %v3492 = vmul.f32 %v3451, %v1373
  %v3493 = vmul.f32 %v3455, %v1379
  %v3494 = vmul.f32 %v3459, %v1383
  %v3495 = vmul.f32 %v3463, %v1389
  %v3496 = vmul.f32 %v3467, %v1393
  %v3497 = vmul.f32 %v3471, %v1399
  %v3498 = vmul.f32 %v3475, %v1403
  %v3499 = vmul.f32 %v3479, %v1409
  %v3500 = vmul.f32 %v3483, %v1413
  %v3501 = vadd.f32 %v3405, %v3485
  %v3502 = vadd.f32 %v3406, %v3486
  %v3503 = vadd.f32 %v3407, %v3487
  %v3504 = vadd.f32 %v3408, %v3488
  %v3505 = vadd.f32 %v3409, %v3489
  %v3506 = vadd.f32 %v3410, %v3490
  %v3507 = vadd.f32 %v3411, %v3491
  %v3508 = vadd.f32 %v3412, %v3492
  %v3509 = vadd.f32 %v3413, %v3493
  %v3510 = vadd.f32 %v3414, %v3494
  %v3511 = vadd.f32 %v3415, %v3495
  %v3512 = vadd.f32 %v3416, %v3496
  %v3513 = vadd.f32 %v3417, %v3497
  %v3514 = vadd.f32 %v3418, %v3498
  %v3515 = vadd.f32 %v3419, %v3499
  %v3516 = vadd.f32 %v3420, %v3500
  %3517 = vset.pattern.permute.xlu0 17
  %3518 = vperm.xlu0 %3517, %v1869
  %v3519 = vpop.permute.xlu0 %3518
  %3521 = vset.pattern.permute.xlu0 17
  %3522 = vperm.xlu0 %3521, %v1870
  %v3523 = vpop.permute.xlu0 %3522
  %3525 = vset.pattern.permute.xlu0 17
  %3526 = vperm.xlu0 %3525, %v1871
  %v3527 = vpop.permute.xlu0 %3526
  %3529 = vset.pattern.permute.xlu0 17
  %3530 = vperm.xlu0 %3529, %v1872
  %v3531 = vpop.permute.xlu0 %3530
  %3533 = vset.pattern.permute.xlu0 17
  %3534 = vperm.xlu0 %3533, %v1873
  %v3535 = vpop.permute.xlu0 %3534
  %3537 = vset.pattern.permute.xlu0 17
  %3538 = vperm.xlu0 %3537, %v1874
  %v3539 = vpop.permute.xlu0 %3538
  %3541 = vset.pattern.permute.xlu0 17
  %3542 = vperm.xlu0 %3541, %v1875
  %v3543 = vpop.permute.xlu0 %3542
  %3545 = vset.pattern.permute.xlu0 17
  %3546 = vperm.xlu0 %3545, %v1876
  %v3547 = vpop.permute.xlu0 %3546
  %3549 = vset.pattern.permute.xlu0 17
  %3550 = vperm.xlu0 %3549, %v1877
  %v3551 = vpop.permute.xlu0 %3550
  %3553 = vset.pattern.permute.xlu0 17
  %3554 = vperm.xlu0 %3553, %v1878
  %v3555 = vpop.permute.xlu0 %3554
  %3557 = vset.pattern.permute.xlu0 17
  %3558 = vperm.xlu0 %3557, %v1879
  %v3559 = vpop.permute.xlu0 %3558
  %3561 = vset.pattern.permute.xlu0 17
  %3562 = vperm.xlu0 %3561, %v1880
  %v3563 = vpop.permute.xlu0 %3562
  %3565 = vset.pattern.permute.xlu0 17
  %3566 = vperm.xlu0 %3565, %v1881
  %v3567 = vpop.permute.xlu0 %3566
  %3569 = vset.pattern.permute.xlu0 17
  %3570 = vperm.xlu0 %3569, %v1882
  %v3571 = vpop.permute.xlu0 %3570
  %3573 = vset.pattern.permute.xlu0 17
  %3574 = vperm.xlu0 %3573, %v1883
  %v3575 = vpop.permute.xlu0 %3574
  %3577 = vset.pattern.permute.xlu0 17
  %3578 = vperm.xlu0 %3577, %v1884
  %v3579 = vpop.permute.xlu0 %3578
  %v3581 = vmul.f32 %v3519, %v1341
  %v3582 = vmul.f32 %v3523, %v1345
  %v3583 = vmul.f32 %v3527, %v1351
  %v3584 = vmul.f32 %v3531, %v1355
  %v3585 = vmul.f32 %v3535, %v1361
  %v3586 = vmul.f32 %v3539, %v1365
  %v3587 = vmul.f32 %v3543, %v1371
  %v3588 = vmul.f32 %v3547, %v1375
  %v3589 = vmul.f32 %v3551, %v1381
  %v3590 = vmul.f32 %v3555, %v1385
  %v3591 = vmul.f32 %v3559, %v1391
  %v3592 = vmul.f32 %v3563, %v1395
  %v3593 = vmul.f32 %v3567, %v1401
  %v3594 = vmul.f32 %v3571, %v1405
  %v3595 = vmul.f32 %v3575, %v1411
  %v3596 = vmul.f32 %v3579, %v1415
  %v3597 = vadd.f32 %v3501, %v3581
  %v3598 = vadd.f32 %v3502, %v3582
  %v3599 = vadd.f32 %v3503, %v3583
  %v3600 = vadd.f32 %v3504, %v3584
  %v3601 = vadd.f32 %v3505, %v3585
  %v3602 = vadd.f32 %v3506, %v3586
  %v3603 = vadd.f32 %v3507, %v3587
  %v3604 = vadd.f32 %v3508, %v3588
  %v3605 = vadd.f32 %v3509, %v3589
  %v3606 = vadd.f32 %v3510, %v3590
  %v3607 = vadd.f32 %v3511, %v3591
  %v3608 = vadd.f32 %v3512, %v3592
  %v3609 = vadd.f32 %v3513, %v3593
  %v3610 = vadd.f32 %v3514, %v3594
  %v3611 = vadd.f32 %v3515, %v3595
  %v3612 = vadd.f32 %v3516, %v3596
  %3613 = vset.pattern.permute.xlu0 18
  %3614 = vperm.xlu0 %3613, %v1869
  %v3615 = vpop.permute.xlu0 %3614
  %3617 = vset.pattern.permute.xlu0 18
  %3618 = vperm.xlu0 %3617, %v1870
  %v3619 = vpop.permute.xlu0 %3618
  %3621 = vset.pattern.permute.xlu0 18
  %3622 = vperm.xlu0 %3621, %v1871
  %v3623 = vpop.permute.xlu0 %3622
  %3625 = vset.pattern.permute.xlu0 18
  %3626 = vperm.xlu0 %3625, %v1872
  %v3627 = vpop.permute.xlu0 %3626
  %3629 = vset.pattern.permute.xlu0 18
  %3630 = vperm.xlu0 %3629, %v1873
  %v3631 = vpop.permute.xlu0 %3630
  %3633 = vset.pattern.permute.xlu0 18
  %3634 = vperm.xlu0 %3633, %v1874
  %v3635 = vpop.permute.xlu0 %3634
  %3637 = vset.pattern.permute.xlu0 18
  %3638 = vperm.xlu0 %3637, %v1875
  %v3639 = vpop.permute.xlu0 %3638
  %3641 = vset.pattern.permute.xlu0 18
  %3642 = vperm.xlu0 %3641, %v1876
  %v3643 = vpop.permute.xlu0 %3642
  %3645 = vset.pattern.permute.xlu0 18
  %3646 = vperm.xlu0 %3645, %v1877
  %v3647 = vpop.permute.xlu0 %3646
  %3649 = vset.pattern.permute.xlu0 18
  %3650 = vperm.xlu0 %3649, %v1878
  %v3651 = vpop.permute.xlu0 %3650
  %3653 = vset.pattern.permute.xlu0 18
  %3654 = vperm.xlu0 %3653, %v1879
  %v3655 = vpop.permute.xlu0 %3654
  %3657 = vset.pattern.permute.xlu0 18
  %3658 = vperm.xlu0 %3657, %v1880
  %v3659 = vpop.permute.xlu0 %3658
  %3661 = vset.pattern.permute.xlu0 18
  %3662 = vperm.xlu0 %3661, %v1881
  %v3663 = vpop.permute.xlu0 %3662
  %3665 = vset.pattern.permute.xlu0 18
  %3666 = vperm.xlu0 %3665, %v1882
  %v3667 = vpop.permute.xlu0 %3666
  %3669 = vset.pattern.permute.xlu0 18
  %3670 = vperm.xlu0 %3669, %v1883
  %v3671 = vpop.permute.xlu0 %3670
  %3673 = vset.pattern.permute.xlu0 18
  %3674 = vperm.xlu0 %3673, %v1884
  %v3675 = vpop.permute.xlu0 %3674
  %v3677 = vmul.f32 %v3615, %v1452
  %v3678 = vmul.f32 %v3619, %v1456
  %v3679 = vmul.f32 %v3623, %v1462
  %v3680 = vmul.f32 %v3627, %v1466
  %v3681 = vmul.f32 %v3631, %v1472
  %v3682 = vmul.f32 %v3635, %v1476
  %v3683 = vmul.f32 %v3639, %v1482
  %v3684 = vmul.f32 %v3643, %v1486
  %v3685 = vmul.f32 %v3647, %v1492
  %v3686 = vmul.f32 %v3651, %v1496
  %v3687 = vmul.f32 %v3655, %v1502
  %v3688 = vmul.f32 %v3659, %v1506
  %v3689 = vmul.f32 %v3663, %v1512
  %v3690 = vmul.f32 %v3667, %v1516
  %v3691 = vmul.f32 %v3671, %v1522
  %v3692 = vmul.f32 %v3675, %v1526
  %v3693 = vadd.f32 %v3597, %v3677
  %v3694 = vadd.f32 %v3598, %v3678
  %v3695 = vadd.f32 %v3599, %v3679
  %v3696 = vadd.f32 %v3600, %v3680
  %v3697 = vadd.f32 %v3601, %v3681
  %v3698 = vadd.f32 %v3602, %v3682
  %v3699 = vadd.f32 %v3603, %v3683
  %v3700 = vadd.f32 %v3604, %v3684
  %v3701 = vadd.f32 %v3605, %v3685
  %v3702 = vadd.f32 %v3606, %v3686
  %v3703 = vadd.f32 %v3607, %v3687
  %v3704 = vadd.f32 %v3608, %v3688
  %v3705 = vadd.f32 %v3609, %v3689
  %v3706 = vadd.f32 %v3610, %v3690
  %v3707 = vadd.f32 %v3611, %v3691
  %v3708 = vadd.f32 %v3612, %v3692
  %3709 = vset.pattern.permute.xlu0 19
  %3710 = vperm.xlu0 %3709, %v1869
  %v3711 = vpop.permute.xlu0 %3710
  %3713 = vset.pattern.permute.xlu0 19
  %3714 = vperm.xlu0 %3713, %v1870
  %v3715 = vpop.permute.xlu0 %3714
  %3717 = vset.pattern.permute.xlu0 19
  %3718 = vperm.xlu0 %3717, %v1871
  %v3719 = vpop.permute.xlu0 %3718
  %3721 = vset.pattern.permute.xlu0 19
  %3722 = vperm.xlu0 %3721, %v1872
  %v3723 = vpop.permute.xlu0 %3722
  %3725 = vset.pattern.permute.xlu0 19
  %3726 = vperm.xlu0 %3725, %v1873
  %v3727 = vpop.permute.xlu0 %3726
  %3729 = vset.pattern.permute.xlu0 19
  %3730 = vperm.xlu0 %3729, %v1874
  %v3731 = vpop.permute.xlu0 %3730
  %3733 = vset.pattern.permute.xlu0 19
  %3734 = vperm.xlu0 %3733, %v1875
  %v3735 = vpop.permute.xlu0 %3734
  %3737 = vset.pattern.permute.xlu0 19
  %3738 = vperm.xlu0 %3737, %v1876
  %v3739 = vpop.permute.xlu0 %3738
  %3741 = vset.pattern.permute.xlu0 19
  %3742 = vperm.xlu0 %3741, %v1877
  %v3743 = vpop.permute.xlu0 %3742
  %3745 = vset.pattern.permute.xlu0 19
  %3746 = vperm.xlu0 %3745, %v1878
  %v3747 = vpop.permute.xlu0 %3746
  %3749 = vset.pattern.permute.xlu0 19
  %3750 = vperm.xlu0 %3749, %v1879
  %v3751 = vpop.permute.xlu0 %3750
  %3753 = vset.pattern.permute.xlu0 19
  %3754 = vperm.xlu0 %3753, %v1880
  %v3755 = vpop.permute.xlu0 %3754
  %3757 = vset.pattern.permute.xlu0 19
  %3758 = vperm.xlu0 %3757, %v1881
  %v3759 = vpop.permute.xlu0 %3758
  %3761 = vset.pattern.permute.xlu0 19
  %3762 = vperm.xlu0 %3761, %v1882
  %v3763 = vpop.permute.xlu0 %3762
  %3765 = vset.pattern.permute.xlu0 19
  %3766 = vperm.xlu0 %3765, %v1883
  %v3767 = vpop.permute.xlu0 %3766
  %3769 = vset.pattern.permute.xlu0 19
  %3770 = vperm.xlu0 %3769, %v1884
  %v3771 = vpop.permute.xlu0 %3770
  %v3773 = vmul.f32 %v3711, %v1454
  %v3774 = vmul.f32 %v3715, %v1458
  %v3775 = vmul.f32 %v3719, %v1464
  %v3776 = vmul.f32 %v3723, %v1468
  %v3777 = vmul.f32 %v3727, %v1474
  %v3778 = vmul.f32 %v3731, %v1478
  %v3779 = vmul.f32 %v3735, %v1484
  %v3780 = vmul.f32 %v3739, %v1488
  %v3781 = vmul.f32 %v3743, %v1494
  %v3782 = vmul.f32 %v3747, %v1498
  %v3783 = vmul.f32 %v3751, %v1504
  %v3784 = vmul.f32 %v3755, %v1508
  %v3785 = vmul.f32 %v3759, %v1514
  %v3786 = vmul.f32 %v3763, %v1518
  %v3787 = vmul.f32 %v3767, %v1524
  %v3788 = vmul.f32 %v3771, %v1528
  %v3789 = vadd.f32 %v3693, %v3773
  %v3790 = vadd.f32 %v3694, %v3774
  %v3791 = vadd.f32 %v3695, %v3775
  %v3792 = vadd.f32 %v3696, %v3776
  %v3793 = vadd.f32 %v3697, %v3777
  %v3794 = vadd.f32 %v3698, %v3778
  %v3795 = vadd.f32 %v3699, %v3779
  %v3796 = vadd.f32 %v3700, %v3780
  %v3797 = vadd.f32 %v3701, %v3781
  %v3798 = vadd.f32 %v3702, %v3782
  %v3799 = vadd.f32 %v3703, %v3783
  %v3800 = vadd.f32 %v3704, %v3784
  %v3801 = vadd.f32 %v3705, %v3785
  %v3802 = vadd.f32 %v3706, %v3786
  %v3803 = vadd.f32 %v3707, %v3787
  %v3804 = vadd.f32 %v3708, %v3788
  %3805 = vset.pattern.permute.xlu0 20
  %3806 = vperm.xlu0 %3805, %v1869
  %v3807 = vpop.permute.xlu0 %3806
  %3809 = vset.pattern.permute.xlu0 20
  %3810 = vperm.xlu0 %3809, %v1870
  %v3811 = vpop.permute.xlu0 %3810
  %3813 = vset.pattern.permute.xlu0 20
  %3814 = vperm.xlu0 %3813, %v1871
  %v3815 = vpop.permute.xlu0 %3814
  %3817 = vset.pattern.permute.xlu0 20
  %3818 = vperm.xlu0 %3817, %v1872
  %v3819 = vpop.permute.xlu0 %3818
  %3821 = vset.pattern.permute.xlu0 20
  %3822 = vperm.xlu0 %3821, %v1873
  %v3823 = vpop.permute.xlu0 %3822
  %3825 = vset.pattern.permute.xlu0 20
  %3826 = vperm.xlu0 %3825, %v1874
  %v3827 = vpop.permute.xlu0 %3826
  %3829 = vset.pattern.permute.xlu0 20
  %3830 = vperm.xlu0 %3829, %v1875
  %v3831 = vpop.permute.xlu0 %3830
  %3833 = vset.pattern.permute.xlu0 20
  %3834 = vperm.xlu0 %3833, %v1876
  %v3835 = vpop.permute.xlu0 %3834
  %3837 = vset.pattern.permute.xlu0 20
  %3838 = vperm.xlu0 %3837, %v1877
  %v3839 = vpop.permute.xlu0 %3838
  %3841 = vset.pattern.permute.xlu0 20
  %3842 = vperm.xlu0 %3841, %v1878
  %v3843 = vpop.permute.xlu0 %3842
  %3845 = vset.pattern.permute.xlu0 20
  %3846 = vperm.xlu0 %3845, %v1879
  %v3847 = vpop.permute.xlu0 %3846
  %3849 = vset.pattern.permute.xlu0 20
  %3850 = vperm.xlu0 %3849, %v1880
  %v3851 = vpop.permute.xlu0 %3850
  %3853 = vset.pattern.permute.xlu0 20
  %3854 = vperm.xlu0 %3853, %v1881
  %v3855 = vpop.permute.xlu0 %3854
  %3857 = vset.pattern.permute.xlu0 20
  %3858 = vperm.xlu0 %3857, %v1882
  %v3859 = vpop.permute.xlu0 %3858
  %3861 = vset.pattern.permute.xlu0 20
  %3862 = vperm.xlu0 %3861, %v1883
  %v3863 = vpop.permute.xlu0 %3862
  %3865 = vset.pattern.permute.xlu0 20
  %3866 = vperm.xlu0 %3865, %v1884
  %v3867 = vpop.permute.xlu0 %3866
  %v3869 = vmul.f32 %v3807, %v1565
  %v3870 = vmul.f32 %v3811, %v1569
  %v3871 = vmul.f32 %v3815, %v1575
  %v3872 = vmul.f32 %v3819, %v1579
  %v3873 = vmul.f32 %v3823, %v1585
  %v3874 = vmul.f32 %v3827, %v1589
  %v3875 = vmul.f32 %v3831, %v1595
  %v3876 = vmul.f32 %v3835, %v1599
  %v3877 = vmul.f32 %v3839, %v1605
  %v3878 = vmul.f32 %v3843, %v1609
  %v3879 = vmul.f32 %v3847, %v1615
  %v3880 = vmul.f32 %v3851, %v1619
  %v3881 = vmul.f32 %v3855, %v1625
  %v3882 = vmul.f32 %v3859, %v1629
  %v3883 = vmul.f32 %v3863, %v1635
  %v3884 = vmul.f32 %v3867, %v1639
  %v3885 = vadd.f32 %v3789, %v3869
  %v3886 = vadd.f32 %v3790, %v3870
  %v3887 = vadd.f32 %v3791, %v3871
  %v3888 = vadd.f32 %v3792, %v3872
  %v3889 = vadd.f32 %v3793, %v3873
  %v3890 = vadd.f32 %v3794, %v3874
  %v3891 = vadd.f32 %v3795, %v3875
  %v3892 = vadd.f32 %v3796, %v3876
  %v3893 = vadd.f32 %v3797, %v3877
  %v3894 = vadd.f32 %v3798, %v3878
  %v3895 = vadd.f32 %v3799, %v3879
  %v3896 = vadd.f32 %v3800, %v3880
  %v3897 = vadd.f32 %v3801, %v3881
  %v3898 = vadd.f32 %v3802, %v3882
  %v3899 = vadd.f32 %v3803, %v3883
  %v3900 = vadd.f32 %v3804, %v3884
  %3901 = vset.pattern.permute.xlu0 21
  %3902 = vperm.xlu0 %3901, %v1869
  %v3903 = vpop.permute.xlu0 %3902
  %3905 = vset.pattern.permute.xlu0 21
  %3906 = vperm.xlu0 %3905, %v1870
  %v3907 = vpop.permute.xlu0 %3906
  %3909 = vset.pattern.permute.xlu0 21
  %3910 = vperm.xlu0 %3909, %v1871
  %v3911 = vpop.permute.xlu0 %3910
  %3913 = vset.pattern.permute.xlu0 21
  %3914 = vperm.xlu0 %3913, %v1872
  %v3915 = vpop.permute.xlu0 %3914
  %3917 = vset.pattern.permute.xlu0 21
  %3918 = vperm.xlu0 %3917, %v1873
  %v3919 = vpop.permute.xlu0 %3918
  %3921 = vset.pattern.permute.xlu0 21
  %3922 = vperm.xlu0 %3921, %v1874
  %v3923 = vpop.permute.xlu0 %3922
  %3925 = vset.pattern.permute.xlu0 21
  %3926 = vperm.xlu0 %3925, %v1875
  %v3927 = vpop.permute.xlu0 %3926
  %3929 = vset.pattern.permute.xlu0 21
  %3930 = vperm.xlu0 %3929, %v1876
  %v3931 = vpop.permute.xlu0 %3930
  %3933 = vset.pattern.permute.xlu0 21
  %3934 = vperm.xlu0 %3933, %v1877
  %v3935 = vpop.permute.xlu0 %3934
  %3937 = vset.pattern.permute.xlu0 21
  %3938 = vperm.xlu0 %3937, %v1878
  %v3939 = vpop.permute.xlu0 %3938
  %3941 = vset.pattern.permute.xlu0 21
  %3942 = vperm.xlu0 %3941, %v1879
  %v3943 = vpop.permute.xlu0 %3942
  %3945 = vset.pattern.permute.xlu0 21
  %3946 = vperm.xlu0 %3945, %v1880
  %v3947 = vpop.permute.xlu0 %3946
  %3949 = vset.pattern.permute.xlu0 21
  %3950 = vperm.xlu0 %3949, %v1881
  %v3951 = vpop.permute.xlu0 %3950
  %3953 = vset.pattern.permute.xlu0 21
  %3954 = vperm.xlu0 %3953, %v1882
  %v3955 = vpop.permute.xlu0 %3954
  %3957 = vset.pattern.permute.xlu0 21
  %3958 = vperm.xlu0 %3957, %v1883
  %v3959 = vpop.permute.xlu0 %3958
  %3961 = vset.pattern.permute.xlu0 21
  %3962 = vperm.xlu0 %3961, %v1884
  %v3963 = vpop.permute.xlu0 %3962
  %v3965 = vmul.f32 %v3903, %v1567
  %v3966 = vmul.f32 %v3907, %v1571
  %v3967 = vmul.f32 %v3911, %v1577
  %v3968 = vmul.f32 %v3915, %v1581
  %v3969 = vmul.f32 %v3919, %v1587
  %v3970 = vmul.f32 %v3923, %v1591
  %v3971 = vmul.f32 %v3927, %v1597
  %v3972 = vmul.f32 %v3931, %v1601
  %v3973 = vmul.f32 %v3935, %v1607
  %v3974 = vmul.f32 %v3939, %v1611
  %v3975 = vmul.f32 %v3943, %v1617
  %v3976 = vmul.f32 %v3947, %v1621
  %v3977 = vmul.f32 %v3951, %v1627
  %v3978 = vmul.f32 %v3955, %v1631
  %v3979 = vmul.f32 %v3959, %v1637
  %v3980 = vmul.f32 %v3963, %v1641
  %v3981 = vadd.f32 %v3885, %v3965
  %v3982 = vadd.f32 %v3886, %v3966
  %v3983 = vadd.f32 %v3887, %v3967
  %v3984 = vadd.f32 %v3888, %v3968
  %v3985 = vadd.f32 %v3889, %v3969
  %v3986 = vadd.f32 %v3890, %v3970
  %v3987 = vadd.f32 %v3891, %v3971
  %v3988 = vadd.f32 %v3892, %v3972
  %v3989 = vadd.f32 %v3893, %v3973
  %v3990 = vadd.f32 %v3894, %v3974
  %v3991 = vadd.f32 %v3895, %v3975
  %v3992 = vadd.f32 %v3896, %v3976
  %v3993 = vadd.f32 %v3897, %v3977
  %v3994 = vadd.f32 %v3898, %v3978
  %v3995 = vadd.f32 %v3899, %v3979
  %v3996 = vadd.f32 %v3900, %v3980
  %3997 = vset.pattern.permute.xlu0 22
  %3998 = vperm.xlu0 %3997, %v1869
  %v3999 = vpop.permute.xlu0 %3998
  %4001 = vset.pattern.permute.xlu0 22
  %4002 = vperm.xlu0 %4001, %v1870
  %v4003 = vpop.permute.xlu0 %4002
  %4005 = vset.pattern.permute.xlu0 22
  %4006 = vperm.xlu0 %4005, %v1871
  %v4007 = vpop.permute.xlu0 %4006
  %4009 = vset.pattern.permute.xlu0 22
  %4010 = vperm.xlu0 %4009, %v1872
  %v4011 = vpop.permute.xlu0 %4010
  %4013 = vset.pattern.permute.xlu0 22
  %4014 = vperm.xlu0 %4013, %v1873
  %v4015 = vpop.permute.xlu0 %4014
  %4017 = vset.pattern.permute.xlu0 22
  %4018 = vperm.xlu0 %4017, %v1874
  %v4019 = vpop.permute.xlu0 %4018
  %4021 = vset.pattern.permute.xlu0 22
  %4022 = vperm.xlu0 %4021, %v1875
  %v4023 = vpop.permute.xlu0 %4022
  %4025 = vset.pattern.permute.xlu0 22
  %4026 = vperm.xlu0 %4025, %v1876
  %v4027 = vpop.permute.xlu0 %4026
  %4029 = vset.pattern.permute.xlu0 22
  %4030 = vperm.xlu0 %4029, %v1877
  %v4031 = vpop.permute.xlu0 %4030
  %4033 = vset.pattern.permute.xlu0 22
  %4034 = vperm.xlu0 %4033, %v1878
  %v4035 = vpop.permute.xlu0 %4034
  %4037 = vset.pattern.permute.xlu0 22
  %4038 = vperm.xlu0 %4037, %v1879
  %v4039 = vpop.permute.xlu0 %4038
  %4041 = vset.pattern.permute.xlu0 22
  %4042 = vperm.xlu0 %4041, %v1880
  %v4043 = vpop.permute.xlu0 %4042
  %4045 = vset.pattern.permute.xlu0 22
  %4046 = vperm.xlu0 %4045, %v1881
  %v4047 = vpop.permute.xlu0 %4046
  %4049 = vset.pattern.permute.xlu0 22
  %4050 = vperm.xlu0 %4049, %v1882
  %v4051 = vpop.permute.xlu0 %4050
  %4053 = vset.pattern.permute.xlu0 22
  %4054 = vperm.xlu0 %4053, %v1883
  %v4055 = vpop.permute.xlu0 %4054
  %4057 = vset.pattern.permute.xlu0 22
  %4058 = vperm.xlu0 %4057, %v1884
  %v4059 = vpop.permute.xlu0 %4058
  %v4061 = vmul.f32 %v3999, %v1678
  %v4062 = vmul.f32 %v4003, %v1682
  %v4063 = vmul.f32 %v4007, %v1688
  %v4064 = vmul.f32 %v4011, %v1692
  %v4065 = vmul.f32 %v4015, %v1698
  %v4066 = vmul.f32 %v4019, %v1702
  %v4067 = vmul.f32 %v4023, %v1708
  %v4068 = vmul.f32 %v4027, %v1712
  %v4069 = vmul.f32 %v4031, %v1718
  %v4070 = vmul.f32 %v4035, %v1722
  %v4071 = vmul.f32 %v4039, %v1728
  %v4072 = vmul.f32 %v4043, %v1732
  %v4073 = vmul.f32 %v4047, %v1738
  %v4074 = vmul.f32 %v4051, %v1742
  %v4075 = vmul.f32 %v4055, %v1748
  %v4076 = vmul.f32 %v4059, %v1752
  %v4077 = vadd.f32 %v3981, %v4061
  %v4078 = vadd.f32 %v3982, %v4062
  %v4079 = vadd.f32 %v3983, %v4063
  %v4080 = vadd.f32 %v3984, %v4064
  %v4081 = vadd.f32 %v3985, %v4065
  %v4082 = vadd.f32 %v3986, %v4066
  %v4083 = vadd.f32 %v3987, %v4067
  %v4084 = vadd.f32 %v3988, %v4068
  %v4085 = vadd.f32 %v3989, %v4069
  %v4086 = vadd.f32 %v3990, %v4070
  %v4087 = vadd.f32 %v3991, %v4071
  %v4088 = vadd.f32 %v3992, %v4072
  %v4089 = vadd.f32 %v3993, %v4073
  %v4090 = vadd.f32 %v3994, %v4074
  %v4091 = vadd.f32 %v3995, %v4075
  %v4092 = vadd.f32 %v3996, %v4076
  %4093 = vset.pattern.permute.xlu0 23
  %4094 = vperm.xlu0 %4093, %v1869
  %v4095 = vpop.permute.xlu0 %4094
  %4097 = vset.pattern.permute.xlu0 23
  %4098 = vperm.xlu0 %4097, %v1870
  %v4099 = vpop.permute.xlu0 %4098
  %4101 = vset.pattern.permute.xlu0 23
  %4102 = vperm.xlu0 %4101, %v1871
  %v4103 = vpop.permute.xlu0 %4102
  %4105 = vset.pattern.permute.xlu0 23
  %4106 = vperm.xlu0 %4105, %v1872
  %v4107 = vpop.permute.xlu0 %4106
  %4109 = vset.pattern.permute.xlu0 23
  %4110 = vperm.xlu0 %4109, %v1873
  %v4111 = vpop.permute.xlu0 %4110
  %4113 = vset.pattern.permute.xlu0 23
  %4114 = vperm.xlu0 %4113, %v1874
  %v4115 = vpop.permute.xlu0 %4114
  %4117 = vset.pattern.permute.xlu0 23
  %4118 = vperm.xlu0 %4117, %v1875
  %v4119 = vpop.permute.xlu0 %4118
  %4121 = vset.pattern.permute.xlu0 23
  %4122 = vperm.xlu0 %4121, %v1876
  %v4123 = vpop.permute.xlu0 %4122
  %4125 = vset.pattern.permute.xlu0 23
  %4126 = vperm.xlu0 %4125, %v1877
  %v4127 = vpop.permute.xlu0 %4126
  %4129 = vset.pattern.permute.xlu0 23
  %4130 = vperm.xlu0 %4129, %v1878
  %v4131 = vpop.permute.xlu0 %4130
  %4133 = vset.pattern.permute.xlu0 23
  %4134 = vperm.xlu0 %4133, %v1879
  %v4135 = vpop.permute.xlu0 %4134
  %4137 = vset.pattern.permute.xlu0 23
  %4138 = vperm.xlu0 %4137, %v1880
  %v4139 = vpop.permute.xlu0 %4138
  %4141 = vset.pattern.permute.xlu0 23
  %4142 = vperm.xlu0 %4141, %v1881
  %v4143 = vpop.permute.xlu0 %4142
  %4145 = vset.pattern.permute.xlu0 23
  %4146 = vperm.xlu0 %4145, %v1882
  %v4147 = vpop.permute.xlu0 %4146
  %4149 = vset.pattern.permute.xlu0 23
  %4150 = vperm.xlu0 %4149, %v1883
  %v4151 = vpop.permute.xlu0 %4150
  %4153 = vset.pattern.permute.xlu0 23
  %4154 = vperm.xlu0 %4153, %v1884
  %v4155 = vpop.permute.xlu0 %4154
  %v4157 = vmul.f32 %v4095, %v1680
  %v4158 = vmul.f32 %v4099, %v1684
  %v4159 = vmul.f32 %v4103, %v1690
  %v4160 = vmul.f32 %v4107, %v1694
  %v4161 = vmul.f32 %v4111, %v1700
  %v4162 = vmul.f32 %v4115, %v1704
  %v4163 = vmul.f32 %v4119, %v1710
  %v4164 = vmul.f32 %v4123, %v1714
  %v4165 = vmul.f32 %v4127, %v1720
  %v4166 = vmul.f32 %v4131, %v1724
  %v4167 = vmul.f32 %v4135, %v1730
  %v4168 = vmul.f32 %v4139, %v1734
  %v4169 = vmul.f32 %v4143, %v1740
  %v4170 = vmul.f32 %v4147, %v1744
  %v4171 = vmul.f32 %v4151, %v1750
  %v4172 = vmul.f32 %v4155, %v1754
  %v4173 = vadd.f32 %v4077, %v4157
  %v4174 = vadd.f32 %v4078, %v4158
  %v4175 = vadd.f32 %v4079, %v4159
  %v4176 = vadd.f32 %v4080, %v4160
  %v4177 = vadd.f32 %v4081, %v4161
  %v4178 = vadd.f32 %v4082, %v4162
  %v4179 = vadd.f32 %v4083, %v4163
  %v4180 = vadd.f32 %v4084, %v4164
  %v4181 = vadd.f32 %v4085, %v4165
  %v4182 = vadd.f32 %v4086, %v4166
  %v4183 = vadd.f32 %v4087, %v4167
  %v4184 = vadd.f32 %v4088, %v4168
  %v4185 = vadd.f32 %v4089, %v4169
  %v4186 = vadd.f32 %v4090, %v4170
  %v4187 = vadd.f32 %v4091, %v4171
  %v4188 = vadd.f32 %v4092, %v4172
  %4189 = vset.pattern.permute.xlu0 24
  %4190 = vperm.xlu0 %4189, %v1869
  %v4191 = vpop.permute.xlu0 %4190
  %4193 = vset.pattern.permute.xlu0 24
  %4194 = vperm.xlu0 %4193, %v1870
  %v4195 = vpop.permute.xlu0 %4194
  %4197 = vset.pattern.permute.xlu0 24
  %4198 = vperm.xlu0 %4197, %v1871
  %v4199 = vpop.permute.xlu0 %4198
  %4201 = vset.pattern.permute.xlu0 24
  %4202 = vperm.xlu0 %4201, %v1872
  %v4203 = vpop.permute.xlu0 %4202
  %4205 = vset.pattern.permute.xlu0 24
  %4206 = vperm.xlu0 %4205, %v1873
  %v4207 = vpop.permute.xlu0 %4206
  %4209 = vset.pattern.permute.xlu0 24
  %4210 = vperm.xlu0 %4209, %v1874
  %v4211 = vpop.permute.xlu0 %4210
  %4213 = vset.pattern.permute.xlu0 24
  %4214 = vperm.xlu0 %4213, %v1875
  %v4215 = vpop.permute.xlu0 %4214
  %4217 = vset.pattern.permute.xlu0 24
  %4218 = vperm.xlu0 %4217, %v1876
  %v4219 = vpop.permute.xlu0 %4218
  %4221 = vset.pattern.permute.xlu0 24
  %4222 = vperm.xlu0 %4221, %v1877
  %v4223 = vpop.permute.xlu0 %4222
  %4225 = vset.pattern.permute.xlu0 24
  %4226 = vperm.xlu0 %4225, %v1878
  %v4227 = vpop.permute.xlu0 %4226
  %4229 = vset.pattern.permute.xlu0 24
  %4230 = vperm.xlu0 %4229, %v1879
  %v4231 = vpop.permute.xlu0 %4230
  %4233 = vset.pattern.permute.xlu0 24
  %4234 = vperm.xlu0 %4233, %v1880
  %v4235 = vpop.permute.xlu0 %4234
  %4237 = vset.pattern.permute.xlu0 24
  %4238 = vperm.xlu0 %4237, %v1881
  %v4239 = vpop.permute.xlu0 %4238
  %4241 = vset.pattern.permute.xlu0 24
  %4242 = vperm.xlu0 %4241, %v1882
  %v4243 = vpop.permute.xlu0 %4242
  %4245 = vset.pattern.permute.xlu0 24
  %4246 = vperm.xlu0 %4245, %v1883
  %v4247 = vpop.permute.xlu0 %4246
  %4249 = vset.pattern.permute.xlu0 24
  %4250 = vperm.xlu0 %4249, %v1884
  %v4251 = vpop.permute.xlu0 %4250
  %v4253 = vmul.f32 %v4191, %v1791
  %v4254 = vmul.f32 %v4195, %v1794
  %v4255 = vmul.f32 %v4199, %v1799
  %v4256 = vmul.f32 %v4203, %v1802
  %v4257 = vmul.f32 %v4207, %v1807
  %v4258 = vmul.f32 %v4211, %v1810
  %v4259 = vmul.f32 %v4215, %v1815
  %v4260 = vmul.f32 %v4219, %v1818
  %v4261 = vmul.f32 %v4223, %v1823
  %v4262 = vmul.f32 %v4227, %v1826
  %v4263 = vmul.f32 %v4231, %v1831
  %v4264 = vmul.f32 %v4235, %v1834
  %v4265 = vmul.f32 %v4239, %v1839
  %v4266 = vmul.f32 %v4243, %v1842
  %v4267 = vmul.f32 %v4247, %v1847
  %v4268 = vmul.f32 %v4251, %v1850
  %v4269 = vadd.f32 %v4173, %v4253
  %v4270 = vadd.f32 %v4174, %v4254
  %v4271 = vadd.f32 %v4175, %v4255
  %v4272 = vadd.f32 %v4176, %v4256
  %v4273 = vadd.f32 %v4177, %v4257
  %v4274 = vadd.f32 %v4178, %v4258
  %v4275 = vadd.f32 %v4179, %v4259
  %v4276 = vadd.f32 %v4180, %v4260
  %v4277 = vadd.f32 %v4181, %v4261
  %v4278 = vadd.f32 %v4182, %v4262
  %v4279 = vadd.f32 %v4183, %v4263
  %v4280 = vadd.f32 %v4184, %v4264
  %v4281 = vadd.f32 %v4185, %v4265
  %v4282 = vadd.f32 %v4186, %v4266
  %v4283 = vadd.f32 %v4187, %v4267
  %v4284 = vadd.f32 %v4188, %v4268
  %v4285 = vpack.c.bf16 %v4270, %v4269
  %v4286 = vpack.c.bf16 %v4272, %v4271
  %v4287 = vpack.c.bf16 %v4274, %v4273
  %v4288 = vpack.c.bf16 %v4276, %v4275
  %v4289 = vpack.c.bf16 %v4278, %v4277
  %v4290 = vpack.c.bf16 %v4280, %v4279
  %v4291 = vpack.c.bf16 %v4282, %v4281
  %v4292 = vpack.c.bf16 %v4284, %v4283
  %v4301 = vunpack.c.l.b16 %v4285
  %v4302 = vunpack.c.h.b16 %v4285
  %v4303 = vunpack.c.l.b16 %v4286
  %v4304 = vunpack.c.h.b16 %v4286
  %v4305 = vunpack.c.l.b16 %v4287
  %v4306 = vunpack.c.h.b16 %v4287
  %v4307 = vunpack.c.l.b16 %v4288
  %v4308 = vunpack.c.h.b16 %v4288
  %v4309 = vunpack.c.l.b16 %v4289
  %v4310 = vunpack.c.h.b16 %v4289
  %v4311 = vunpack.c.l.b16 %v4290
  %v4312 = vunpack.c.h.b16 %v4290
  %v4313 = vunpack.c.l.b16 %v4291
  %v4314 = vunpack.c.h.b16 %v4291
  %v4315 = vunpack.c.l.b16 %v4292
  %v4316 = vunpack.c.h.b16 %v4292
  %v4317 = vpack.c.b16 %v4301, %v4301
  %v4318 = vpack.c.b16 %v4302, %v4302
  %v4319 = vpack.c.b16 %v4303, %v4303
  %v4320 = vpack.c.b16 %v4304, %v4304
  %v4321 = vpack.c.b16 %v4305, %v4305
  %v4322 = vpack.c.b16 %v4306, %v4306
  %v4323 = vpack.c.b16 %v4307, %v4307
  %v4324 = vpack.c.b16 %v4308, %v4308
  %v4325 = vpack.c.b16 %v4309, %v4309
  %v4326 = vpack.c.b16 %v4310, %v4310
  %v4327 = vpack.c.b16 %v4311, %v4311
  %v4328 = vpack.c.b16 %v4312, %v4312
  %v4329 = vpack.c.b16 %v4313, %v4313
  %v4330 = vpack.c.b16 %v4314, %v4314
  %v4331 = vpack.c.b16 %v4315, %v4315
  %v4332 = vpack.c.b16 %v4316, %v4316
  %vm4349 = vcmask 519168
  %4350 = vst.msk [vmem:[%s3] sm:$0xf] %vm4349, %v4317
  %4351 = vst.msk [vmem:[%s3 + $0x4] sm:$0xf] %vm4349, %v4318
  %4352 = vst.msk [vmem:[%s3 + $0x8] sm:$0xf] %vm4349, %v4319
  %4353 = vst.msk [vmem:[%s3 + $0xc] sm:$0xf] %vm4349, %v4320
  %4354 = vst.msk [vmem:[%s3 + $0x10] sm:$0xf] %vm4349, %v4321
  %4355 = vst.msk [vmem:[%s3 + $0x14] sm:$0xf] %vm4349, %v4322
  %4356 = vst.msk [vmem:[%s3 + $0x18] sm:$0xf] %vm4349, %v4323
  %4357 = vst.msk [vmem:[%s3 + $0x1c] sm:$0xf] %vm4349, %v4324
  %4358 = vst.msk [vmem:[%s3 + $0x20] sm:$0xf] %vm4349, %v4325
  %4359 = vst.msk [vmem:[%s3 + $0x24] sm:$0xf] %vm4349, %v4326
  %4360 = vst.msk [vmem:[%s3 + $0x28] sm:$0xf] %vm4349, %v4327
  %4361 = vst.msk [vmem:[%s3 + $0x2c] sm:$0xf] %vm4349, %v4328
  %4362 = vst.msk [vmem:[%s3 + $0x30] sm:$0xf] %vm4349, %v4329
  %4363 = vst.msk [vmem:[%s3 + $0x34] sm:$0xf] %vm4349, %v4330
  %4364 = vst.msk [vmem:[%s3 + $0x38] sm:$0xf] %vm4349, %v4331
  %4365 = vst.msk [vmem:[%s3 + $0x3c] sm:$0xf] %vm4349, %v4332
  // Predicated region
  $region14: #{spline_cnn_forward.7} parent=0 // pred_check
    _
  $region15: #{spline_cnn_forward.7} parent=0 // pred_check_branch
    %4367 = sbr.rel (0) target = $region17
  $region16: #{spline_cnn_forward.7} parent=0 // pred_region
    _
  $region17: #{spline_cnn_forward.7} parent=0 // pred_fallthru
    _
  // Predicated region
  $region18: #{spline_cnn_forward.7} parent=0 // pred_check
    _
  $region19: #{spline_cnn_forward.7} parent=0 // pred_check_branch
    %4369 = sbr.rel (0) target = $region21
  $region20: #{spline_cnn_forward.7} parent=0 // pred_region
    _
  $region21: #{spline_cnn_forward.7} parent=0 // pred_fallthru
    _

</llo_original>
